<compile_context>
chip_gen: v6e
topology: v6e:2x2x1
jax: 0.10.0
libtpu: 0.0.40
codegen_flags: <defaults>
</compile_context>

<pallas_src>
import math
from functools import partial

import jax
import jax.numpy as jnp
from jax import lax
from jax.experimental import pallas as pl
from jax.experimental.pallas import tpu as pltpu


# MXU operand dtype: bf16 ~4x MXU throughput on v6e/v7x and halves weight/activation
# DMA bytes; accumulation is always f32. Set to jnp.float32 for exact-f32 matmuls.
MATMUL_DTYPE = jnp.bfloat16

_LN_EPS = 1e-5
# Re-derive for v7x's 64 MiB physical VMEM; 48 MiB leaves headroom for double-buffering.
_VMEM_LIMIT = 48 * 1024 * 1024


def _pick_tile(dim, target, align):
    """Largest tile <= target that divides `dim` and is a multiple of `align`
    (falls back to the full dim, which is always a legal block size)."""
    if dim <= target:
        return dim
    t = (target // align) * align
    while t >= align:
        if dim % t == 0:
            return t
        t -= align
    return dim


def _layer_norm_f32(x, gamma, beta):
    """LayerNorm of a (tm, D) f32 tile; gamma/beta are (1, D)."""
    mu = jnp.mean(x, axis=-1, keepdims=True)
    xc = x - mu
    var = jnp.mean(xc * xc, axis=-1, keepdims=True)
    return xc * lax.rsqrt(var + _LN_EPS) * gamma + beta


# ----------------------- fused LN1 + QKV projection --------------------------
def _ln_qkv_kernel(x_ref, g_ref, b_ref, w_ref, o_ref):
    x = x_ref[...].astype(jnp.float32)
    nx = _layer_norm_f32(x, g_ref[...], b_ref[...])
    o_ref[0] = jnp.dot(
        nx.astype(MATMUL_DTYPE), w_ref[0], preferred_element_type=jnp.float32
    ).astype(o_ref.dtype)


def ln_qkv_proj(x, gamma, beta, w_qkv, *, tm=256, tn=512):
    """out[s] = LN(x) @ w_qkv[s] for s in {q, k, v}.  x:(N,D) w_qkv:(3,D,D) -> (3,N,D)."""
    N, D = x.shape
    tm = _pick_tile(N, tm, 8)
    tn = _pick_tile(D, tn, 128)
    return pl.pallas_call(
        _ln_qkv_kernel,
        out_shape=jax.ShapeDtypeStruct((3, N, D), MATMUL_DTYPE),
        grid=(N // tm, 3, D // tn),
        in_specs=[
            pl.BlockSpec((tm, D), lambda i, s, j: (i, 0)),      # x row tile, resident over (s, j)
            pl.BlockSpec((1, D), lambda i, s, j: (0, 0)),
            pl.BlockSpec((1, D), lambda i, s, j: (0, 0)),
            pl.BlockSpec((1, D, tn), lambda i, s, j: (s, 0, j)),
        ],
        out_specs=pl.BlockSpec((1, tm, tn), lambda i, s, j: (s, i, j)),
        compiler_params=pltpu.CompilerParams(
            dimension_semantics=("parallel", "parallel", "parallel")),
    )(x, gamma.reshape(1, D), beta.reshape(1, D), w_qkv.astype(MATMUL_DTYPE))


# -------------------------- fused LN + matmul ---------------------------------
def _ln_matmul_kernel(x_ref, g_ref, b_ref, w_ref, o_ref):
    x = x_ref[...].astype(jnp.float32)
    nx = _layer_norm_f32(x, g_ref[...], b_ref[...])
    o_ref[...] = jnp.dot(
        nx.astype(MATMUL_DTYPE), w_ref[...], preferred_element_type=jnp.float32
    ).astype(o_ref.dtype)


def ln_matmul(x, gamma, beta, w, *, out_dtype=None, tm=256, tn=512):
    """LN(x) @ w, row/col tiled.  Used for the MoE selection scores."""
    N, D = x.shape
    _, F = w.shape
    tm = _pick_tile(N, tm, 8)
    tn = _pick_tile(F, tn, 128)
    out_dtype = out_dtype or x.dtype
    return pl.pallas_call(
        _ln_matmul_kernel,
        out_shape=jax.ShapeDtypeStruct((N, F), out_dtype),
        grid=(N // tm, F // tn),
        in_specs=[
            pl.BlockSpec((tm, D), lambda i, j: (i, 0)),
            pl.BlockSpec((1, D), lambda i, j: (0, 0)),
            pl.BlockSpec((1, D), lambda i, j: (0, 0)),
            pl.BlockSpec((D, tn), lambda i, j: (0, j)),
        ],
        out_specs=pl.BlockSpec((tm, tn), lambda i, j: (i, j)),
        compiler_params=pltpu.CompilerParams(
            dimension_semantics=("parallel", "parallel")),
    )(x, gamma.reshape(1, D), beta.reshape(1, D), w.astype(MATMUL_DTYPE))


# ------------------------ tiled matmul + residual -----------------------------
def _matmul_res_kernel(a_ref, w_ref, r_ref, o_ref):
    acc = jnp.dot(a_ref[...].astype(MATMUL_DTYPE), w_ref[...],
                  preferred_element_type=jnp.float32)
    o_ref[...] = (r_ref[...].astype(jnp.float32) + acc).astype(o_ref.dtype)


def matmul_residual(a, w, res, *, tm=256, tn=512):
    N, K = a.shape
    _, F = w.shape
    tm = _pick_tile(N, tm, 8)
    tn = _pick_tile(F, tn, 128)
    return pl.pallas_call(
        _matmul_res_kernel,
        out_shape=jax.ShapeDtypeStruct((N, F), res.dtype),
        grid=(N // tm, F // tn),
        in_specs=[
            pl.BlockSpec((tm, K), lambda i, j: (i, 0)),
            pl.BlockSpec((K, tn), lambda i, j: (0, j)),
            pl.BlockSpec((tm, tn), lambda i, j: (i, j)),
        ],
        out_specs=pl.BlockSpec((tm, tn), lambda i, j: (i, j)),
        compiler_params=pltpu.CompilerParams(
            dimension_semantics=("parallel", "parallel")),
    )(a, w.astype(MATMUL_DTYPE), res)


# ----------------- flash-style RoPE multi-head attention ----------------------
def _apply_rope(x, cos, sin, n_rot):
    """x: (H, t, Dh) f32; cos/sin: (t, n_rot). Rotate-half on the first n_rot dims."""
    if n_rot <= 0:
        return x
    dh = x.shape[-1]
    half = n_rot // 2
    xr = x[..., :n_rot] if n_rot < dh else x
    x1 = xr[..., :half]
    x2 = xr[..., half:]
    rot = jnp.concatenate([-x2, x1], axis=-1)            # XLU/VPU work, no MXU
    xr = xr * cos[None] + rot * sin[None]
    if n_rot < dh:
        return jnp.concatenate([xr, x[..., n_rot:]], axis=-1)
    return xr


def _flash_attn_kernel(q_ref, k_ref, v_ref, cq_ref, ck_ref, sq_ref, sk_ref,
                       o_ref, m_sc, l_sc, acc_sc, *, n_rot, scale):
    ki = pl.program_id(2)

    @pl.when(ki == 0)
    def _():
        m_sc[...] = jnp.full(m_sc.shape, -jnp.inf, jnp.float32)
        l_sc[...] = jnp.zeros(l_sc.shape, jnp.float32)
        acc_sc[...] = jnp.zeros(acc_sc.shape, jnp.float32)

    # (tq, H, Dh) -> (H, tq, Dh); head dim stays in lanes.
    q = jnp.transpose(q_ref[0, 0].astype(jnp.float32), (1, 0, 2))
    k = jnp.transpose(k_ref[0, 0].astype(jnp.float32), (1, 0, 2))
    v = jnp.transpose(v_ref[0, 0], (1, 0, 2)).astype(MATMUL_DTYPE)

    q = _apply_rope(q, cq_ref[...], sq_ref[...], n_rot) * scale
    k = _apply_rope(k, ck_ref[...], sk_ref[...], n_rot)

    s = jnp.einsum("hqd,hkd->hqk",
                   q.astype(MATMUL_DTYPE), k.astype(MATMUL_DTYPE),
                   preferred_element_type=jnp.float32)            # (H, tq, tkv)

    m_prev = m_sc[...]
    m_new = jnp.maximum(m_prev, jnp.max(s, axis=-1, keepdims=True))
    alpha = jnp.exp(m_prev - m_new)
    p = jnp.exp(s - m_new)
    l_sc[...] = alpha * l_sc[...] + jnp.sum(p, axis=-1, keepdims=True)
    acc_sc[...] = alpha * acc_sc[...] + jnp.einsum(
        "hqk,hkd->hqd", p.astype(MATMUL_DTYPE), v,
        preferred_element_type=jnp.float32)
    m_sc[...] = m_new

    @pl.when(ki == pl.num_programs(2) - 1)
    def _():
        inv = pl.reciprocal(l_sc[...], approx=True)               # EUP, off MXU path
        out = acc_sc[...] * inv                                   # (H, tq, Dh)
        o_ref[0] = jnp.transpose(out, (1, 0, 2)).astype(o_ref.dtype)


def rope_flash_attention(qkv, cos, sin, *, n_rot, tq=128, tkv=512):
    """qkv: (3, B, T, H, Dh); cos/sin: (T, max(n_rot,1)). Returns (B, T, H, Dh)."""
    _, B, T, H, Dh = qkv.shape
    tq = _pick_tile(T, tq, 8)
    tkv = _pick_tile(T, tkv, 128)
    nr = max(n_rot, 1)
    scale = 1.0 / math.sqrt(Dh)
    kern = partial(_flash_attn_kernel, n_rot=n_rot, scale=scale)
    return pl.pallas_call(
        kern,
        out_shape=jax.ShapeDtypeStruct((B, T, H, Dh), qkv.dtype),
        grid=(B, T // tq, T // tkv),
        in_specs=[
            pl.BlockSpec((1, 1, tq, H, Dh), lambda b, qi, ki: (0, b, qi, 0, 0)),
            pl.BlockSpec((1, 1, tkv, H, Dh), lambda b, qi, ki: (1, b, ki, 0, 0)),
            pl.BlockSpec((1, 1, tkv, H, Dh), lambda b, qi, ki: (2, b, ki, 0, 0)),
            pl.BlockSpec((tq, nr), lambda b, qi, ki: (qi, 0)),
            pl.BlockSpec((tkv, nr), lambda b, qi, ki: (ki, 0)),
            pl.BlockSpec((tq, nr), lambda b, qi, ki: (qi, 0)),
            pl.BlockSpec((tkv, nr), lambda b, qi, ki: (ki, 0)),
        ],
        out_specs=pl.BlockSpec((1, tq, H, Dh), lambda b, qi, ki: (b, qi, 0, 0)),
        scratch_shapes=[
            pltpu.VMEM((H, tq, 1), jnp.float32),    # running max
            pltpu.VMEM((H, tq, 1), jnp.float32),    # running denom
            pltpu.VMEM((H, tq, Dh), jnp.float32),   # running accumulator
        ],
        compiler_params=pltpu.CompilerParams(
            dimension_semantics=("parallel", "parallel", "arbitrary"),
            vmem_limit_bytes=_VMEM_LIMIT),
    )(qkv, qkv, qkv, cos, cos, sin, sin)


# --------------------------------- MoE ----------------------------------------
def _moe_kernel(act_ref, x_ref, g2_ref, b2_ref, w1_ref, w2_ref, gate_ref,
                o_ref, n_sc, acc_sc):
    i = pl.program_id(0)
    e = pl.program_id(1)
    n_e = pl.num_programs(1)

    @pl.when(e == 0)
    def _():
        x = x_ref[...].astype(jnp.float32)
        n_sc[...] = _layer_norm_f32(x, g2_ref[...], b2_ref[...])   # LN2, once per tile
        acc_sc[...] = x                                            # residual into f32 acc

    # Skip the expert entirely if no token in this tile routed to it.
    @pl.when(act_ref[i, e] > 0)
    def _():
        h = jnp.maximum(
            jnp.dot(n_sc[...].astype(MATMUL_DTYPE), w1_ref[0],
                    preferred_element_type=jnp.float32), 0.0)      # (tm, S) ReLU
        y = jnp.dot(h.astype(MATMUL_DTYPE), w2_ref[0],
                    preferred_element_type=jnp.float32)            # (tm, D)
        n_exp = gate_ref.shape[1]
        col = lax.broadcasted_iota(jnp.int32, (1, n_exp), 1)
        gcol = jnp.sum(gate_ref[...].astype(jnp.float32) * (col == e).astype(jnp.float32),
                       axis=1, keepdims=True)                      # (tm, 1) gate for expert e
        acc_sc[...] = acc_sc[...] + y * gcol

    @pl.when(e == n_e - 1)
    def _():
        o_ref[...] = acc_sc[...].astype(o_ref.dtype)


def moe_experts(x, gamma2, beta2, w1, w2, gates, *, tm=256):
    """out = x + sum_e gate[:, e] * relu(LN2(x) @ w1[e]) @ w2[e]."""
    N, D = x.shape
    E, _, S = w1.shape
    tm = _pick_tile(N, tm, 8)
    n_tiles = N // tm
    # Per-(token tile, expert) activity mask, prefetched to SMEM.
    active = (gates.reshape(n_tiles, tm, E).max(axis=1) > 0.0).astype(jnp.int32)
    # TODO(synk): full sorted/gathered token routing (scalar-prefetch index_map) would
    # also skip the weight DMA of inactive experts; only the compute is skipped here.
    return pl.pallas_call(
        _moe_kernel,
        out_shape=jax.ShapeDtypeStruct((N, D), x.dtype),
        grid_spec=pltpu.PrefetchScalarGridSpec(
            num_scalar_prefetch=1,
            grid=(n_tiles, E),
            in_specs=[
                pl.BlockSpec((tm, D), lambda i, e, act: (i, 0)),       # x / residual
                pl.BlockSpec((1, D), lambda i, e, act: (0, 0)),        # ln2 gamma
                pl.BlockSpec((1, D), lambda i, e, act: (0, 0)),        # ln2 beta
                pl.BlockSpec((1, D, S), lambda i, e, act: (e, 0, 0)),  # expert w1
                pl.BlockSpec((1, S, D), lambda i, e, act: (e, 0, 0)),  # expert w2
                pl.BlockSpec((tm, E), lambda i, e, act: (i, 0)),       # dense gates (lane-dense)
            ],
            out_specs=pl.BlockSpec((tm, D), lambda i, e, act: (i, 0)),
            scratch_shapes=[pltpu.VMEM((tm, D), jnp.float32),          # LN2(x)
                            pltpu.VMEM((tm, D), jnp.float32)],         # f32 accumulator
        ),
        compiler_params=pltpu.CompilerParams(
            dimension_semantics=("parallel", "arbitrary"),
            vmem_limit_bytes=_VMEM_LIMIT),
    )(active, x, gamma2.reshape(1, D), beta2.reshape(1, D),
      w1.astype(MATMUL_DTYPE), w2.astype(MATMUL_DTYPE), gates)


# ----------------------------- full layer forward -----------------------------
def relative_moe_layer_forward(src, params):
    B, T, D = src.shape
    H = params["nhead"]
    Dh = D // H
    N = B * T
    src_flat = src.reshape(N, D)

    # preln: LN1 fused into one wide QKV projection.
    qkv = ln_qkv_proj(src_flat, params["ln1_g"], params["ln1_b"], params["w_qkv"])
    qkv = qkv.reshape(3, B, T, H, Dh)        # free reshape (head-major column layout)

    # Flash-style RoPE attention, output in (B, T, H, Dh).
    attn = rope_flash_attention(qkv, params["cos"], params["sin"], n_rot=params["n_rot"])

    # Output projection + first residual (head merge is a free reshape, no transpose).
    src1 = matmul_residual(attn.reshape(N, D), params["wo"], src_flat)

    # LN2 fused into the expert-selection projection.
    scores = ln_matmul(src1, params["ln2_g"], params["ln2_b"], params["w_sel"],
                       out_dtype=jnp.float32)
    # TODO(synk): selection_mode='add' internals unknown; sigma-MoE sigmoid top-k gating used.
    g = jax.nn.sigmoid(scores)
    vals, idx = lax.top_k(g, params["moe_k"])
    oh = jax.nn.one_hot(idx, params["n_experts"], dtype=g.dtype)
    gates = jnp.sum(oh * vals[..., None], axis=1)        # (N, E), zero off the top-k

    # MoE experts + second residual (fused in-kernel).
    out_flat = moe_experts(src1, params["ln2_g"], params["ln2_b"],
                           params["w1"], params["w2"], gates)
    return out_flat.reshape(B, T, D)


# ----------------------------- parameter construction -------------------------
def build_params(key, d_model, nhead, n_experts, expert_size, n_layers, T,
                 rotate_fraction=0.5, rope_base=10000.0, moe_k=2):
    Dh = d_model // nhead
    std = math.sqrt(2.0 / n_layers) / math.sqrt(d_model)    # prenorm-style init scale
    ks = jax.random.split(key, 5)

    # RoPE tables (rotate the first n_rot dims of each head, split-half convention).
    n_rot = int(Dh * rotate_fraction)
    n_rot -= n_rot % 2
    if n_rot > 0:
        half = n_rot // 2
        inv_freq = rope_base ** (-(jnp.arange(half, dtype=jnp.float32) * 2.0) / n_rot)
        pos = jnp.arange(T, dtype=jnp.float32)
        ang = pos[:, None] * inv_freq[None, :]               # (T, half)
        cos = jnp.concatenate([jnp.cos(ang), jnp.cos(ang)], axis=1)   # (T, n_rot)
        sin = jnp.concatenate([jnp.sin(ang), jnp.sin(ang)], axis=1)
    else:
        cos = jnp.ones((T, 1), jnp.float32)
        sin = jnp.zeros((T, 1), jnp.float32)

    return dict(
        nhead=nhead, n_experts=n_experts, moe_k=moe_k, n_rot=n_rot,
        ln1_g=jnp.ones((d_model,), jnp.float32), ln1_b=jnp.zeros((d_model,), jnp.float32),
        ln2_g=jnp.ones((d_model,), jnp.float32), ln2_b=jnp.zeros((d_model,), jnp.float32),
        w_qkv=jax.random.normal(ks[0], (3, d_model, d_model), jnp.float32) * std,
        wo=jax.random.normal(ks[1], (d_model, d_model), jnp.float32) * std,
        w_sel=jax.random.normal(ks[2], (d_model, n_experts), jnp.float32) * std,
        w1=jax.random.normal(ks[3], (n_experts, d_model, expert_size), jnp.float32) * std,
        w2=jax.random.normal(ks[4], (n_experts, expert_size, d_model), jnp.float32) * std,
        cos=cos, sin=sin,
    )


if __name__ == "__main__":
    B, T, D = 2, 8, 32
    nhead, n_experts, expert_size, n_layers = 4, 4, 16, 2

    key = jax.random.PRNGKey(0)
    k_par, k_in = jax.random.split(key)
    params = build_params(k_par, D, nhead, n_experts, expert_size, n_layers, T)
    src = jax.random.normal(k_in, (B, T, D), jnp.float32)

    fwd = jax.jit(lambda s: relative_moe_layer_forward(s, params))
    out = jax.block_until_ready(fwd(src))
    assert out.shape == (B, T, D) and out.dtype == jnp.float32
    assert bool(jnp.all(jnp.isfinite(out)))
    print("KERNEL_OK")
</pallas_src>

<mosaic_0001>
module attributes {stable_mosaic.version = 11 : i64} {
  func.func @_flash_attn_kernel(%arg0: i32, %arg1: i32, %arg2: i32, %arg3: memref<1x1x8x4x8xbf16, #tpu.memory_space<vmem>>, %arg4: memref<1x1x8x4x8xbf16, #tpu.memory_space<vmem>>, %arg5: memref<1x1x8x4x8xbf16, #tpu.memory_space<vmem>>, %arg6: memref<8x4xf32, #tpu.memory_space<vmem>>, %arg7: memref<8x4xf32, #tpu.memory_space<vmem>>, %arg8: memref<8x4xf32, #tpu.memory_space<vmem>>, %arg9: memref<8x4xf32, #tpu.memory_space<vmem>>, %arg10: memref<1x8x4x8xbf16, #tpu.memory_space<vmem>>, %arg11: memref<4x8x1xf32, #tpu.memory_space<vmem>>, %arg12: memref<4x8x1xf32, #tpu.memory_space<vmem>>, %arg13: memref<4x8x8xf32, #tpu.memory_space<vmem>>) attributes {dimension_semantics = [#tpu.dimension_semantics<parallel>, #tpu.dimension_semantics<parallel>, #tpu.dimension_semantics<arbitrary>], iteration_bounds = array<i64: 2, 1, 1>, scalar_prefetch = 0 : i64, scratch_operands = 3 : i64, tpu.core_type = #tpu.core_type<tc>, window_params = [{transform_indices = @transform_0, window_bounds = array<i64: 1, 1, 8, 4, 8>}, {transform_indices = @transform_1, window_bounds = array<i64: 1, 1, 8, 4, 8>}, {transform_indices = @transform_2, window_bounds = array<i64: 1, 1, 8, 4, 8>}, {transform_indices = @transform_3, window_bounds = array<i64: 8, 4>}, {transform_indices = @transform_4, window_bounds = array<i64: 8, 4>}, {transform_indices = @transform_5, window_bounds = array<i64: 8, 4>}, {transform_indices = @transform_6, window_bounds = array<i64: 8, 4>}, {transform_indices = @transform_7, window_bounds = array<i64: 1, 8, 4, 8>}]} {
    %c0_i32 = arith.constant 0 : i32
    %0 = arith.cmpi eq, %arg2, %c0_i32 : i32
    %1 = arith.extui %0 : i1 to i32
    %c0_i32_0 = arith.constant 0 : i32
    %2 = arith.cmpi ne, %1, %c0_i32_0 : i32
    scf.if %2 {
      %cst_49 = arith.constant 0xFF800000 : f32
      %79 = vector.broadcast %cst_49 : f32 to vector<4x8x1xf32>
      %c0_50 = arith.constant 0 : index
      %c0_51 = arith.constant 0 : index
      %c0_52 = arith.constant 0 : index
      %80 = vector.load %arg11[%c0_50, %c0_51, %c0_52] : memref<4x8x1xf32, #tpu.memory_space<vmem>>, vector<4x8x1xf32>
      tpu.vector_store %arg11[%c0_50, %c0_51, %c0_52], %79 {strides = array<i32>} : memref<4x8x1xf32, #tpu.memory_space<vmem>>, vector<4x8x1xf32>,
      %cst_53 = arith.constant 0.000000e+00 : f32
      %81 = vector.broadcast %cst_53 : f32 to vector<4x8x1xf32>
      %c0_54 = arith.constant 0 : index
      %c0_55 = arith.constant 0 : index
      %c0_56 = arith.constant 0 : index
      %82 = vector.load %arg12[%c0_54, %c0_55, %c0_56] : memref<4x8x1xf32, #tpu.memory_space<vmem>>, vector<4x8x1xf32>
      tpu.vector_store %arg12[%c0_54, %c0_55, %c0_56], %81 {strides = array<i32>} : memref<4x8x1xf32, #tpu.memory_space<vmem>>, vector<4x8x1xf32>,
      %cst_57 = arith.constant 0.000000e+00 : f32
      %83 = vector.broadcast %cst_57 : f32 to vector<4x8x8xf32>
      %c0_58 = arith.constant 0 : index
      %c0_59 = arith.constant 0 : index
      %c0_60 = arith.constant 0 : index
      %84 = vector.load %arg13[%c0_58, %c0_59, %c0_60] : memref<4x8x8xf32, #tpu.memory_space<vmem>>, vector<4x8x8xf32>
      tpu.vector_store %arg13[%c0_58, %c0_59, %c0_60], %83 {strides = array<i32>} : memref<4x8x8xf32, #tpu.memory_space<vmem>>, vector<4x8x8xf32>,
    } else {
    }
    %c0 = arith.constant 0 : index
    %c0_1 = arith.constant 0 : index
    %c0_2 = arith.constant 0 : index
    %c0_3 = arith.constant 0 : index
    %c0_4 = arith.constant 0 : index
    %3 = vector.load %arg3[%c0, %c0_1, %c0_2, %c0_3, %c0_4] : memref<1x1x8x4x8xbf16, #tpu.memory_space<vmem>>, vector<1x1x8x4x8xbf16>
    %4 = vector.shape_cast %3 : vector<1x1x8x4x8xbf16> to vector<8x4x8xbf16>
    %5 = arith.extf %4 : vector<8x4x8xbf16> to vector<8x4x8xf32>
    %6 = tpu.transpose %5, [1, 0, 2] : vector<8x4x8xf32> -> vector<4x8x8xf32>
    %c0_5 = arith.constant 0 : index
    %c0_6 = arith.constant 0 : index
    %c0_7 = arith.constant 0 : index
    %c0_8 = arith.constant 0 : index
    %c0_9 = arith.constant 0 : index
    %7 = vector.load %arg4[%c0_5, %c0_6, %c0_7, %c0_8, %c0_9] : memref<1x1x8x4x8xbf16, #tpu.memory_space<vmem>>, vector<1x1x8x4x8xbf16>
    %8 = vector.shape_cast %7 : vector<1x1x8x4x8xbf16> to vector<8x4x8xbf16>
    %9 = arith.extf %8 : vector<8x4x8xbf16> to vector<8x4x8xf32>
    %10 = tpu.transpose %9, [1, 0, 2] : vector<8x4x8xf32> -> vector<4x8x8xf32>
    %c0_10 = arith.constant 0 : index
    %c0_11 = arith.constant 0 : index
    %c0_12 = arith.constant 0 : index
    %c0_13 = arith.constant 0 : index
    %c0_14 = arith.constant 0 : index
    %11 = vector.load %arg5[%c0_10, %c0_11, %c0_12, %c0_13, %c0_14] : memref<1x1x8x4x8xbf16, #tpu.memory_space<vmem>>, vector<1x1x8x4x8xbf16>
    %12 = vector.shape_cast %11 : vector<1x1x8x4x8xbf16> to vector<8x4x8xbf16>
    %13 = tpu.transpose %12, [1, 0, 2] : vector<8x4x8xbf16> -> vector<4x8x8xbf16>
    %c0_15 = arith.constant 0 : index
    %c0_16 = arith.constant 0 : index
    %14 = vector.load %arg6[%c0_15, %c0_16] : memref<8x4xf32, #tpu.memory_space<vmem>>, vector<8x4xf32>
    %c0_17 = arith.constant 0 : index
    %c0_18 = arith.constant 0 : index
    %15 = vector.load %arg8[%c0_17, %c0_18] : memref<8x4xf32, #tpu.memory_space<vmem>>, vector<8x4xf32>
    %16 = vector.extract_strided_slice %6 {offsets = [0, 0, 0], sizes = [4, 8, 4], strides = [1, 1, 1]} : vector<4x8x8xf32> to vector<4x8x4xf32>
    %17 = vector.extract_strided_slice %16 {offsets = [0, 0, 0], sizes = [4, 8, 2], strides = [1, 1, 1]} : vector<4x8x4xf32> to vector<4x8x2xf32>
    %18 = vector.extract_strided_slice %16 {offsets = [0, 0, 2], sizes = [4, 8, 2], strides = [1, 1, 1]} : vector<4x8x4xf32> to vector<4x8x2xf32>
    %cst = arith.constant 0.000000e+00 : f32
    %19 = vector.broadcast %cst : f32 to vector<4x8x2xf32>
    %20 = arith.subf %19, %18 : vector<4x8x2xf32>
    %21 = tpu.concatenate %20, %17 in 2 : vector<4x8x2xf32>, vector<4x8x2xf32> -> vector<4x8x4xf32>
    %22 = vector.shape_cast %14 : vector<8x4xf32> to vector<1x8x4xf32>
    %23 = vector.broadcast %22 : vector<1x8x4xf32> to vector<4x8x4xf32>
    %24 = arith.mulf %16, %23 : vector<4x8x4xf32>
    %25 = vector.shape_cast %15 : vector<8x4xf32> to vector<1x8x4xf32>
    %26 = vector.broadcast %25 : vector<1x8x4xf32> to vector<4x8x4xf32>
    %27 = arith.mulf %21, %26 : vector<4x8x4xf32>
    %28 = arith.addf %24, %27 : vector<4x8x4xf32>
    %29 = vector.extract_strided_slice %6 {offsets = [0, 0, 4], sizes = [4, 8, 4], strides = [1, 1, 1]} : vector<4x8x8xf32> to vector<4x8x4xf32>
    %30 = tpu.concatenate %28, %29 in 2 : vector<4x8x4xf32>, vector<4x8x4xf32> -> vector<4x8x8xf32>
    %cst_19 = arith.constant 0.353553385 : f32
    %31 = vector.broadcast %cst_19 : f32 to vector<4x8x8xf32>
    %32 = arith.mulf %30, %31 : vector<4x8x8xf32>
    %c0_20 = arith.constant 0 : index
    %c0_21 = arith.constant 0 : index
    %33 = vector.load %arg7[%c0_20, %c0_21] : memref<8x4xf32, #tpu.memory_space<vmem>>, vector<8x4xf32>
    %c0_22 = arith.constant 0 : index
    %c0_23 = arith.constant 0 : index
    %34 = vector.load %arg9[%c0_22, %c0_23] : memref<8x4xf32, #tpu.memory_space<vmem>>, vector<8x4xf32>
    %35 = vector.extract_strided_slice %10 {offsets = [0, 0, 0], sizes = [4, 8, 4], strides = [1, 1, 1]} : vector<4x8x8xf32> to vector<4x8x4xf32>
    %36 = vector.extract_strided_slice %35 {offsets = [0, 0, 0], sizes = [4, 8, 2], strides = [1, 1, 1]} : vector<4x8x4xf32> to vector<4x8x2xf32>
    %37 = vector.extract_strided_slice %35 {offsets = [0, 0, 2], sizes = [4, 8, 2], strides = [1, 1, 1]} : vector<4x8x4xf32> to vector<4x8x2xf32>
    %cst_24 = arith.constant 0.000000e+00 : f32
    %38 = vector.broadcast %cst_24 : f32 to vector<4x8x2xf32>
    %39 = arith.subf %38, %37 : vector<4x8x2xf32>
    %40 = tpu.concatenate %39, %36 in 2 : vector<4x8x2xf32>, vector<4x8x2xf32> -> vector<4x8x4xf32>
    %41 = vector.shape_cast %33 : vector<8x4xf32> to vector<1x8x4xf32>
    %42 = vector.broadcast %41 : vector<1x8x4xf32> to vector<4x8x4xf32>
    %43 = arith.mulf %35, %42 : vector<4x8x4xf32>
    %44 = vector.shape_cast %34 : vector<8x4xf32> to vector<1x8x4xf32>
    %45 = vector.broadcast %44 : vector<1x8x4xf32> to vector<4x8x4xf32>
    %46 = arith.mulf %40, %45 : vector<4x8x4xf32>
    %47 = arith.addf %43, %46 : vector<4x8x4xf32>
    %48 = vector.extract_strided_slice %10 {offsets = [0, 0, 4], sizes = [4, 8, 4], strides = [1, 1, 1]} : vector<4x8x8xf32> to vector<4x8x4xf32>
    %49 = tpu.concatenate %47, %48 in 2 : vector<4x8x4xf32>, vector<4x8x4xf32> -> vector<4x8x8xf32>
    %50 = arith.truncf %32 : vector<4x8x8xf32> to vector<4x8x8xbf16>
    %51 = arith.truncf %49 : vector<4x8x8xf32> to vector<4x8x8xbf16>
    "tpu.trace_start"() <{level = 10 : i32, message = "hqd,hkd->hqk"}> : () -> ()
    %cst_25 = arith.constant dense<0.000000e+00> : vector<4x8x8xf32>
    %52 = tpu.matmul %50, %51, %cst_25 {dimension_numbers = #tpu.dot_dimension_numbers<[2], [2], [1], [1], [0, 0, 0, 1, 1, 1], [0], [0]>} : vector<4x8x8xbf16>, vector<4x8x8xbf16>, vector<4x8x8xf32> -> vector<4x8x8xf32>
    "tpu.trace_stop"() : () -> ()
    %c0_26 = arith.constant 0 : index
    %c0_27 = arith.constant 0 : index
    %c0_28 = arith.constant 0 : index
    %53 = vector.load %arg11[%c0_26, %c0_27, %c0_28] : memref<4x8x1xf32, #tpu.memory_space<vmem>>, vector<4x8x1xf32>
    %cst_29 = arith.constant dense<0xFF800000> : vector<4x8xf32>
    %54 = vector.multi_reduction <maximumf>, %52, %cst_29 [2] : vector<4x8x8xf32> to vector<4x8xf32>
    %55 = vector.shape_cast %54 : vector<4x8xf32> to vector<4x8x1xf32>
    %56 = arith.maximumf %53, %55 : vector<4x8x1xf32>
    %57 = arith.subf %53, %56 : vector<4x8x1xf32>
    %58 = math.exp %57 : vector<4x8x1xf32>
    %59 = vector.broadcast %56 : vector<4x8x1xf32> to vector<4x8x8xf32>
    %60 = arith.subf %52, %59 : vector<4x8x8xf32>
    %61 = math.exp %60 : vector<4x8x8xf32>
    %c0_30 = arith.constant 0 : index
    %c0_31 = arith.constant 0 : index
    %c0_32 = arith.constant 0 : index
    %62 = vector.load %arg12[%c0_30, %c0_31, %c0_32] : memref<4x8x1xf32, #tpu.memory_space<vmem>>, vector<4x8x1xf32>
    %63 = arith.mulf %58, %62 : vector<4x8x1xf32>
    %cst_33 = arith.constant dense<0.000000e+00> : vector<4x8xf32>
    %64 = vector.multi_reduction <add>, %61, %cst_33 [2] : vector<4x8x8xf32> to vector<4x8xf32>
    %65 = vector.shape_cast %64 : vector<4x8xf32> to vector<4x8x1xf32>
    %66 = arith.addf %63, %65 : vector<4x8x1xf32>
    %c0_34 = arith.constant 0 : index
    %c0_35 = arith.constant 0 : index
    %c0_36 = arith.constant 0 : index
    %67 = vector.load %arg12[%c0_34, %c0_35, %c0_36] : memref<4x8x1xf32, #tpu.memory_space<vmem>>, vector<4x8x1xf32>
    tpu.vector_store %arg12[%c0_34, %c0_35, %c0_36], %66 {strides = array<i32>} : memref<4x8x1xf32, #tpu.memory_space<vmem>>, vector<4x8x1xf32>,
    %c0_37 = arith.constant 0 : index
    %c0_38 = arith.constant 0 : index
    %c0_39 = arith.constant 0 : index
    %68 = vector.load %arg13[%c0_37, %c0_38, %c0_39] : memref<4x8x8xf32, #tpu.memory_space<vmem>>, vector<4x8x8xf32>
    %69 = vector.broadcast %58 : vector<4x8x1xf32> to vector<4x8x8xf32>
    %70 = arith.mulf %69, %68 : vector<4x8x8xf32>
    %71 = arith.truncf %61 : vector<4x8x8xf32> to vector<4x8x8xbf16>
    "tpu.trace_start"() <{level = 10 : i32, message = "hqk,hkd->hqd"}> : () -> ()
    %cst_40 = arith.constant dense<0.000000e+00> : vector<4x8x8xf32>
    %72 = tpu.matmul %71, %13, %cst_40 {dimension_numbers = #tpu.dot_dimension_numbers<[2], [1], [1], [2], [0, 0, 0, 1, 1, 2], [0], [0]>} : vector<4x8x8xbf16>, vector<4x8x8xbf16>, vector<4x8x8xf32> -> vector<4x8x8xf32>
    "tpu.trace_stop"() : () -> ()
    %73 = arith.addf %70, %72 : vector<4x8x8xf32>
    %c0_41 = arith.constant 0 : index
    %c0_42 = arith.constant 0 : index
    %c0_43 = arith.constant 0 : index
    %74 = vector.load %arg13[%c0_41, %c0_42, %c0_43] : memref<4x8x8xf32, #tpu.memory_space<vmem>>, vector<4x8x8xf32>
    tpu.vector_store %arg13[%c0_41, %c0_42, %c0_43], %73 {strides = array<i32>} : memref<4x8x8xf32, #tpu.memory_space<vmem>>, vector<4x8x8xf32>,
    %c0_44 = arith.constant 0 : index
    %c0_45 = arith.constant 0 : index
    %c0_46 = arith.constant 0 : index
    %75 = vector.load %arg11[%c0_44, %c0_45, %c0_46] : memref<4x8x1xf32, #tpu.memory_space<vmem>>, vector<4x8x1xf32>
    tpu.vector_store %arg11[%c0_44, %c0_45, %c0_46], %56 {strides = array<i32>} : memref<4x8x1xf32, #tpu.memory_space<vmem>>, vector<4x8x1xf32>,
    %c0_i32_47 = arith.constant 0 : i32
    %76 = arith.cmpi eq, %arg2, %c0_i32_47 : i32
    %77 = arith.extui %76 : i1 to i32
    %c0_i32_48 = arith.constant 0 : i32
    %78 = arith.cmpi ne, %77, %c0_i32_48 : i32
    scf.if %78 {
      %c0_49 = arith.constant 0 : index
      %c0_50 = arith.constant 0 : index
      %c0_51 = arith.constant 0 : index
      %79 = vector.load %arg12[%c0_49, %c0_50, %c0_51] : memref<4x8x1xf32, #tpu.memory_space<vmem>>, vector<4x8x1xf32>
      %80 = tpu.reciprocal %79 {approx = true} : vector<4x8x1xf32> -> vector<4x8x1xf32>
      %c0_52 = arith.constant 0 : index
      %c0_53 = arith.constant 0 : index
      %c0_54 = arith.constant 0 : index
      %81 = vector.load %arg13[%c0_52, %c0_53, %c0_54] : memref<4x8x8xf32, #tpu.memory_space<vmem>>, vector<4x8x8xf32>
      %82 = vector.broadcast %80 : vector<4x8x1xf32> to vector<4x8x8xf32>
      %83 = arith.mulf %81, %82 : vector<4x8x8xf32>
      %84 = tpu.transpose %83, [1, 0, 2] : vector<4x8x8xf32> -> vector<8x4x8xf32>
      %85 = arith.truncf %84 : vector<8x4x8xf32> to vector<8x4x8xbf16>
      %c0_55 = arith.constant 0 : index
      %c0_56 = arith.constant 0 : index
      %c0_57 = arith.constant 0 : index
      %c0_58 = arith.constant 0 : index
      %86 = vector.load %arg10[%c0_55, %c0_56, %c0_57, %c0_58] : memref<1x8x4x8xbf16, #tpu.memory_space<vmem>>, vector<1x8x4x8xbf16>
      %87 = vector.shape_cast %86 : vector<1x8x4x8xbf16> to vector<8x4x8xbf16>
      %88 = vector.shape_cast %85 : vector<8x4x8xbf16> to vector<1x8x4x8xbf16>
      tpu.vector_store %arg10[%c0_55, %c0_56, %c0_57, %c0_58], %88 {strides = array<i32>} : memref<1x8x4x8xbf16, #tpu.memory_space<vmem>>, vector<1x8x4x8xbf16>,
    } else {
    }
    return
  }
  func.func @transform_0(%arg0: i32, %arg1: i32, %arg2: i32) -> (i32, i32, i32, i32, i32) {
    %c0_i32 = arith.constant 0 : i32
    %c0_i32_0 = arith.constant 0 : i32
    %c0_i32_1 = arith.constant 0 : i32
    %c0_i32_2 = arith.constant 0 : i32
    return %c0_i32, %arg0, %arg1, %c0_i32_0, %c0_i32_1 : i32, i32, i32, i32, i32
  }
  func.func @transform_1(%arg0: i32, %arg1: i32, %arg2: i32) -> (i32, i32, i32, i32, i32) {
    %c1_i32 = arith.constant 1 : i32
    %c0_i32 = arith.constant 0 : i32
    %c0_i32_0 = arith.constant 0 : i32
    %c0_i32_1 = arith.constant 0 : i32
    return %c1_i32, %arg0, %arg2, %c0_i32, %c0_i32_0 : i32, i32, i32, i32, i32
  }
  func.func @transform_2(%arg0: i32, %arg1: i32, %arg2: i32) -> (i32, i32, i32, i32, i32) {
    %c2_i32 = arith.constant 2 : i32
    %c0_i32 = arith.constant 0 : i32
    %c0_i32_0 = arith.constant 0 : i32
    %c0_i32_1 = arith.constant 0 : i32
    return %c2_i32, %arg0, %arg2, %c0_i32, %c0_i32_0 : i32, i32, i32, i32, i32
  }
  func.func @transform_3(%arg0: i32, %arg1: i32, %arg2: i32) -> (i32, i32) {
    %c0_i32 = arith.constant 0 : i32
    %c0_i32_0 = arith.constant 0 : i32
    return %arg1, %c0_i32 : i32, i32
  }
  func.func @transform_4(%arg0: i32, %arg1: i32, %arg2: i32) -> (i32, i32) {
    %c0_i32 = arith.constant 0 : i32
    %c0_i32_0 = arith.constant 0 : i32
    return %arg2, %c0_i32 : i32, i32
  }
  func.func @transform_5(%arg0: i32, %arg1: i32, %arg2: i32) -> (i32, i32) {
    %c0_i32 = arith.constant 0 : i32
    %c0_i32_0 = arith.constant 0 : i32
    return %arg1, %c0_i32 : i32, i32
  }
  func.func @transform_6(%arg0: i32, %arg1: i32, %arg2: i32) -> (i32, i32) {
    %c0_i32 = arith.constant 0 : i32
    %c0_i32_0 = arith.constant 0 : i32
    return %arg2, %c0_i32 : i32, i32
  }
  func.func @transform_7(%arg0: i32, %arg1: i32, %arg2: i32) -> (i32, i32, i32, i32) {
    %c0_i32 = arith.constant 0 : i32
    %c0_i32_0 = arith.constant 0 : i32
    %c0_i32_1 = arith.constant 0 : i32
    return %arg0, %arg1, %c0_i32, %c0_i32_0 : i32, i32, i32, i32
  }
}

module attributes {stable_mosaic.version = 11 : i64} {
  func.func @_ln_qkv_kernel(%arg0: i32, %arg1: i32, %arg2: i32, %arg3: memref<16x32xf32, #tpu.memory_space<vmem>>, %arg4: memref<1x32xf32, #tpu.memory_space<vmem>>, %arg5: memref<1x32xf32, #tpu.memory_space<vmem>>, %arg6: memref<1x32x32xbf16, #tpu.memory_space<vmem>>, %arg7: memref<1x16x32xbf16, #tpu.memory_space<vmem>>) attributes {dimension_semantics = [#tpu.dimension_semantics<parallel>, #tpu.dimension_semantics<parallel>, #tpu.dimension_semantics<parallel>], iteration_bounds = array<i64: 1, 3, 1>, scalar_prefetch = 0 : i64, scratch_operands = 0 : i64, tpu.core_type = #tpu.core_type<tc>, window_params = [{transform_indices = @transform_0, window_bounds = array<i64: 16, 32>}, {pipeline_mode = #tpu.pipeline_mode<synchronous>, transform_indices = @transform_1, window_bounds = array<i64: 1, 32>}, {pipeline_mode = #tpu.pipeline_mode<synchronous>, transform_indices = @transform_2, window_bounds = array<i64: 1, 32>}, {transform_indices = @transform_3, window_bounds = array<i64: 1, 32, 32>}, {transform_indices = @transform_4, window_bounds = array<i64: 1, 16, 32>}]} {
    %c0 = arith.constant 0 : index
    %c0_0 = arith.constant 0 : index
    %0 = vector.load %arg3[%c0, %c0_0] : memref<16x32xf32, #tpu.memory_space<vmem>>, vector<16x32xf32>
    %c0_1 = arith.constant 0 : index
    %c0_2 = arith.constant 0 : index
    %1 = vector.load %arg4[%c0_1, %c0_2] : memref<1x32xf32, #tpu.memory_space<vmem>>, vector<1x32xf32>
    %c0_3 = arith.constant 0 : index
    %c0_4 = arith.constant 0 : index
    %2 = vector.load %arg5[%c0_3, %c0_4] : memref<1x32xf32, #tpu.memory_space<vmem>>, vector<1x32xf32>
    %cst = arith.constant dense<0.000000e+00> : vector<16xf32>
    %3 = vector.multi_reduction <add>, %0, %cst [1] : vector<16x32xf32> to vector<16xf32>
    %4 = vector.shape_cast %3 : vector<16xf32> to vector<16x1xf32>
    %cst_5 = arith.constant 3.200000e+01 : f32
    %5 = vector.broadcast %cst_5 : f32 to vector<16x1xf32>
    %6 = arith.divf %4, %5 : vector<16x1xf32>
    %7 = vector.broadcast %6 : vector<16x1xf32> to vector<16x32xf32>
    %8 = arith.subf %0, %7 : vector<16x32xf32>
    %9 = arith.mulf %8, %8 : vector<16x32xf32>
    %cst_6 = arith.constant dense<0.000000e+00> : vector<16xf32>
    %10 = vector.multi_reduction <add>, %9, %cst_6 [1] : vector<16x32xf32> to vector<16xf32>
    %11 = vector.shape_cast %10 : vector<16xf32> to vector<16x1xf32>
    %cst_7 = arith.constant 3.200000e+01 : f32
    %12 = vector.broadcast %cst_7 : f32 to vector<16x1xf32>
    %13 = arith.divf %11, %12 : vector<16x1xf32>
    %cst_8 = arith.constant 9.99999974E-6 : f32
    %14 = vector.broadcast %cst_8 : f32 to vector<16x1xf32>
    %15 = arith.addf %13, %14 : vector<16x1xf32>
    %16 = math.rsqrt %15 : vector<16x1xf32>
    %17 = vector.broadcast %16 : vector<16x1xf32> to vector<16x32xf32>
    %18 = arith.mulf %8, %17 : vector<16x32xf32>
    %19 = vector.broadcast %1 : vector<1x32xf32> to vector<16x32xf32>
    %20 = arith.mulf %18, %19 : vector<16x32xf32>
    %21 = vector.broadcast %2 : vector<1x32xf32> to vector<16x32xf32>
    %22 = arith.addf %20, %21 : vector<16x32xf32>
    %23 = arith.truncf %22 : vector<16x32xf32> to vector<16x32xbf16>
    %c0_9 = arith.constant 0 : index
    %c0_10 = arith.constant 0 : index
    %c0_11 = arith.constant 0 : index
    %24 = vector.load %arg6[%c0_9, %c0_10, %c0_11] : memref<1x32x32xbf16, #tpu.memory_space<vmem>>, vector<1x32x32xbf16>
    %25 = vector.shape_cast %24 : vector<1x32x32xbf16> to vector<32x32xbf16>
    %cst_12 = arith.constant dense<0.000000e+00> : vector<16x32xf32>
    %26 = tpu.matmul %23, %25, %cst_12 {dimension_numbers = #tpu.dot_dimension_numbers<[1], [0], [0], [1], [0, 0, 1, 1], [], []>} : vector<16x32xbf16>, vector<32x32xbf16>, vector<16x32xf32> -> vector<16x32xf32>
    %27 = arith.truncf %26 : vector<16x32xf32> to vector<16x32xbf16>
    %c0_13 = arith.constant 0 : index
    %c0_14 = arith.constant 0 : index
    %c0_15 = arith.constant 0 : index
    %28 = vector.load %arg7[%c0_13, %c0_14, %c0_15] : memref<1x16x32xbf16, #tpu.memory_space<vmem>>, vector<1x16x32xbf16>
    %29 = vector.shape_cast %28 : vector<1x16x32xbf16> to vector<16x32xbf16>
    %30 = vector.shape_cast %27 : vector<16x32xbf16> to vector<1x16x32xbf16>
    tpu.vector_store %arg7[%c0_13, %c0_14, %c0_15], %30 {strides = array<i32>} : memref<1x16x32xbf16, #tpu.memory_space<vmem>>, vector<1x16x32xbf16>,
    return
  }
  func.func @transform_0(%arg0: i32, %arg1: i32, %arg2: i32) -> (i32, i32) {
    %c0_i32 = arith.constant 0 : i32
    %c0_i32_0 = arith.constant 0 : i32
    return %arg0, %c0_i32 : i32, i32
  }
  func.func @transform_1(%arg0: i32, %arg1: i32, %arg2: i32) -> (i32, i32) {
    %c0_i32 = arith.constant 0 : i32
    %c0_i32_0 = arith.constant 0 : i32
    %c0_i32_1 = arith.constant 0 : i32
    return %c0_i32, %c0_i32_0 : i32, i32
  }
  func.func @transform_2(%arg0: i32, %arg1: i32, %arg2: i32) -> (i32, i32) {
    %c0_i32 = arith.constant 0 : i32
    %c0_i32_0 = arith.constant 0 : i32
    %c0_i32_1 = arith.constant 0 : i32
    return %c0_i32, %c0_i32_0 : i32, i32
  }
  func.func @transform_3(%arg0: i32, %arg1: i32, %arg2: i32) -> (i32, i32, i32) {
    %c0_i32 = arith.constant 0 : i32
    %c0_i32_0 = arith.constant 0 : i32
    return %arg1, %c0_i32, %arg2 : i32, i32, i32
  }
  func.func @transform_4(%arg0: i32, %arg1: i32, %arg2: i32) -> (i32, i32, i32) {
    %c0_i32 = arith.constant 0 : i32
    return %arg1, %arg0, %arg2 : i32, i32, i32
  }
}

module attributes {stable_mosaic.version = 11 : i64} {
  func.func @_matmul_res_kernel(%arg0: i32, %arg1: i32, %arg2: memref<16x32xbf16, #tpu.memory_space<vmem>>, %arg3: memref<32x32xbf16, #tpu.memory_space<vmem>>, %arg4: memref<16x32xf32, #tpu.memory_space<vmem>>, %arg5: memref<16x32xf32, #tpu.memory_space<vmem>>) attributes {dimension_semantics = [#tpu.dimension_semantics<parallel>, #tpu.dimension_semantics<parallel>], iteration_bounds = array<i64: 1, 1>, scalar_prefetch = 0 : i64, scratch_operands = 0 : i64, tpu.core_type = #tpu.core_type<tc>, window_params = [{transform_indices = @transform_0, window_bounds = array<i64: 16, 32>}, {transform_indices = @transform_1, window_bounds = array<i64: 32, 32>}, {transform_indices = @transform_2, window_bounds = array<i64: 16, 32>}, {transform_indices = @transform_3, window_bounds = array<i64: 16, 32>}]} {
    %c0 = arith.constant 0 : index
    %c0_0 = arith.constant 0 : index
    %0 = vector.load %arg2[%c0, %c0_0] : memref<16x32xbf16, #tpu.memory_space<vmem>>, vector<16x32xbf16>
    %c0_1 = arith.constant 0 : index
    %c0_2 = arith.constant 0 : index
    %1 = vector.load %arg3[%c0_1, %c0_2] : memref<32x32xbf16, #tpu.memory_space<vmem>>, vector<32x32xbf16>
    %cst = arith.constant dense<0.000000e+00> : vector<16x32xf32>
    %2 = tpu.matmul %0, %1, %cst {dimension_numbers = #tpu.dot_dimension_numbers<[1], [0], [0], [1], [0, 0, 1, 1], [], []>} : vector<16x32xbf16>, vector<32x32xbf16>, vector<16x32xf32> -> vector<16x32xf32>
    %c0_3 = arith.constant 0 : index
    %c0_4 = arith.constant 0 : index
    %3 = vector.load %arg4[%c0_3, %c0_4] : memref<16x32xf32, #tpu.memory_space<vmem>>, vector<16x32xf32>
    %4 = arith.addf %3, %2 : vector<16x32xf32>
    %c0_5 = arith.constant 0 : index
    %c0_6 = arith.constant 0 : index
    %5 = vector.load %arg5[%c0_5, %c0_6] : memref<16x32xf32, #tpu.memory_space<vmem>>, vector<16x32xf32>
    tpu.vector_store %arg5[%c0_5, %c0_6], %4 {strides = array<i32>} : memref<16x32xf32, #tpu.memory_space<vmem>>, vector<16x32xf32>,
    return
  }
  func.func @transform_0(%arg0: i32, %arg1: i32) -> (i32, i32) {
    %c0_i32 = arith.constant 0 : i32
    %c0_i32_0 = arith.constant 0 : i32
    return %arg0, %c0_i32 : i32, i32
  }
  func.func @transform_1(%arg0: i32, %arg1: i32) -> (i32, i32) {
    %c0_i32 = arith.constant 0 : i32
    %c0_i32_0 = arith.constant 0 : i32
    return %c0_i32, %arg1 : i32, i32
  }
  func.func @transform_2(%arg0: i32, %arg1: i32) -> (i32, i32) {
    %c0_i32 = arith.constant 0 : i32
    return %arg0, %arg1 : i32, i32
  }
  func.func @transform_3(%arg0: i32, %arg1: i32) -> (i32, i32) {
    %c0_i32 = arith.constant 0 : i32
    return %arg0, %arg1 : i32, i32
  }
}

module attributes {stable_mosaic.version = 11 : i64} {
  func.func @_ln_matmul_kernel(%arg0: i32, %arg1: i32, %arg2: memref<16x32xf32, #tpu.memory_space<vmem>>, %arg3: memref<1x32xf32, #tpu.memory_space<vmem>>, %arg4: memref<1x32xf32, #tpu.memory_space<vmem>>, %arg5: memref<32x4xbf16, #tpu.memory_space<vmem>>, %arg6: memref<16x4xf32, #tpu.memory_space<vmem>>) attributes {dimension_semantics = [#tpu.dimension_semantics<parallel>, #tpu.dimension_semantics<parallel>], iteration_bounds = array<i64: 1, 1>, scalar_prefetch = 0 : i64, scratch_operands = 0 : i64, tpu.core_type = #tpu.core_type<tc>, window_params = [{transform_indices = @transform_0, window_bounds = array<i64: 16, 32>}, {pipeline_mode = #tpu.pipeline_mode<synchronous>, transform_indices = @transform_1, window_bounds = array<i64: 1, 32>}, {pipeline_mode = #tpu.pipeline_mode<synchronous>, transform_indices = @transform_2, window_bounds = array<i64: 1, 32>}, {transform_indices = @transform_3, window_bounds = array<i64: 32, 4>}, {transform_indices = @transform_4, window_bounds = array<i64: 16, 4>}]} {
    %c0 = arith.constant 0 : index
    %c0_0 = arith.constant 0 : index
    %0 = vector.load %arg2[%c0, %c0_0] : memref<16x32xf32, #tpu.memory_space<vmem>>, vector<16x32xf32>
    %c0_1 = arith.constant 0 : index
    %c0_2 = arith.constant 0 : index
    %1 = vector.load %arg3[%c0_1, %c0_2] : memref<1x32xf32, #tpu.memory_space<vmem>>, vector<1x32xf32>
    %c0_3 = arith.constant 0 : index
    %c0_4 = arith.constant 0 : index
    %2 = vector.load %arg4[%c0_3, %c0_4] : memref<1x32xf32, #tpu.memory_space<vmem>>, vector<1x32xf32>
    %cst = arith.constant dense<0.000000e+00> : vector<16xf32>
    %3 = vector.multi_reduction <add>, %0, %cst [1] : vector<16x32xf32> to vector<16xf32>
    %4 = vector.shape_cast %3 : vector<16xf32> to vector<16x1xf32>
    %cst_5 = arith.constant 3.200000e+01 : f32
    %5 = vector.broadcast %cst_5 : f32 to vector<16x1xf32>
    %6 = arith.divf %4, %5 : vector<16x1xf32>
    %7 = vector.broadcast %6 : vector<16x1xf32> to vector<16x32xf32>
    %8 = arith.subf %0, %7 : vector<16x32xf32>
    %9 = arith.mulf %8, %8 : vector<16x32xf32>
    %cst_6 = arith.constant dense<0.000000e+00> : vector<16xf32>
    %10 = vector.multi_reduction <add>, %9, %cst_6 [1] : vector<16x32xf32> to vector<16xf32>
    %11 = vector.shape_cast %10 : vector<16xf32> to vector<16x1xf32>
    %cst_7 = arith.constant 3.200000e+01 : f32
    %12 = vector.broadcast %cst_7 : f32 to vector<16x1xf32>
    %13 = arith.divf %11, %12 : vector<16x1xf32>
    %cst_8 = arith.constant 9.99999974E-6 : f32
    %14 = vector.broadcast %cst_8 : f32 to vector<16x1xf32>
    %15 = arith.addf %13, %14 : vector<16x1xf32>
    %16 = math.rsqrt %15 : vector<16x1xf32>
    %17 = vector.broadcast %16 : vector<16x1xf32> to vector<16x32xf32>
    %18 = arith.mulf %8, %17 : vector<16x32xf32>
    %19 = vector.broadcast %1 : vector<1x32xf32> to vector<16x32xf32>
    %20 = arith.mulf %18, %19 : vector<16x32xf32>
    %21 = vector.broadcast %2 : vector<1x32xf32> to vector<16x32xf32>
    %22 = arith.addf %20, %21 : vector<16x32xf32>
    %23 = arith.truncf %22 : vector<16x32xf32> to vector<16x32xbf16>
    %c0_9 = arith.constant 0 : index
    %c0_10 = arith.constant 0 : index
    %24 = vector.load %arg5[%c0_9, %c0_10] : memref<32x4xbf16, #tpu.memory_space<vmem>>, vector<32x4xbf16>
    %cst_11 = arith.constant dense<0.000000e+00> : vector<16x4xf32>
    %25 = tpu.matmul %23, %24, %cst_11 {dimension_numbers = #tpu.dot_dimension_numbers<[1], [0], [0], [1], [0, 0, 1, 1], [], []>} : vector<16x32xbf16>, vector<32x4xbf16>, vector<16x4xf32> -> vector<16x4xf32>
    %c0_12 = arith.constant 0 : index
    %c0_13 = arith.constant 0 : index
    %26 = vector.load %arg6[%c0_12, %c0_13] : memref<16x4xf32, #tpu.memory_space<vmem>>, vector<16x4xf32>
    tpu.vector_store %arg6[%c0_12, %c0_13], %25 {strides = array<i32>} : memref<16x4xf32, #tpu.memory_space<vmem>>, vector<16x4xf32>,
    return
  }
  func.func @transform_0(%arg0: i32, %arg1: i32) -> (i32, i32) {
    %c0_i32 = arith.constant 0 : i32
    %c0_i32_0 = arith.constant 0 : i32
    return %arg0, %c0_i32 : i32, i32
  }
  func.func @transform_1(%arg0: i32, %arg1: i32) -> (i32, i32) {
    %c0_i32 = arith.constant 0 : i32
    %c0_i32_0 = arith.constant 0 : i32
    %c0_i32_1 = arith.constant 0 : i32
    return %c0_i32, %c0_i32_0 : i32, i32
  }
  func.func @transform_2(%arg0: i32, %arg1: i32) -> (i32, i32) {
    %c0_i32 = arith.constant 0 : i32
    %c0_i32_0 = arith.constant 0 : i32
    %c0_i32_1 = arith.constant 0 : i32
    return %c0_i32, %c0_i32_0 : i32, i32
  }
  func.func @transform_3(%arg0: i32, %arg1: i32) -> (i32, i32) {
    %c0_i32 = arith.constant 0 : i32
    %c0_i32_0 = arith.constant 0 : i32
    return %c0_i32, %arg1 : i32, i32
  }
  func.func @transform_4(%arg0: i32, %arg1: i32) -> (i32, i32) {
    %c0_i32 = arith.constant 0 : i32
    return %arg0, %arg1 : i32, i32
  }
}

module attributes {stable_mosaic.version = 11 : i64} {
  func.func @_moe_kernel(%arg0: i32, %arg1: i32, %arg2: memref<1x4xi32, #tpu.memory_space<smem>>, %arg3: memref<16x32xf32, #tpu.memory_space<vmem>>, %arg4: memref<1x32xf32, #tpu.memory_space<vmem>>, %arg5: memref<1x32xf32, #tpu.memory_space<vmem>>, %arg6: memref<1x32x16xbf16, #tpu.memory_space<vmem>>, %arg7: memref<1x16x32xbf16, #tpu.memory_space<vmem>>, %arg8: memref<16x4xf32, #tpu.memory_space<vmem>>, %arg9: memref<16x32xf32, #tpu.memory_space<vmem>>, %arg10: memref<16x32xf32, #tpu.memory_space<vmem>>, %arg11: memref<16x32xf32, #tpu.memory_space<vmem>>) attributes {dimension_semantics = [#tpu.dimension_semantics<parallel>, #tpu.dimension_semantics<arbitrary>], iteration_bounds = array<i64: 1, 4>, scalar_prefetch = 1 : i64, scratch_operands = 2 : i64, tpu.core_type = #tpu.core_type<tc>, window_params = [{transform_indices = @transform_0, window_bounds = array<i64: 16, 32>}, {pipeline_mode = #tpu.pipeline_mode<synchronous>, transform_indices = @transform_1, window_bounds = array<i64: 1, 32>}, {pipeline_mode = #tpu.pipeline_mode<synchronous>, transform_indices = @transform_2, window_bounds = array<i64: 1, 32>}, {transform_indices = @transform_3, window_bounds = array<i64: 1, 32, 16>}, {transform_indices = @transform_4, window_bounds = array<i64: 1, 16, 32>}, {transform_indices = @transform_5, window_bounds = array<i64: 16, 4>}, {transform_indices = @transform_6, window_bounds = array<i64: 16, 32>}]} {
    %c0_i32 = arith.constant 0 : i32
    %0 = arith.cmpi eq, %arg1, %c0_i32 : i32
    %1 = arith.extui %0 : i1 to i32
    %c0_i32_0 = arith.constant 0 : i32
    %2 = arith.cmpi ne, %1, %c0_i32_0 : i32
    scf.if %2 {
      %c0 = arith.constant 0 : index
      %c0_4 = arith.constant 0 : index
      %12 = vector.load %arg3[%c0, %c0_4] : memref<16x32xf32, #tpu.memory_space<vmem>>, vector<16x32xf32>
      %c0_5 = arith.constant 0 : index
      %c0_6 = arith.constant 0 : index
      %13 = vector.load %arg4[%c0_5, %c0_6] : memref<1x32xf32, #tpu.memory_space<vmem>>, vector<1x32xf32>
      %c0_7 = arith.constant 0 : index
      %c0_8 = arith.constant 0 : index
      %14 = vector.load %arg5[%c0_7, %c0_8] : memref<1x32xf32, #tpu.memory_space<vmem>>, vector<1x32xf32>
      %cst = arith.constant dense<0.000000e+00> : vector<16xf32>
      %15 = vector.multi_reduction <add>, %12, %cst [1] : vector<16x32xf32> to vector<16xf32>
      %16 = vector.shape_cast %15 : vector<16xf32> to vector<16x1xf32>
      %cst_9 = arith.constant 3.200000e+01 : f32
      %17 = vector.broadcast %cst_9 : f32 to vector<16x1xf32>
      %18 = arith.divf %16, %17 : vector<16x1xf32>
      %19 = vector.broadcast %18 : vector<16x1xf32> to vector<16x32xf32>
      %20 = arith.subf %12, %19 : vector<16x32xf32>
      %21 = arith.mulf %20, %20 : vector<16x32xf32>
      %cst_10 = arith.constant dense<0.000000e+00> : vector<16xf32>
      %22 = vector.multi_reduction <add>, %21, %cst_10 [1] : vector<16x32xf32> to vector<16xf32>
      %23 = vector.shape_cast %22 : vector<16xf32> to vector<16x1xf32>
      %cst_11 = arith.constant 3.200000e+01 : f32
      %24 = vector.broadcast %cst_11 : f32 to vector<16x1xf32>
      %25 = arith.divf %23, %24 : vector<16x1xf32>
      %cst_12 = arith.constant 9.99999974E-6 : f32
      %26 = vector.broadcast %cst_12 : f32 to vector<16x1xf32>
      %27 = arith.addf %25, %26 : vector<16x1xf32>
      %28 = math.rsqrt %27 : vector<16x1xf32>
      %29 = vector.broadcast %28 : vector<16x1xf32> to vector<16x32xf32>
      %30 = arith.mulf %20, %29 : vector<16x32xf32>
      %31 = vector.broadcast %13 : vector<1x32xf32> to vector<16x32xf32>
      %32 = arith.mulf %30, %31 : vector<16x32xf32>
      %33 = vector.broadcast %14 : vector<1x32xf32> to vector<16x32xf32>
      %34 = arith.addf %32, %33 : vector<16x32xf32>
      %c0_13 = arith.constant 0 : index
      %c0_14 = arith.constant 0 : index
      %35 = vector.load %arg10[%c0_13, %c0_14] : memref<16x32xf32, #tpu.memory_space<vmem>>, vector<16x32xf32>
      tpu.vector_store %arg10[%c0_13, %c0_14], %34 {strides = array<i32>} : memref<16x32xf32, #tpu.memory_space<vmem>>, vector<16x32xf32>,
      %c0_15 = arith.constant 0 : index
      %c0_16 = arith.constant 0 : index
      %36 = vector.load %arg11[%c0_15, %c0_16] : memref<16x32xf32, #tpu.memory_space<vmem>>, vector<16x32xf32>
      tpu.vector_store %arg11[%c0_15, %c0_16], %12 {strides = array<i32>} : memref<16x32xf32, #tpu.memory_space<vmem>>, vector<16x32xf32>,
    } else {
    }
    %3 = arith.index_cast %arg0 : i32 to index
    %4 = arith.index_cast %arg1 : i32 to index
    %5 = memref.load %arg2[%3, %4] : memref<1x4xi32, #tpu.memory_space<smem>>
    %c0_i32_1 = arith.constant 0 : i32
    %6 = arith.cmpi sgt, %5, %c0_i32_1 : i32
    %7 = arith.extui %6 : i1 to i32
    %c0_i32_2 = arith.constant 0 : i32
    %8 = arith.cmpi ne, %7, %c0_i32_2 : i32
    scf.if %8 {
      %c0 = arith.constant 0 : index
      %c0_4 = arith.constant 0 : index
      %12 = vector.load %arg10[%c0, %c0_4] : memref<16x32xf32, #tpu.memory_space<vmem>>, vector<16x32xf32>
      %13 = arith.truncf %12 : vector<16x32xf32> to vector<16x32xbf16>
      %c0_5 = arith.constant 0 : index
      %c0_6 = arith.constant 0 : index
      %c0_7 = arith.constant 0 : index
      %14 = vector.load %arg6[%c0_5, %c0_6, %c0_7] : memref<1x32x16xbf16, #tpu.memory_space<vmem>>, vector<1x32x16xbf16>
      %15 = vector.shape_cast %14 : vector<1x32x16xbf16> to vector<32x16xbf16>
      %cst = arith.constant dense<0.000000e+00> : vector<16x16xf32>
      %16 = tpu.matmul %13, %15, %cst {dimension_numbers = #tpu.dot_dimension_numbers<[1], [0], [0], [1], [0, 0, 1, 1], [], []>} : vector<16x32xbf16>, vector<32x16xbf16>, vector<16x16xf32> -> vector<16x16xf32>
      %cst_8 = arith.constant 0.000000e+00 : f32
      %17 = vector.broadcast %cst_8 : f32 to vector<16x16xf32>
      %18 = arith.maximumf %16, %17 : vector<16x16xf32>
      %19 = arith.truncf %18 : vector<16x16xf32> to vector<16x16xbf16>
      %c0_9 = arith.constant 0 : index
      %c0_10 = arith.constant 0 : index
      %c0_11 = arith.constant 0 : index
      %20 = vector.load %arg7[%c0_9, %c0_10, %c0_11] : memref<1x16x32xbf16, #tpu.memory_space<vmem>>, vector<1x16x32xbf16>
      %21 = vector.shape_cast %20 : vector<1x16x32xbf16> to vector<16x32xbf16>
      %cst_12 = arith.constant dense<0.000000e+00> : vector<16x32xf32>
      %22 = tpu.matmul %19, %21, %cst_12 {dimension_numbers = #tpu.dot_dimension_numbers<[1], [0], [0], [1], [0, 0, 1, 1], [], []>} : vector<16x16xbf16>, vector<16x32xbf16>, vector<16x32xf32> -> vector<16x32xf32>
      %23 = tpu.iota {dimensions = array<i32: 1>} : vector<1x4xi32>
      %c0_13 = arith.constant 0 : index
      %c0_14 = arith.constant 0 : index
      %24 = vector.load %arg8[%c0_13, %c0_14] : memref<16x4xf32, #tpu.memory_space<vmem>>, vector<16x4xf32>
      %25 = vector.broadcast %arg1 : i32 to vector<1x4xi32>
      %26 = arith.cmpi eq, %23, %25 : vector<1x4xi32>
      %27 = arith.extui %26 : vector<1x4xi1> to vector<1x4xi32>
      %28 = arith.sitofp %27 : vector<1x4xi32> to vector<1x4xf32>
      %29 = vector.broadcast %28 : vector<1x4xf32> to vector<16x4xf32>
      %30 = arith.mulf %24, %29 : vector<16x4xf32>
      %cst_15 = arith.constant dense<0.000000e+00> : vector<16xf32>
      %31 = vector.multi_reduction <add>, %30, %cst_15 [1] : vector<16x4xf32> to vector<16xf32>
      %32 = vector.shape_cast %31 : vector<16xf32> to vector<16x1xf32>
      %c0_16 = arith.constant 0 : index
      %c0_17 = arith.constant 0 : index
      %33 = vector.load %arg11[%c0_16, %c0_17] : memref<16x32xf32, #tpu.memory_space<vmem>>, vector<16x32xf32>
      %34 = vector.broadcast %32 : vector<16x1xf32> to vector<16x32xf32>
      %35 = arith.mulf %22, %34 : vector<16x32xf32>
      %36 = arith.addf %33, %35 : vector<16x32xf32>
      %c0_18 = arith.constant 0 : index
      %c0_19 = arith.constant 0 : index
      %37 = vector.load %arg11[%c0_18, %c0_19] : memref<16x32xf32, #tpu.memory_space<vmem>>, vector<16x32xf32>
      tpu.vector_store %arg11[%c0_18, %c0_19], %36 {strides = array<i32>} : memref<16x32xf32, #tpu.memory_space<vmem>>, vector<16x32xf32>,
    } else {
    }
    %c3_i32 = arith.constant 3 : i32
    %9 = arith.cmpi eq, %arg1, %c3_i32 : i32
    %10 = arith.extui %9 : i1 to i32
    %c0_i32_3 = arith.constant 0 : i32
    %11 = arith.cmpi ne, %10, %c0_i32_3 : i32
    scf.if %11 {
      %c0 = arith.constant 0 : index
      %c0_4 = arith.constant 0 : index
      %12 = vector.load %arg11[%c0, %c0_4] : memref<16x32xf32, #tpu.memory_space<vmem>>, vector<16x32xf32>
      %c0_5 = arith.constant 0 : index
      %c0_6 = arith.constant 0 : index
      %13 = vector.load %arg9[%c0_5, %c0_6] : memref<16x32xf32, #tpu.memory_space<vmem>>, vector<16x32xf32>
      tpu.vector_store %arg9[%c0_5, %c0_6], %12 {strides = array<i32>} : memref<16x32xf32, #tpu.memory_space<vmem>>, vector<16x32xf32>,
    } else {
    }
    return
  }
  func.func @transform_0(%arg0: i32, %arg1: i32, %arg2: memref<1x4xi32, #tpu.memory_space<smem>>) -> (i32, i32) {
    %c0_i32 = arith.constant 0 : i32
    %c0_i32_0 = arith.constant 0 : i32
    return %arg0, %c0_i32 : i32, i32
  }
  func.func @transform_1(%arg0: i32, %arg1: i32, %arg2: memref<1x4xi32, #tpu.memory_space<smem>>) -> (i32, i32) {
    %c0_i32 = arith.constant 0 : i32
    %c0_i32_0 = arith.constant 0 : i32
    %c0_i32_1 = arith.constant 0 : i32
    return %c0_i32, %c0_i32_0 : i32, i32
  }
  func.func @transform_2(%arg0: i32, %arg1: i32, %arg2: memref<1x4xi32, #tpu.memory_space<smem>>) -> (i32, i32) {
    %c0_i32 = arith.constant 0 : i32
    %c0_i32_0 = arith.constant 0 : i32
    %c0_i32_1 = arith.constant 0 : i32
    return %c0_i32, %c0_i32_0 : i32, i32
  }
  func.func @transform_3(%arg0: i32, %arg1: i32, %arg2: memref<1x4xi32, #tpu.memory_space<smem>>) -> (i32, i32, i32) {
    %c0_i32 = arith.constant 0 : i32
    %c0_i32_0 = arith.constant 0 : i32
    %c0_i32_1 = arith.constant 0 : i32
    return %arg1, %c0_i32, %c0_i32_0 : i32, i32, i32
  }
  func.func @transform_4(%arg0: i32, %arg1: i32, %arg2: memref<1x4xi32, #tpu.memory_space<smem>>) -> (i32, i32, i32) {
    %c0_i32 = arith.constant 0 : i32
    %c0_i32_0 = arith.constant 0 : i32
    %c0_i32_1 = arith.constant 0 : i32
    return %arg1, %c0_i32, %c0_i32_0 : i32, i32, i32
  }
  func.func @transform_5(%arg0: i32, %arg1: i32, %arg2: memref<1x4xi32, #tpu.memory_space<smem>>) -> (i32, i32) {
    %c0_i32 = arith.constant 0 : i32
    %c0_i32_0 = arith.constant 0 : i32
    return %arg0, %c0_i32 : i32, i32
  }
  func.func @transform_6(%arg0: i32, %arg1: i32, %arg2: memref<1x4xi32, #tpu.memory_space<smem>>) -> (i32, i32) {
    %c0_i32 = arith.constant 0 : i32
    %c0_i32_0 = arith.constant 0 : i32
    return %arg0, %c0_i32 : i32, i32
  }
}

</mosaic_0001>

<llo_original>
// kernel: _lambda_.5
$region0: #{_lambda_.5}
  #allocation0 [shape = 'u32[]', space=smem, size = 0x4, offset = 0x4, fixed_abs, tag = 'smem constant byte address 0x4 - core index']
  #allocation1 [shape = 'u32[144,128]{1,0:T(1,128)}', space=vmem, size = 0x12000, scoped, tag = 'internal scratch']
  %s0 = inlined_call_operand.hbm [shape: f32[16,32], index: 0, kind: input, shape index: {}]
  %s1 = inlined_call_operand.vmem [shape: f32[1,32], index: 1, kind: input, shape index: {}]
  %s2 = inlined_call_operand.vmem [shape: f32[1,32], index: 2, kind: input, shape index: {}]
  %s3 = inlined_call_operand.hbm [shape: bf16[3,32,32], index: 3, kind: input, shape index: {}]
  %s4 = inlined_call_operand.vmem [shape: bf16[3,16,32], index: 4, kind: output, shape index: {}]
  %s5 = sld [smem:[#allocation0]]
  $region57: #{_lambda_.5} parent=0
    _
  %s7 = ssub.s32 1, %s5
  %s8 = scalar_select 0, %s7, %s5
  $region1: #{_lambda_.5} parent=0
    #allocation2 [shape = 'u8[8192]{0}', space=vmem, size = 0x2000, scoped, tag = 'input window, operand 0, single buffered']
    #allocation3 [shape = 's32[2]{0}', space=sflag, size = 0x8, scoped, tag = 'scoped memory for _lambda_.5']
    #allocation4 [shape = 'u8[16384]{0}', space=vmem, size = 0x4000, scoped, tag = 'input window, operand 3']
    #allocation5 [shape = 's32[2]{0}', space=sflag, size = 0x8, scoped, tag = 'scoped memory for _lambda_.5']
    %9 = vsyncpa [#allocation3], 0
    %10 = vsyncpa [#allocation5], 0
    %s11 = scalar_lea.sflag [#allocation5], 1
    %12 = vsyncpa %s11, 0
    loop: start=0, step=1, limit=5
    $region2: #{_lambda_.5} parent=1 // loop_pre_header
      _
    $region3: #{_lambda_.5} parent=1 // loop_header
      %s14 = sphi 0, %s18
      %p15 = scmp.ge.s32.totalorder %s14, 5
      %s21 = sphi 0, %s40
      %s22 = sphi 0, %s36
      %s23 = sphi 0, %s32
      %s24 = sphi 0, %s21
      %s25 = sphi 0, %s22
      %s26 = sphi 0, %s23
      %s27 = sphi 0, %s24
      %s28 = sphi 0, %s25
      %s29 = sphi 0, %s26
      %s43 = sphi 0, %s45
      %s46 = sphi 0, %s43
      %s47 = sphi 0, %s46
      %s63 = sphi 0, %s47
      %s67 = sphi 0, %s67
      %s69 = sphi 0, %s67
      %s70 = sphi 0, %s69
      %s84 = sphi 0, %s70
      %s88 = sphi 0, %s88
      %s90 = sphi 0, %s88
      %s91 = sphi 0, %s90
      %s105 = sphi 0, %s91
      %s113 = sphi 0, %s115
      %s116 = sphi 0, %s113
      %s117 = sphi 0, %s116
      %s133 = sphi 0, %s117
      %s143 = sphi 0, %s145
      %s146 = sphi 0, %s143
      %s147 = sphi 0, %s146
      %s163 = sphi 0, %s147
    $region4: #{_lambda_.5} parent=1 // loop_header_branch
      %17 = sbr.rel (%p15) target = $region8
    $region5: #{_lambda_.5} parent=1 // loop_body
      %s19 = ssub.s32 %s14, 1
      %s20 = ssub.s32 %s14, 2
      %s30 = sadd.s32 1, %s23
      %p31 = scmp.ge.s32.totalorder %s30, 1
      %s32 = scalar_select %p31, 0, %s30
      %s33 = sadd.s32 1, %s22
      %s34 = scalar_select %p31, %s33, %s22
      %p35 = scmp.ge.s32.totalorder %s34, 3
      %s36 = scalar_select %p35, 0, %s34
      %s37 = sadd.s32 1, %s21
      %s38 = scalar_select %p35, %s37, %s21
      %p39 = scmp.ge.s32.totalorder %s38, 1
      %s40 = scalar_select %p39, 0, %s38
      %s41 = ssub.s32 %s21, %s40
      %p42 = scmp.eq.s32.totalorder %s41, 0
      %s44 = sadd.s32 %s43, 1
      %s45 = scalar_select %p42, %s43, %s44
      %p48 = pneg %p42
      %p49 = scmp.eq.s32.totalorder %s14, 2
      %p50 = por %p48, %p49
      %p51 = scmp.ne.s32.totalorder %s43, %s46
      %p52 = scmp.eq.s32.totalorder %s14, 0
      %p53 = por %p51, %p52
      %p54 = scmp.ne.s32.totalorder %s43, %s46
      %p55 = scmp.eq.s32.totalorder %s19, 2
      %p56 = por %p54, %p55
      %p57 = scmp.ne.s32.totalorder %s46, %s47
      %p58 = scmp.eq.s32.totalorder %s19, 0
      %p59 = por %p57, %p58
      %p60 = scmp.ne.s32.totalorder %s46, %s47
      %p61 = scmp.eq.s32.totalorder %s20, 2
      %p62 = por %p60, %p61
      %p64 = scmp.ne.s32.totalorder %s47, %s63
      %p65 = scmp.eq.s32.totalorder %s20, 0
      %p66 = por %p64, %p65
      %s68 = sadd.s32 %s67, 1
      %p71 = scmp.eq.s32.totalorder %s14, 2
      %p72 = scmp.ne.s32.totalorder %s67, %s69
      %p73 = scmp.eq.s32.totalorder %s14, 0
      %p74 = por %p72, %p73
      %p75 = scmp.ne.s32.totalorder %s67, %s69
      %p76 = scmp.eq.s32.totalorder %s19, 2
      %p77 = por %p75, %p76
      %p78 = scmp.ne.s32.totalorder %s69, %s70
      %p79 = scmp.eq.s32.totalorder %s19, 0
      %p80 = por %p78, %p79
      %p81 = scmp.ne.s32.totalorder %s69, %s70
      %p82 = scmp.eq.s32.totalorder %s20, 2
      %p83 = por %p81, %p82
      %p85 = scmp.ne.s32.totalorder %s70, %s84
      %p86 = scmp.eq.s32.totalorder %s20, 0
      %p87 = por %p85, %p86
      %s89 = sadd.s32 %s88, 1
      %p92 = scmp.eq.s32.totalorder %s14, 2
      %p93 = scmp.ne.s32.totalorder %s88, %s90
      %p94 = scmp.eq.s32.totalorder %s14, 0
      %p95 = por %p93, %p94
      %p96 = scmp.ne.s32.totalorder %s88, %s90
      %p97 = scmp.eq.s32.totalorder %s19, 2
      %p98 = por %p96, %p97
      %p99 = scmp.ne.s32.totalorder %s90, %s91
      %p100 = scmp.eq.s32.totalorder %s19, 0
      %p101 = por %p99, %p100
      %p102 = scmp.ne.s32.totalorder %s90, %s91
      %p103 = scmp.eq.s32.totalorder %s20, 2
      %p104 = por %p102, %p103
      %p106 = scmp.ne.s32.totalorder %s91, %s105
      %p107 = scmp.eq.s32.totalorder %s20, 0
      %p108 = por %p106, %p107
      %s109 = ssub.s32 %s22, %s36
      %s110 = ssub.s32 %s23, %s32
      %s111 = sor.u32 %s109, %s110
      %p112 = scmp.eq.s32.totalorder %s111, 0
      %s114 = sadd.s32 %s113, 1
      %s115 = scalar_select %p112, %s113, %s114
      %p118 = pneg %p112
      %p119 = scmp.eq.s32.totalorder %s14, 2
      %p120 = por %p118, %p119
      %p121 = scmp.ne.s32.totalorder %s113, %s116
      %p122 = scmp.eq.s32.totalorder %s14, 0
      %p123 = por %p121, %p122
      %p124 = scmp.ne.s32.totalorder %s113, %s116
      %p125 = scmp.eq.s32.totalorder %s19, 2
      %p126 = por %p124, %p125
      %p127 = scmp.ne.s32.totalorder %s116, %s117
      %p128 = scmp.eq.s32.totalorder %s19, 0
      %p129 = por %p127, %p128
      %p130 = scmp.ne.s32.totalorder %s116, %s117
      %p131 = scmp.eq.s32.totalorder %s20, 2
      %p132 = por %p130, %p131
      %p134 = scmp.ne.s32.totalorder %s117, %s133
      %p135 = scmp.eq.s32.totalorder %s20, 0
      %p136 = por %p134, %p135
      %s137 = ssub.s32 %s22, %s36
      %s138 = ssub.s32 %s21, %s40
      %s139 = sor.u32 %s137, %s138
      %s140 = ssub.s32 %s23, %s32
      %s141 = sor.u32 %s139, %s140
      %p142 = scmp.eq.s32.totalorder %s141, 0
      %s144 = sadd.s32 %s143, 1
      %s145 = scalar_select %p142, %s143, %s144
      %p148 = pneg %p142
      %p149 = scmp.eq.s32.totalorder %s14, 2
      %p150 = por %p148, %p149
      %p151 = scmp.ne.s32.totalorder %s143, %s146
      %p152 = scmp.eq.s32.totalorder %s14, 0
      %p153 = por %p151, %p152
      %p154 = scmp.ne.s32.totalorder %s143, %s146
      %p155 = scmp.eq.s32.totalorder %s19, 2
      %p156 = por %p154, %p155
      %p157 = scmp.ne.s32.totalorder %s146, %s147
      %p158 = scmp.eq.s32.totalorder %s19, 0
      %p159 = por %p157, %p158
      %p160 = scmp.ne.s32.totalorder %s146, %s147
      %p161 = scmp.eq.s32.totalorder %s20, 2
      %p162 = por %p160, %p161
      %p164 = scmp.ne.s32.totalorder %s147, %s163
      %p165 = scmp.eq.s32.totalorder %s20, 0
      %p166 = por %p164, %p165
      %p167 = scmp.le.s32.totalorder 1, %s14
      %p168 = scmp.lt.s32.totalorder %s14, 4
      %p169 = pnand %p167, %p168
      %p170 = pneg %p169
      // Predicated region
      $region9: #{_lambda_.5} parent=5 // pred_check
        _
      $region10: #{_lambda_.5} parent=5 // pred_check_branch
        %172 = sbr.rel (%p169) target = $region12
      $region11: #{_lambda_.5} parent=5 // pred_region
        %s173 = ssub.s32 %s14, 1
        // Predicated region
        $region13: #{_lambda_.5} parent=11 // pred_check
          %p174 = pneg %p59
        $region14: #{_lambda_.5} parent=11 // pred_check_branch
          %176 = sbr.rel (%p174) target = $region16
        $region15: #{_lambda_.5} parent=11 // pred_region
          %s177 = smul.u32 2, %s24
          %s179 = ssub.s32 256, 256
          %180 = vsyncadd [#allocation3], %s179
          %s181 = smul.addr %s177, 128
          %s182 = scalar_lea.hbm %s0, %s181
          %s183 = sshll.u32 [#allocation2], 4
          %s184 = int_to_ptr.vmem [resolvable:$true] %s183
          %189 = dma.hbm_to_vmem [thread:$0]  %s182, 256, %s184, [#allocation3], 128, 128, 8
        $region16: #{_lambda_.5} parent=11 // pred_fallthru
          _
        // Predicated region
        $region17: #{_lambda_.5} parent=11 // pred_check
          %p190 = pneg %p80
        $region18: #{_lambda_.5} parent=11 // pred_check_branch
          %192 = sbr.rel (%p190) target = $region20
        $region19: #{_lambda_.5} parent=11 // pred_region
          _
        $region20: #{_lambda_.5} parent=11 // pred_fallthru
          _
        // Predicated region
        $region21: #{_lambda_.5} parent=11 // pred_check
          %p193 = pneg %p101
        $region22: #{_lambda_.5} parent=11 // pred_check_branch
          %195 = sbr.rel (%p193) target = $region24
        $region23: #{_lambda_.5} parent=11 // pred_region
          _
        $region24: #{_lambda_.5} parent=11 // pred_fallthru
          _
      $region12: #{_lambda_.5} parent=5 // pred_fallthru
        _
      %p196 = scmp.lt.s32.totalorder %s14, 3
      // Predicated region
      $region25: #{_lambda_.5} parent=5 // pred_check
        %p197 = pneg %p196
      $region26: #{_lambda_.5} parent=5 // pred_check_branch
        %199 = sbr.rel (%p197) target = $region28
      $region27: #{_lambda_.5} parent=5 // pred_region
        // Predicated region
        $region29: #{_lambda_.5} parent=27 // pred_check
          %p200 = pneg %p123
        $region30: #{_lambda_.5} parent=27 // pred_check_branch
          %202 = sbr.rel (%p200) target = $region32
        $region31: #{_lambda_.5} parent=27 // pred_region
          %s203 = sand.u32 %s113, 1
          %s204 = scalar_lea.sflag [#allocation5], %s203
          %s205 = sand.u32 %s113, 1
          %s206 = smul.addr %s205, 16
          %s207 = scalar_lea.vmem [#allocation4], %s206
          %s209 = ssub.s32 256, 256
          %210 = vsyncadd %s204, %s209
          %s211 = smul.addr %s22, 4
          %s212 = sadd.s32 %s23, %s211
          %s213 = smul.addr %s212, 64
          %s214 = scalar_lea.hbm %s3, %s213
          %s215 = sshll.u32 %s207, 4
          %s216 = int_to_ptr.vmem [resolvable:$true] %s215
          %221 = dma.hbm_to_vmem [thread:$0]  %s214, 256, %s216, %s204, 64, 64, 4
        $region32: #{_lambda_.5} parent=27 // pred_fallthru
          _
      $region28: #{_lambda_.5} parent=5 // pred_fallthru
        _
      %p222 = scmp.le.s32.totalorder 1, %s14
      %p223 = scmp.lt.s32.totalorder %s14, 4
      %p224 = pnand %p222, %p223
      %p225 = pneg %p224
      // Predicated region
      $region33: #{_lambda_.5} parent=5 // pred_check
        _
      $region34: #{_lambda_.5} parent=5 // pred_check_branch
        %227 = sbr.rel (%p224) target = $region36
      $region35: #{_lambda_.5} parent=5 // pred_region
        %s228 = ssub.s32 %s14, 1
        // Predicated region
        $region37: #{_lambda_.5} parent=35 // pred_check
          %p229 = pneg %p59
        $region38: #{_lambda_.5} parent=35 // pred_check_branch
          %231 = sbr.rel (%p229) target = $region40
        $region39: #{_lambda_.5} parent=35 // pred_region
          %232 = dma.done [#allocation3], 256
        $region40: #{_lambda_.5} parent=35 // pred_fallthru
          _
        %s233 = sand.u32 %s116, 1
        %s234 = scalar_lea.sflag [#allocation5], %s233
        %s235 = sand.u32 %s116, 1
        %s236 = smul.addr %s235, 16
        %s237 = scalar_lea.vmem [#allocation4], %s236
        // Predicated region
        $region41: #{_lambda_.5} parent=35 // pred_check
          %p238 = pneg %p129
        $region42: #{_lambda_.5} parent=35 // pred_check_branch
          %240 = sbr.rel (%p238) target = $region44
        $region43: #{_lambda_.5} parent=35 // pred_region
          %241 = dma.done %s234, 256
        $region44: #{_lambda_.5} parent=35 // pred_fallthru
          _
        %p242 = pneg %p59
        %p243 = pneg %p56
        %p244 = pneg %p80
        %p245 = pneg %p77
        %p246 = pneg %p101
        %p247 = pneg %p98
        %s248 = sand.u32 %s116, 1
        %s249 = scalar_lea.sflag [#allocation5], %s248
        %s250 = sand.u32 %s116, 1
        %s251 = smul.addr %s250, 16
        %s252 = scalar_lea.vmem [#allocation4], %s251
        %p253 = pneg %p129
        %p254 = pneg %p126
        %p255 = pneg %p159
        %p256 = pneg %p156
        %s257 = smul.u32 2, %s24
        %p258 = scmp.lt.s32.totalorder %s25, 2
        %s259 = scalar_select %p258, %s25, 2
        %p260 = scmp.lt.s32.totalorder %s257, 1
        %s261 = scalar_select %p260, %s257, 1
        %p262 = scmp.lt.s32.totalorder %s26, 0
        %s263 = scalar_select %p262, %s26, 0
        %s264 = sadd.s32 %s263, %s261
        %s265 = smul.addr %s259, 2
        %s266 = sadd.s32 %s264, %s265
        %s267 = smul.addr %s266, 4
        %s268 = scalar_lea.vmem %s4, %s267
        %s269 = smul.u32 2, %s24
        %s270 = smul.u32 2, %s24
        %p271 = scmp.lt.s32.totalorder %s25, 2
        %s272 = scalar_select %p271, %s25, 2
        %p273 = scmp.lt.s32.totalorder %s270, 1
        %s274 = scalar_select %p273, %s270, 1
        %p275 = scmp.lt.s32.totalorder %s26, 0
        %s276 = scalar_select %p275, %s26, 0
        %s277 = sadd.s32 %s276, %s274
        %s278 = smul.addr %s272, 2
        %s279 = sadd.s32 %s277, %s278
        %s280 = smul.addr %s279, 4
        %s281 = scalar_lea.vmem %s4, %s280
        %s282 = smul.u32 2, %s24
        %v284 = vld [vmem:[#allocation2] sm:$0xff]
        %v285 = vld [vmem:[#allocation2 + $0x8] sm:$0xff]
        %v286 = vld [vmem:[%s1] sm:$0x1]
        %v287 = vld [vmem:[%s2] sm:$0x1]
        %vm288 = vcmask 261120
        %v289 = vsel %vm288, %v284, 0.0
        %290 = vadd.xlane.f32.xlu0 %v289
        %v291 = vpop.xlane.xlu0 %290
        %v292 = vsel %vm288, %v285, 0.0
        %293 = vadd.xlane.f32.xlu0 %v292
        %v294 = vpop.xlane.xlu0 %293
        %v295 = vrcp.pop 32.0
        %v296 = vmul.f32 %v291, %v295
        %v297 = vmul.f32 %v294, %v295
        %v298 = vsub.f32 %v284, %v296
        %v299 = vsub.f32 %v285, %v297
        %v300 = vmul.f32 %v298, %v298
        %v301 = vmul.f32 %v299, %v299
        %v302 = vsel %vm288, %v300, 0.0
        %303 = vadd.xlane.f32.xlu0 %v302
        %v304 = vpop.xlane.xlu0 %303
        %v305 = vsel %vm288, %v301, 0.0
        %306 = vadd.xlane.f32.xlu0 %v305
        %v307 = vpop.xlane.xlu0 %306
        %v308 = vmul.f32 %v304, %v295
        %v309 = vmul.f32 %v307, %v295
        %v310 = vadd.f32 %v308, 1e-05
        %v311 = vadd.f32 %v309, 1e-05
        %v312 = vrsqrt.pop %v310
        %v313 = vrsqrt.pop %v311
        %v314 = vmul.f32 %v298, %v312
        %v315 = vmul.f32 %v299, %v313
        %v317 = vlaneseq
        %v318 = vshrl.u32 %v317, 7
        %v319 = vsub.s32 0, %v318
        %v320 = vrot.slane %v286, %v319
        %v322 = vmul.f32 %v314, %v320
        %v323 = vmul.f32 %v315, %v320
        %v325 = vlaneseq
        %v326 = vshrl.u32 %v325, 7
        %v327 = vsub.s32 0, %v326
        %v328 = vrot.slane %v287, %v327
        %v330 = vadd.f32 %v322, %v328
        %v331 = vadd.f32 %v323, %v328
        %v332 = vpack.c.bf16 %v331, %v330
        %v333 = vld [vmem:[%s237] sm:$0xf]
        %v334 = vld [vmem:[%s237 + $0x4] sm:$0xf]
        %v335 = vld [vmem:[%s237 + $0x8] sm:$0xf]
        %v336 = vld [vmem:[%s237 + $0xc] sm:$0xf]
        %v341 = vunpack.c.l.b16 %v333
        %v342 = vunpack.c.l.b16 %v334
        %v343 = vunpack.c.l.b16 %v335
        %v344 = vunpack.c.l.b16 %v336
        %v345 = vpack.c.b16 %v342, %v341
        %v346 = vpack.c.b16 %v344, %v343
        %v350 = vsel %vm288, %v332, 0
        %352 = vmatprep.subr.bf16.mxu0 0
        %353 = vmatpush1.bf16.msra.mxu0 0
        %354 = vmatprep.subr.bf16.mxu0 0
        %355 = vmatpush1.bf16.msra.mxu0 0
        %356 = vmatprep.subr.bf16.mxu0 0
        %357 = vmatpush1.bf16.msra.mxu0 0
        %358 = vmatprep.subr.bf16.mxu0 0
        %359 = vmatpush1.bf16.msra.mxu0 0
        %360 = vmatprep.subr.bf16.mxu0 0
        %361 = vmatpush1.bf16.msra.mxu0 0
        %362 = vmatprep.subr.bf16.mxu0 0
        %363 = vmatpush1.bf16.msra.mxu0 0
        %364 = vmatprep.subr.bf16.mxu0 0
        %365 = vmatpush1.bf16.msra.mxu0 %v346
        %366 = vmatprep.subr.bf16.mxu0 0
        %367 = vmatpush1.bf16.msra.mxu0 %v345
        %368 = vmatprep.subr.bf16.mxu0 0
        %369 = vmatpush2.bf16.msra.mxu0 0
        %370 = vmatprep.subr.bf16.mxu0 0
        %371 = vmatpush2.bf16.msra.mxu0 0
        %372 = vmatprep.subr.bf16.mxu0 0
        %373 = vmatpush2.bf16.msra.mxu0 0
        %374 = vmatprep.subr.bf16.mxu0 0
        %375 = vmatpush2.bf16.msra.mxu0 0
        %376 = vmatprep.subr.bf16.mxu0 0
        %377 = vmatpush2.bf16.msra.mxu0 0
        %378 = vmatprep.subr.bf16.mxu0 0
        %379 = vmatpush2.bf16.msra.mxu0 0
        %380 = vmatprep.subr.bf16.mxu0 0
        %381 = vmatpush2.bf16.msra.mxu0 0
        %382 = vmatprep.subr.bf16.mxu0 0
        %383 = vmatpush2.bf16.msra.mxu0 0
        %384 = vmatprep.mubr.bf16.mxu0 0
        %385 = vmatmul.mubr.bf16.gmra.mxu0 %v350
        %v386 = vpop.f32.mrf.mxu0
        %v387 = vadd.f32 0.0, %v386
        %v388 = vpop.f32.mrf.mxu0
        %v389 = vpop.f32.mrf.mxu0
        %v390 = vadd.f32 0.0, %v389
        %v391 = vpop.f32.mrf.mxu0
        %392 = vdwg.mxu0
        %v393 = vpack.c.bf16 %v390, %v387
        %v395 = vunpack.c.l.b16 %v393
        %v396 = vunpack.c.h.b16 %v393
        %v397 = vpack.c.b16 %v395, %v395
        %v398 = vpack.c.b16 %v396, %v396
        %vm401 = vcmask 257024
        %402 = vst.msk [vmem:[%s281] sm:$0xf] %vm401, %v397
        %403 = vst.msk [vmem:[%s281 + $0x4] sm:$0xf] %vm401, %v398
        %s404 = smul.u32 2, %s24
        %p405 = scmp.lt.s32.totalorder %s25, 2
        %s406 = scalar_select %p405, %s25, 2
        %p407 = scmp.lt.s32.totalorder %s404, 1
        %s408 = scalar_select %p407, %s404, 1
        %p409 = scmp.lt.s32.totalorder %s26, 0
        %s410 = scalar_select %p409, %s26, 0
        %s411 = sadd.s32 %s410, %s408
        %s412 = smul.addr %s406, 2
        %s413 = sadd.s32 %s411, %s412
        %s414 = smul.addr %s413, 4
        %s415 = scalar_lea.vmem %s4, %s414
        // Predicated region
        $region45: #{_lambda_.5} parent=35 // pred_check
          %p416 = pneg %p156
        $region46: #{_lambda_.5} parent=35 // pred_check_branch
          %418 = sbr.rel (%p416) target = $region48
        $region47: #{_lambda_.5} parent=35 // pred_region
          %s419 = smul.u32 2, %s24
        $region48: #{_lambda_.5} parent=35 // pred_fallthru
          _
      $region36: #{_lambda_.5} parent=5 // pred_fallthru
        _
      %p420 = scmp.le.s32.totalorder 2, %s14
      // Predicated region
      $region49: #{_lambda_.5} parent=5 // pred_check
        %p421 = pneg %p420
      $region50: #{_lambda_.5} parent=5 // pred_check_branch
        %423 = sbr.rel (%p421) target = $region52
      $region51: #{_lambda_.5} parent=5 // pred_region
        %s424 = ssub.s32 %s14, 2
        // Predicated region
        $region53: #{_lambda_.5} parent=51 // pred_check
          %p425 = pneg %p162
        $region54: #{_lambda_.5} parent=51 // pred_check_branch
          %427 = sbr.rel (%p425) target = $region56
        $region55: #{_lambda_.5} parent=51 // pred_region
          %s428 = smul.u32 2, %s27
          %p429 = scmp.lt.s32.totalorder %s28, 2
          %s430 = scalar_select %p429, %s28, 2
          %p431 = scmp.lt.s32.totalorder %s428, 1
          %s432 = scalar_select %p431, %s428, 1
          %p433 = scmp.lt.s32.totalorder %s29, 0
          %s434 = scalar_select %p433, %s29, 0
          %s435 = sadd.s32 %s434, %s432
          %s436 = smul.addr %s430, 2
          %s437 = sadd.s32 %s435, %s436
          %s438 = smul.addr %s437, 4
          %s439 = scalar_lea.vmem %s4, %s438
        $region56: #{_lambda_.5} parent=51 // pred_fallthru
          _
      $region52: #{_lambda_.5} parent=5 // pred_fallthru
        _
    $region6: #{_lambda_.5} parent=1 // loop_footer
      %s18 = sadd.s32 1, %s14
    $region7: #{_lambda_.5} parent=1 // loop_footer_branch
      %13 = sbr.rel target = $region3
    $region8: #{_lambda_.5} parent=1 // loop_exit
      _
    %440 = vsyncpa [#allocation3], 1
    %s441 = scalar_lea.sflag [#allocation3], 1
    %442 = vsyncpa %s441, 1
    %443 = vsyncpa [#allocation5], 1
    %s444 = scalar_lea.sflag [#allocation5], 1
    %445 = vsyncpa %s444, 1

// kernel: _lambda_.7
$region0: #{_lambda_.7}
  #allocation0 [shape = 'u32[]', space=smem, size = 0x4, offset = 0x4, fixed_abs, tag = 'smem constant byte address 0x4 - core index']
  #allocation1 [shape = 'u32[144,128]{1,0:T(1,128)}', space=vmem, size = 0x12000, scoped, tag = 'internal scratch']
  %s0 = inlined_call_operand.vmem [shape: bf16[16,32], index: 0, kind: input, shape index: {}]
  %s1 = inlined_call_operand.vmem [shape: bf16[32,32], index: 1, kind: input, shape index: {}]
  %s2 = inlined_call_operand.vmem [shape: f32[16,32], index: 2, kind: input, shape index: {}]
  %s3 = inlined_call_operand.vmem [shape: f32[16,32], index: 3, kind: output, shape index: {}]
  %s4 = sld [smem:[#allocation0]]
  $region22: #{_lambda_.7} parent=0
    _
  %s6 = ssub.s32 1, %s4
  %s7 = scalar_select 0, %s6, %s4
  // Predicated region
  $region2: #{_lambda_.7} parent=0 // pred_check
    _
  $region3: #{_lambda_.7} parent=0 // pred_check_branch
    %9 = sbr.rel (0) target = $region5
  $region4: #{_lambda_.7} parent=0 // pred_region
    _
  $region5: #{_lambda_.7} parent=0 // pred_fallthru
    _
  // Predicated region
  $region6: #{_lambda_.7} parent=0 // pred_check
    _
  $region7: #{_lambda_.7} parent=0 // pred_check_branch
    %11 = sbr.rel (0) target = $region9
  $region8: #{_lambda_.7} parent=0 // pred_region
    _
  $region9: #{_lambda_.7} parent=0 // pred_fallthru
    _
  // Predicated region
  $region10: #{_lambda_.7} parent=0 // pred_check
    _
  $region11: #{_lambda_.7} parent=0 // pred_check_branch
    %13 = sbr.rel (0) target = $region13
  $region12: #{_lambda_.7} parent=0 // pred_region
    _
  $region13: #{_lambda_.7} parent=0 // pred_fallthru
    _
  %v15 = vld [vmem:[%s0] sm:$0xf]
  %v16 = vld [vmem:[%s0 + $0x4] sm:$0xf]
  %v17 = vld [vmem:[%s1] sm:$0xf]
  %v18 = vld [vmem:[%s1 + $0x4] sm:$0xf]
  %v19 = vld [vmem:[%s1 + $0x8] sm:$0xf]
  %v20 = vld [vmem:[%s1 + $0xc] sm:$0xf]
  %v23 = vunpack.c.l.b16 %v15
  %v24 = vunpack.c.l.b16 %v16
  %v25 = vpack.c.b16 %v24, %v23
  %v30 = vunpack.c.l.b16 %v17
  %v31 = vunpack.c.l.b16 %v18
  %v32 = vunpack.c.l.b16 %v19
  %v33 = vunpack.c.l.b16 %v20
  %v34 = vpack.c.b16 %v31, %v30
  %v35 = vpack.c.b16 %v33, %v32
  %vm38 = vcmask 261120
  %v40 = vsel %vm38, %v25, 0
  %42 = vmatprep.subr.bf16.mxu0 0
  %43 = vmatpush1.bf16.msra.mxu0 0
  %44 = vmatprep.subr.bf16.mxu0 0
  %45 = vmatpush1.bf16.msra.mxu0 0
  %46 = vmatprep.subr.bf16.mxu0 0
  %47 = vmatpush1.bf16.msra.mxu0 0
  %48 = vmatprep.subr.bf16.mxu0 0
  %49 = vmatpush1.bf16.msra.mxu0 0
  %50 = vmatprep.subr.bf16.mxu0 0
  %51 = vmatpush1.bf16.msra.mxu0 0
  %52 = vmatprep.subr.bf16.mxu0 0
  %53 = vmatpush1.bf16.msra.mxu0 0
  %54 = vmatprep.subr.bf16.mxu0 0
  %55 = vmatpush1.bf16.msra.mxu0 %v35
  %56 = vmatprep.subr.bf16.mxu0 0
  %57 = vmatpush1.bf16.msra.mxu0 %v34
  %58 = vmatprep.subr.bf16.mxu0 0
  %59 = vmatpush2.bf16.msra.mxu0 0
  %60 = vmatprep.subr.bf16.mxu0 0
  %61 = vmatpush2.bf16.msra.mxu0 0
  %62 = vmatprep.subr.bf16.mxu0 0
  %63 = vmatpush2.bf16.msra.mxu0 0
  %64 = vmatprep.subr.bf16.mxu0 0
  %65 = vmatpush2.bf16.msra.mxu0 0
  %66 = vmatprep.subr.bf16.mxu0 0
  %67 = vmatpush2.bf16.msra.mxu0 0
  %68 = vmatprep.subr.bf16.mxu0 0
  %69 = vmatpush2.bf16.msra.mxu0 0
  %70 = vmatprep.subr.bf16.mxu0 0
  %71 = vmatpush2.bf16.msra.mxu0 0
  %72 = vmatprep.subr.bf16.mxu0 0
  %73 = vmatpush2.bf16.msra.mxu0 0
  %74 = vmatprep.mubr.bf16.mxu0 0
  %75 = vmatmul.mubr.bf16.gmra.mxu0 %v40
  %v76 = vpop.f32.mrf.mxu0
  %v77 = vadd.f32 0.0, %v76
  %v78 = vpop.f32.mrf.mxu0
  %v79 = vpop.f32.mrf.mxu0
  %v80 = vadd.f32 0.0, %v79
  %v81 = vpop.f32.mrf.mxu0
  %82 = vdwg.mxu0
  %v83 = vld [vmem:[%s2] sm:$0xff]
  %v84 = vld [vmem:[%s2 + $0x8] sm:$0xff]
  %v85 = vadd.f32 %v83, %v77
  %v86 = vadd.f32 %v84, %v80
  %87 = vst.msk [vmem:[%s3] sm:$0xff] %vm38, %v85
  %88 = vst.msk [vmem:[%s3 + $0x8] sm:$0xff] %vm38, %v86
  // Predicated region
  $region14: #{_lambda_.7} parent=0 // pred_check
    _
  $region15: #{_lambda_.7} parent=0 // pred_check_branch
    %90 = sbr.rel (0) target = $region17
  $region16: #{_lambda_.7} parent=0 // pred_region
    _
  $region17: #{_lambda_.7} parent=0 // pred_fallthru
    _
  // Predicated region
  $region18: #{_lambda_.7} parent=0 // pred_check
    _
  $region19: #{_lambda_.7} parent=0 // pred_check_branch
    %92 = sbr.rel (0) target = $region21
  $region20: #{_lambda_.7} parent=0 // pred_region
    _
  $region21: #{_lambda_.7} parent=0 // pred_fallthru
    _

// kernel: _lambda_.6
$region0: #{_lambda_.6}
  #allocation0 [shape = 'u32[]', space=smem, size = 0x4, offset = 0x4, fixed_abs, tag = 'smem constant byte address 0x4 - core index']
  #allocation1 [shape = 'u32[144,128]{1,0:T(1,128)}', space=vmem, size = 0x12000, scoped, tag = 'internal scratch']
  #allocation2 [shape = 'f32[4,8,1]{2,1,0:T(8,128)}', space=vmem, size = 0x4000, scoped, tag = 'scratch operand']
  #allocation3 [shape = 'f32[4,8,1]{2,1,0:T(8,128)}', space=vmem, size = 0x4000, scoped, tag = 'scratch operand']
  #allocation4 [shape = 'f32[4,8,8]{2,1,0:T(8,128)}', space=vmem, size = 0x4000, scoped, tag = 'scratch operand']
  %s0 = inlined_call_operand.vmem [shape: bf16[3,2,8,4,8], index: 0, kind: input, shape index: {}, may-alias: {0,1,2}]
  %s1 = inlined_call_operand.vmem [shape: bf16[3,2,8,4,8], index: 1, kind: input, shape index: {}, may-alias: {0,1,2}]
  %s2 = inlined_call_operand.vmem [shape: bf16[3,2,8,4,8], index: 2, kind: input, shape index: {}, may-alias: {0,1,2}]
  %s3 = inlined_call_operand.vmem [shape: f32[8,4], index: 3, kind: input, shape index: {}, may-alias: {3,4}]
  %s4 = inlined_call_operand.vmem [shape: f32[8,4], index: 4, kind: input, shape index: {}, may-alias: {3,4}]
  %s5 = inlined_call_operand.vmem [shape: f32[8,4], index: 5, kind: input, shape index: {}, may-alias: {5,6}]
  %s6 = inlined_call_operand.vmem [shape: f32[8,4], index: 6, kind: input, shape index: {}, may-alias: {5,6}]
  %s7 = inlined_call_operand.vmem [shape: bf16[2,8,4,8], index: 7, kind: output, shape index: {}]
  %s8 = sld [smem:[#allocation0]]
  $region69: #{_lambda_.6} parent=0
    _
  %s10 = ssub.s32 1, %s8
  %s11 = scalar_select 0, %s10, %s8
  loop: start=0, step=1, limit=4
  $region2: #{_lambda_.6} parent=0 // loop_pre_header
    _
  $region3: #{_lambda_.6} parent=0 // loop_header
    %s13 = sphi 0, %s17
    %p14 = scmp.ge.s32.totalorder %s13, 4
    %s20 = sphi 0, %s39
    %s21 = sphi 0, %s35
    %s22 = sphi 0, %s31
    %s23 = sphi 0, %s20
    %s24 = sphi 0, %s21
    %s25 = sphi 0, %s22
    %s26 = sphi 0, %s23
    %s27 = sphi 0, %s24
    %s28 = sphi 0, %s25
    %s44 = sphi 0, %s46
    %s47 = sphi 0, %s44
    %s48 = sphi 0, %s47
    %s64 = sphi 0, %s48
    %s72 = sphi 0, %s74
    %s75 = sphi 0, %s72
    %s76 = sphi 0, %s75
    %s92 = sphi 0, %s76
    %s100 = sphi 0, %s102
    %s103 = sphi 0, %s100
    %s104 = sphi 0, %s103
    %s120 = sphi 0, %s104
    %s126 = sphi 0, %s128
    %s129 = sphi 0, %s126
    %s130 = sphi 0, %s129
    %s146 = sphi 0, %s130
    %s152 = sphi 0, %s154
    %s155 = sphi 0, %s152
    %s156 = sphi 0, %s155
    %s172 = sphi 0, %s156
    %s178 = sphi 0, %s180
    %s181 = sphi 0, %s178
    %s182 = sphi 0, %s181
    %s198 = sphi 0, %s182
    %s204 = sphi 0, %s206
    %s207 = sphi 0, %s204
    %s208 = sphi 0, %s207
    %s224 = sphi 0, %s208
    %s232 = sphi 0, %s234
    %s235 = sphi 0, %s232
    %s236 = sphi 0, %s235
    %s252 = sphi 0, %s236
  $region4: #{_lambda_.6} parent=0 // loop_header_branch
    %16 = sbr.rel (%p14) target = $region8
  $region5: #{_lambda_.6} parent=0 // loop_body
    %s18 = ssub.s32 %s13, 1
    %s19 = ssub.s32 %s13, 2
    %s29 = sadd.s32 1, %s22
    %p30 = scmp.ge.s32.totalorder %s29, 1
    %s31 = scalar_select %p30, 0, %s29
    %s32 = sadd.s32 1, %s21
    %s33 = scalar_select %p30, %s32, %s21
    %p34 = scmp.ge.s32.totalorder %s33, 1
    %s35 = scalar_select %p34, 0, %s33
    %s36 = sadd.s32 1, %s20
    %s37 = scalar_select %p34, %s36, %s20
    %p38 = scmp.ge.s32.totalorder %s37, 2
    %s39 = scalar_select %p38, 0, %s37
    %s40 = ssub.s32 %s20, %s39
    %s41 = ssub.s32 %s21, %s35
    %s42 = sor.u32 %s40, %s41
    %p43 = scmp.eq.s32.totalorder %s42, 0
    %s45 = sadd.s32 %s44, 1
    %s46 = scalar_select %p43, %s44, %s45
    %p49 = pneg %p43
    %p50 = scmp.eq.s32.totalorder %s13, 1
    %p51 = por %p49, %p50
    %p52 = scmp.ne.s32.totalorder %s44, %s47
    %p53 = scmp.eq.s32.totalorder %s13, 0
    %p54 = por %p52, %p53
    %p55 = scmp.ne.s32.totalorder %s44, %s47
    %p56 = scmp.eq.s32.totalorder %s18, 1
    %p57 = por %p55, %p56
    %p58 = scmp.ne.s32.totalorder %s47, %s48
    %p59 = scmp.eq.s32.totalorder %s18, 0
    %p60 = por %p58, %p59
    %p61 = scmp.ne.s32.totalorder %s47, %s48
    %p62 = scmp.eq.s32.totalorder %s19, 1
    %p63 = por %p61, %p62
    %p65 = scmp.ne.s32.totalorder %s48, %s64
    %p66 = scmp.eq.s32.totalorder %s19, 0
    %p67 = por %p65, %p66
    %s68 = ssub.s32 %s20, %s39
    %s69 = ssub.s32 %s22, %s31
    %s70 = sor.u32 %s68, %s69
    %p71 = scmp.eq.s32.totalorder %s70, 0
    %s73 = sadd.s32 %s72, 1
    %s74 = scalar_select %p71, %s72, %s73
    %p77 = pneg %p71
    %p78 = scmp.eq.s32.totalorder %s13, 1
    %p79 = por %p77, %p78
    %p80 = scmp.ne.s32.totalorder %s72, %s75
    %p81 = scmp.eq.s32.totalorder %s13, 0
    %p82 = por %p80, %p81
    %p83 = scmp.ne.s32.totalorder %s72, %s75
    %p84 = scmp.eq.s32.totalorder %s18, 1
    %p85 = por %p83, %p84
    %p86 = scmp.ne.s32.totalorder %s75, %s76
    %p87 = scmp.eq.s32.totalorder %s18, 0
    %p88 = por %p86, %p87
    %p89 = scmp.ne.s32.totalorder %s75, %s76
    %p90 = scmp.eq.s32.totalorder %s19, 1
    %p91 = por %p89, %p90
    %p93 = scmp.ne.s32.totalorder %s76, %s92
    %p94 = scmp.eq.s32.totalorder %s19, 0
    %p95 = por %p93, %p94
    %s96 = ssub.s32 %s20, %s39
    %s97 = ssub.s32 %s22, %s31
    %s98 = sor.u32 %s96, %s97
    %p99 = scmp.eq.s32.totalorder %s98, 0
    %s101 = sadd.s32 %s100, 1
    %s102 = scalar_select %p99, %s100, %s101
    %p105 = pneg %p99
    %p106 = scmp.eq.s32.totalorder %s13, 1
    %p107 = por %p105, %p106
    %p108 = scmp.ne.s32.totalorder %s100, %s103
    %p109 = scmp.eq.s32.totalorder %s13, 0
    %p110 = por %p108, %p109
    %p111 = scmp.ne.s32.totalorder %s100, %s103
    %p112 = scmp.eq.s32.totalorder %s18, 1
    %p113 = por %p111, %p112
    %p114 = scmp.ne.s32.totalorder %s103, %s104
    %p115 = scmp.eq.s32.totalorder %s18, 0
    %p116 = por %p114, %p115
    %p117 = scmp.ne.s32.totalorder %s103, %s104
    %p118 = scmp.eq.s32.totalorder %s19, 1
    %p119 = por %p117, %p118
    %p121 = scmp.ne.s32.totalorder %s104, %s120
    %p122 = scmp.eq.s32.totalorder %s19, 0
    %p123 = por %p121, %p122
    %s124 = ssub.s32 %s21, %s35
    %p125 = scmp.eq.s32.totalorder %s124, 0
    %s127 = sadd.s32 %s126, 1
    %s128 = scalar_select %p125, %s126, %s127
    %p131 = pneg %p125
    %p132 = scmp.eq.s32.totalorder %s13, 1
    %p133 = por %p131, %p132
    %p134 = scmp.ne.s32.totalorder %s126, %s129
    %p135 = scmp.eq.s32.totalorder %s13, 0
    %p136 = por %p134, %p135
    %p137 = scmp.ne.s32.totalorder %s126, %s129
    %p138 = scmp.eq.s32.totalorder %s18, 1
    %p139 = por %p137, %p138
    %p140 = scmp.ne.s32.totalorder %s129, %s130
    %p141 = scmp.eq.s32.totalorder %s18, 0
    %p142 = por %p140, %p141
    %p143 = scmp.ne.s32.totalorder %s129, %s130
    %p144 = scmp.eq.s32.totalorder %s19, 1
    %p145 = por %p143, %p144
    %p147 = scmp.ne.s32.totalorder %s130, %s146
    %p148 = scmp.eq.s32.totalorder %s19, 0
    %p149 = por %p147, %p148
    %s150 = ssub.s32 %s22, %s31
    %p151 = scmp.eq.s32.totalorder %s150, 0
    %s153 = sadd.s32 %s152, 1
    %s154 = scalar_select %p151, %s152, %s153
    %p157 = pneg %p151
    %p158 = scmp.eq.s32.totalorder %s13, 1
    %p159 = por %p157, %p158
    %p160 = scmp.ne.s32.totalorder %s152, %s155
    %p161 = scmp.eq.s32.totalorder %s13, 0
    %p162 = por %p160, %p161
    %p163 = scmp.ne.s32.totalorder %s152, %s155
    %p164 = scmp.eq.s32.totalorder %s18, 1
    %p165 = por %p163, %p164
    %p166 = scmp.ne.s32.totalorder %s155, %s156
    %p167 = scmp.eq.s32.totalorder %s18, 0
    %p168 = por %p166, %p167
    %p169 = scmp.ne.s32.totalorder %s155, %s156
    %p170 = scmp.eq.s32.totalorder %s19, 1
    %p171 = por %p169, %p170
    %p173 = scmp.ne.s32.totalorder %s156, %s172
    %p174 = scmp.eq.s32.totalorder %s19, 0
    %p175 = por %p173, %p174
    %s176 = ssub.s32 %s21, %s35
    %p177 = scmp.eq.s32.totalorder %s176, 0
    %s179 = sadd.s32 %s178, 1
    %s180 = scalar_select %p177, %s178, %s179
    %p183 = pneg %p177
    %p184 = scmp.eq.s32.totalorder %s13, 1
    %p185 = por %p183, %p184
    %p186 = scmp.ne.s32.totalorder %s178, %s181
    %p187 = scmp.eq.s32.totalorder %s13, 0
    %p188 = por %p186, %p187
    %p189 = scmp.ne.s32.totalorder %s178, %s181
    %p190 = scmp.eq.s32.totalorder %s18, 1
    %p191 = por %p189, %p190
    %p192 = scmp.ne.s32.totalorder %s181, %s182
    %p193 = scmp.eq.s32.totalorder %s18, 0
    %p194 = por %p192, %p193
    %p195 = scmp.ne.s32.totalorder %s181, %s182
    %p196 = scmp.eq.s32.totalorder %s19, 1
    %p197 = por %p195, %p196
    %p199 = scmp.ne.s32.totalorder %s182, %s198
    %p200 = scmp.eq.s32.totalorder %s19, 0
    %p201 = por %p199, %p200
    %s202 = ssub.s32 %s22, %s31
    %p203 = scmp.eq.s32.totalorder %s202, 0
    %s205 = sadd.s32 %s204, 1
    %s206 = scalar_select %p203, %s204, %s205
    %p209 = pneg %p203
    %p210 = scmp.eq.s32.totalorder %s13, 1
    %p211 = por %p209, %p210
    %p212 = scmp.ne.s32.totalorder %s204, %s207
    %p213 = scmp.eq.s32.totalorder %s13, 0
    %p214 = por %p212, %p213
    %p215 = scmp.ne.s32.totalorder %s204, %s207
    %p216 = scmp.eq.s32.totalorder %s18, 1
    %p217 = por %p215, %p216
    %p218 = scmp.ne.s32.totalorder %s207, %s208
    %p219 = scmp.eq.s32.totalorder %s18, 0
    %p220 = por %p218, %p219
    %p221 = scmp.ne.s32.totalorder %s207, %s208
    %p222 = scmp.eq.s32.totalorder %s19, 1
    %p223 = por %p221, %p222
    %p225 = scmp.ne.s32.totalorder %s208, %s224
    %p226 = scmp.eq.s32.totalorder %s19, 0
    %p227 = por %p225, %p226
    %s228 = ssub.s32 %s20, %s39
    %s229 = ssub.s32 %s21, %s35
    %s230 = sor.u32 %s228, %s229
    %p231 = scmp.eq.s32.totalorder %s230, 0
    %s233 = sadd.s32 %s232, 1
    %s234 = scalar_select %p231, %s232, %s233
    %p237 = pneg %p231
    %p238 = scmp.eq.s32.totalorder %s13, 1
    %p239 = por %p237, %p238
    %p240 = scmp.ne.s32.totalorder %s232, %s235
    %p241 = scmp.eq.s32.totalorder %s13, 0
    %p242 = por %p240, %p241
    %p243 = scmp.ne.s32.totalorder %s232, %s235
    %p244 = scmp.eq.s32.totalorder %s18, 1
    %p245 = por %p243, %p244
    %p246 = scmp.ne.s32.totalorder %s235, %s236
    %p247 = scmp.eq.s32.totalorder %s18, 0
    %p248 = por %p246, %p247
    %p249 = scmp.ne.s32.totalorder %s235, %s236
    %p250 = scmp.eq.s32.totalorder %s19, 1
    %p251 = por %p249, %p250
    %p253 = scmp.ne.s32.totalorder %s236, %s252
    %p254 = scmp.eq.s32.totalorder %s19, 0
    %p255 = por %p253, %p254
    %p256 = scmp.le.s32.totalorder 1, %s13
    %p257 = scmp.lt.s32.totalorder %s13, 3
    %p258 = pnand %p256, %p257
    %p259 = pneg %p258
    // Predicated region
    $region9: #{_lambda_.6} parent=5 // pred_check
      _
    $region10: #{_lambda_.6} parent=5 // pred_check_branch
      %261 = sbr.rel (%p258) target = $region12
    $region11: #{_lambda_.6} parent=5 // pred_region
      %s262 = ssub.s32 %s13, 1
      // Predicated region
      $region13: #{_lambda_.6} parent=11 // pred_check
        %p263 = pneg %p142
      $region14: #{_lambda_.6} parent=11 // pred_check_branch
        %265 = sbr.rel (%p263) target = $region16
      $region15: #{_lambda_.6} parent=11 // pred_region
        %p266 = scmp.lt.s32.totalorder %s24, 0
        %s267 = scalar_select %p266, %s24, 0
        %s268 = smul.addr %s267, 8
        %s269 = scalar_lea.vmem %s3, %s268
      $region16: #{_lambda_.6} parent=11 // pred_fallthru
        _
      // Predicated region
      $region17: #{_lambda_.6} parent=11 // pred_check
        %p270 = pneg %p168
      $region18: #{_lambda_.6} parent=11 // pred_check_branch
        %272 = sbr.rel (%p270) target = $region20
      $region19: #{_lambda_.6} parent=11 // pred_region
        %p273 = scmp.lt.s32.totalorder %s25, 0
        %s274 = scalar_select %p273, %s25, 0
        %s275 = smul.addr %s274, 8
        %s276 = scalar_lea.vmem %s4, %s275
      $region20: #{_lambda_.6} parent=11 // pred_fallthru
        _
      // Predicated region
      $region21: #{_lambda_.6} parent=11 // pred_check
        %p277 = pneg %p194
      $region22: #{_lambda_.6} parent=11 // pred_check_branch
        %279 = sbr.rel (%p277) target = $region24
      $region23: #{_lambda_.6} parent=11 // pred_region
        %p280 = scmp.lt.s32.totalorder %s24, 0
        %s281 = scalar_select %p280, %s24, 0
        %s282 = smul.addr %s281, 8
        %s283 = scalar_lea.vmem %s5, %s282
      $region24: #{_lambda_.6} parent=11 // pred_fallthru
        _
      // Predicated region
      $region25: #{_lambda_.6} parent=11 // pred_check
        %p284 = pneg %p220
      $region26: #{_lambda_.6} parent=11 // pred_check_branch
        %286 = sbr.rel (%p284) target = $region28
      $region27: #{_lambda_.6} parent=11 // pred_region
        %p287 = scmp.lt.s32.totalorder %s25, 0
        %s288 = scalar_select %p287, %s25, 0
        %s289 = smul.addr %s288, 8
        %s290 = scalar_lea.vmem %s6, %s289
      $region28: #{_lambda_.6} parent=11 // pred_fallthru
        _
    $region12: #{_lambda_.6} parent=5 // pred_fallthru
      _
    %p291 = scmp.lt.s32.totalorder %s13, 2
    // Predicated region
    $region29: #{_lambda_.6} parent=5 // pred_check
      %p292 = pneg %p291
    $region30: #{_lambda_.6} parent=5 // pred_check_branch
      %294 = sbr.rel (%p292) target = $region32
    $region31: #{_lambda_.6} parent=5 // pred_region
      // Predicated region
      $region33: #{_lambda_.6} parent=31 // pred_check
        %p295 = pneg %p54
      $region34: #{_lambda_.6} parent=31 // pred_check_branch
        %297 = sbr.rel (%p295) target = $region36
      $region35: #{_lambda_.6} parent=31 // pred_region
        %s298 = smul.u32 8, %s21
        %p299 = scmp.lt.s32.totalorder %s20, 1
        %s300 = scalar_select %p299, %s20, 1
        %p301 = scmp.lt.s32.totalorder %s298, 7
        %s302 = scalar_select %p301, %s298, 7
        %s303 = smul.addr %s300, 8
        %s304 = sadd.s32 %s302, %s303
        %s305 = smul.addr %s304, 2
        %s306 = scalar_lea.vmem %s0, %s305
        %s307 = smul.u32 8, %s21
      $region36: #{_lambda_.6} parent=31 // pred_fallthru
        _
      // Predicated region
      $region37: #{_lambda_.6} parent=31 // pred_check
        %p308 = pneg %p82
      $region38: #{_lambda_.6} parent=31 // pred_check_branch
        %310 = sbr.rel (%p308) target = $region40
      $region39: #{_lambda_.6} parent=31 // pred_region
        %s311 = smul.u32 8, %s22
        %p312 = scmp.lt.s32.totalorder %s20, 1
        %s313 = scalar_select %p312, %s20, 1
        %p314 = scmp.lt.s32.totalorder %s311, 7
        %s315 = scalar_select %p314, %s311, 7
        %s316 = smul.addr %s313, 8
        %s317 = sadd.s32 %s315, %s316
        %s318 = sadd.s32 %s317, 16
        %s319 = smul.addr %s318, 2
        %s320 = scalar_lea.vmem %s1, %s319
        %s321 = smul.u32 8, %s22
      $region40: #{_lambda_.6} parent=31 // pred_fallthru
        _
      // Predicated region
      $region41: #{_lambda_.6} parent=31 // pred_check
        %p322 = pneg %p110
      $region42: #{_lambda_.6} parent=31 // pred_check_branch
        %324 = sbr.rel (%p322) target = $region44
      $region43: #{_lambda_.6} parent=31 // pred_region
        %s325 = smul.u32 8, %s22
        %p326 = scmp.lt.s32.totalorder %s20, 1
        %s327 = scalar_select %p326, %s20, 1
        %p328 = scmp.lt.s32.totalorder %s325, 7
        %s329 = scalar_select %p328, %s325, 7
        %s330 = smul.addr %s327, 8
        %s331 = sadd.s32 %s329, %s330
        %s332 = sadd.s32 %s331, 32
        %s333 = smul.addr %s332, 2
        %s334 = scalar_lea.vmem %s2, %s333
        %s335 = smul.u32 8, %s22
      $region44: #{_lambda_.6} parent=31 // pred_fallthru
        _
    $region32: #{_lambda_.6} parent=5 // pred_fallthru
      _
    %p336 = scmp.le.s32.totalorder 1, %s13
    %p337 = scmp.lt.s32.totalorder %s13, 3
    %p338 = pnand %p336, %p337
    %p339 = pneg %p338
    // Predicated region
    $region45: #{_lambda_.6} parent=5 // pred_check
      _
    $region46: #{_lambda_.6} parent=5 // pred_check_branch
      %341 = sbr.rel (%p338) target = $region48
    $region47: #{_lambda_.6} parent=5 // pred_region
      %s342 = ssub.s32 %s13, 1
      %s343 = smul.u32 8, %s24
      %p344 = scmp.lt.s32.totalorder %s23, 1
      %s345 = scalar_select %p344, %s23, 1
      %p346 = scmp.lt.s32.totalorder %s343, 7
      %s347 = scalar_select %p346, %s343, 7
      %s348 = smul.addr %s345, 8
      %s349 = sadd.s32 %s347, %s348
      %s350 = smul.addr %s349, 2
      %s351 = scalar_lea.vmem %s0, %s350
      %p352 = pneg %p60
      %p353 = pneg %p57
      %s354 = smul.u32 8, %s25
      %p355 = scmp.lt.s32.totalorder %s23, 1
      %s356 = scalar_select %p355, %s23, 1
      %p357 = scmp.lt.s32.totalorder %s354, 7
      %s358 = scalar_select %p357, %s354, 7
      %s359 = smul.addr %s356, 8
      %s360 = sadd.s32 %s358, %s359
      %s361 = sadd.s32 %s360, 16
      %s362 = smul.addr %s361, 2
      %s363 = scalar_lea.vmem %s1, %s362
      %p364 = pneg %p88
      %p365 = pneg %p85
      %s366 = smul.u32 8, %s25
      %p367 = scmp.lt.s32.totalorder %s23, 1
      %s368 = scalar_select %p367, %s23, 1
      %p369 = scmp.lt.s32.totalorder %s366, 7
      %s370 = scalar_select %p369, %s366, 7
      %s371 = smul.addr %s368, 8
      %s372 = sadd.s32 %s370, %s371
      %s373 = sadd.s32 %s372, 32
      %s374 = smul.addr %s373, 2
      %s375 = scalar_lea.vmem %s2, %s374
      %p376 = pneg %p116
      %p377 = pneg %p113
      %p378 = scmp.lt.s32.totalorder %s24, 0
      %s379 = scalar_select %p378, %s24, 0
      %s380 = smul.addr %s379, 8
      %s381 = scalar_lea.vmem %s3, %s380
      %p382 = pneg %p142
      %p383 = pneg %p139
      %p384 = scmp.lt.s32.totalorder %s25, 0
      %s385 = scalar_select %p384, %s25, 0
      %s386 = smul.addr %s385, 8
      %s387 = scalar_lea.vmem %s4, %s386
      %p388 = pneg %p168
      %p389 = pneg %p165
      %p390 = scmp.lt.s32.totalorder %s24, 0
      %s391 = scalar_select %p390, %s24, 0
      %s392 = smul.addr %s391, 8
      %s393 = scalar_lea.vmem %s5, %s392
      %p394 = pneg %p194
      %p395 = pneg %p191
      %p396 = scmp.lt.s32.totalorder %s25, 0
      %s397 = scalar_select %p396, %s25, 0
      %s398 = smul.addr %s397, 8
      %s399 = scalar_lea.vmem %s6, %s398
      %p400 = pneg %p220
      %p401 = pneg %p217
      %p402 = pneg %p248
      %p403 = pneg %p245
      %s404 = smul.u32 8, %s24
      %p405 = scmp.lt.s32.totalorder %s23, 1
      %s406 = scalar_select %p405, %s23, 1
      %p407 = scmp.lt.s32.totalorder %s404, 7
      %s408 = scalar_select %p407, %s404, 7
      %s409 = smul.addr %s406, 8
      %s410 = sadd.s32 %s408, %s409
      %s411 = smul.addr %s410, 2
      %s412 = scalar_lea.vmem %s7, %s411
      %s413 = smul.u32 8, %s24
      %p414 = scmp.lt.s32.totalorder %s23, 1
      %s415 = scalar_select %p414, %s23, 1
      %p416 = scmp.lt.s32.totalorder %s413, 7
      %s417 = scalar_select %p416, %s413, 7
      %s418 = smul.addr %s415, 8
      %s419 = sadd.s32 %s417, %s418
      %s420 = smul.addr %s419, 2
      %s421 = scalar_lea.vmem %s0, %s420
      %s422 = smul.u32 8, %s24
      %s423 = smul.u32 8, %s25
      %p424 = scmp.lt.s32.totalorder %s23, 1
      %s425 = scalar_select %p424, %s23, 1
      %p426 = scmp.lt.s32.totalorder %s423, 7
      %s427 = scalar_select %p426, %s423, 7
      %s428 = smul.addr %s425, 8
      %s429 = sadd.s32 %s427, %s428
      %s430 = sadd.s32 %s429, 16
      %s431 = smul.addr %s430, 2
      %s432 = scalar_lea.vmem %s1, %s431
      %s433 = smul.u32 8, %s25
      %s434 = smul.u32 8, %s25
      %p435 = scmp.lt.s32.totalorder %s23, 1
      %s436 = scalar_select %p435, %s23, 1
      %p437 = scmp.lt.s32.totalorder %s434, 7
      %s438 = scalar_select %p437, %s434, 7
      %s439 = smul.addr %s436, 8
      %s440 = sadd.s32 %s438, %s439
      %s441 = sadd.s32 %s440, 32
      %s442 = smul.addr %s441, 2
      %s443 = scalar_lea.vmem %s2, %s442
      %s444 = smul.u32 8, %s25
      %p445 = scmp.lt.s32.totalorder %s24, 0
      %s446 = scalar_select %p445, %s24, 0
      %s447 = smul.addr %s446, 8
      %s448 = scalar_lea.vmem %s3, %s447
      %p449 = scmp.lt.s32.totalorder %s25, 0
      %s450 = scalar_select %p449, %s25, 0
      %s451 = smul.addr %s450, 8
      %s452 = scalar_lea.vmem %s4, %s451
      %p453 = scmp.lt.s32.totalorder %s24, 0
      %s454 = scalar_select %p453, %s24, 0
      %s455 = smul.addr %s454, 8
      %s456 = scalar_lea.vmem %s5, %s455
      %p457 = scmp.lt.s32.totalorder %s25, 0
      %s458 = scalar_select %p457, %s25, 0
      %s459 = smul.addr %s458, 8
      %s460 = scalar_lea.vmem %s6, %s459
      %s461 = smul.u32 8, %s24
      %p462 = scmp.lt.s32.totalorder %s23, 1
      %s463 = scalar_select %p462, %s23, 1
      %p464 = scmp.lt.s32.totalorder %s461, 7
      %s465 = scalar_select %p464, %s461, 7
      %s466 = smul.addr %s463, 8
      %s467 = sadd.s32 %s465, %s466
      %s468 = smul.addr %s467, 2
      %s469 = scalar_lea.vmem %s7, %s468
      %s470 = smul.u32 8, %s24
      %p472 = scmp.eq.s32.totalorder %s25, 0
      // Predicated region
      $region49: #{_lambda_.6} parent=47 // pred_check
        %p473 = pneg %p472
      $region50: #{_lambda_.6} parent=47 // pred_check_branch
        %475 = sbr.rel (%p473) target = $region52
      $region51: #{_lambda_.6} parent=47 // pred_region
        %vm476 = vcmask 7168
        %477 = vst.msk [vmem:[#allocation2] sm:$0xff] %vm476, -inf
        %478 = vst.msk [vmem:[#allocation2 + $0x8] sm:$0xff] %vm476, -inf
        %479 = vst.msk [vmem:[#allocation2 + $0x10] sm:$0xff] %vm476, -inf
        %480 = vst.msk [vmem:[#allocation2 + $0x18] sm:$0xff] %vm476, -inf
        %481 = vst.msk [vmem:[#allocation3] sm:$0xff] %vm476, 0.0
        %482 = vst.msk [vmem:[#allocation3 + $0x8] sm:$0xff] %vm476, 0.0
        %483 = vst.msk [vmem:[#allocation3 + $0x10] sm:$0xff] %vm476, 0.0
        %484 = vst.msk [vmem:[#allocation3 + $0x18] sm:$0xff] %vm476, 0.0
        %vm485 = vcmask 64512
        %486 = vst.msk [vmem:[#allocation4] sm:$0xff] %vm485, 0.0
        %487 = vst.msk [vmem:[#allocation4 + $0x8] sm:$0xff] %vm485, 0.0
        %488 = vst.msk [vmem:[#allocation4 + $0x10] sm:$0xff] %vm485, 0.0
        %489 = vst.msk [vmem:[#allocation4 + $0x18] sm:$0xff] %vm485, 0.0
      $region52: #{_lambda_.6} parent=47 // pred_fallthru
        _
      %v490 = vld [vmem:[%s421] sm:$0x3]
      %v491 = vld [vmem:[%s421 + $0x2] sm:$0x3]
      %v492 = vld [vmem:[%s421 + $0x4] sm:$0x3]
      %v493 = vld [vmem:[%s421 + $0x6] sm:$0x3]
      %v494 = vld [vmem:[%s421 + $0x8] sm:$0x3]
      %v495 = vld [vmem:[%s421 + $0xa] sm:$0x3]
      %v496 = vld [vmem:[%s421 + $0xc] sm:$0x3]
      %v497 = vld [vmem:[%s421 + $0xe] sm:$0x3]
      %v498 = vunpack.c.l.bf16 %v490
      %v499 = vunpack.c.l.bf16 %v491
      %v500 = vunpack.c.l.bf16 %v492
      %v501 = vunpack.c.l.bf16 %v493
      %v502 = vunpack.c.l.bf16 %v494
      %v503 = vunpack.c.l.bf16 %v495
      %v504 = vunpack.c.l.bf16 %v496
      %v505 = vunpack.c.l.bf16 %v497
      %v506 = vcombine.low %v498, %v500
      %v508 = vunpack.c.l.s4 1983009808
      %v509 = vunpack.c.0.s8 %v508
      %v510 = vlaneseq
      %v511 = vshrl.u32 %v510, 7
      %v512 = vsub.s32 %v509, %v511
      %v513 = vrot.slane %v506, %v512
      %v514 = vcombine.low %v499, %v501
      %v516 = vunpack.c.l.s4 1983009808
      %v517 = vunpack.c.0.s8 %v516
      %v518 = vlaneseq
      %v519 = vshrl.u32 %v518, 7
      %v520 = vsub.s32 %v517, %v519
      %v521 = vrot.slane %v514, %v520
      %v522 = vcombine.low %v513, %v521
      %v523 = vcombine.high %v513, %v521
      %v525 = vunpack.c.l.s4 1934713408
      %v526 = vunpack.c.0.s8 %v525
      %v527 = vlaneseq
      %v528 = vshrl.u32 %v527, 7
      %v529 = vsub.s32 %v526, %v528
      %v530 = vrot.slane %v522, %v529
      %v532 = vunpack.c.l.s4 1934713408
      %v533 = vunpack.c.0.s8 %v532
      %v534 = vlaneseq
      %v535 = vshrl.u32 %v534, 7
      %v536 = vsub.s32 %v533, %v535
      %v537 = vrot.slane %v523, %v536
      %v538 = vcombine.high %v530, 0.0
      %v539 = vcombine.high %v537, 0.0
      %v540 = vcombine.low %v502, %v504
      %v542 = vunpack.c.l.s4 1983009808
      %v543 = vunpack.c.0.s8 %v542
      %v544 = vlaneseq
      %v545 = vshrl.u32 %v544, 7
      %v546 = vsub.s32 %v543, %v545
      %v547 = vrot.slane %v540, %v546
      %v548 = vcombine.low %v503, %v505
      %v550 = vunpack.c.l.s4 1983009808
      %v551 = vunpack.c.0.s8 %v550
      %v552 = vlaneseq
      %v553 = vshrl.u32 %v552, 7
      %v554 = vsub.s32 %v551, %v553
      %v555 = vrot.slane %v548, %v554
      %v556 = vcombine.low %v547, %v555
      %v557 = vcombine.high %v547, %v555
      %v559 = vunpack.c.l.s4 1934713408
      %v560 = vunpack.c.0.s8 %v559
      %v561 = vlaneseq
      %v562 = vshrl.u32 %v561, 7
      %v563 = vsub.s32 %v560, %v562
      %v564 = vrot.slane %v556, %v563
      %v566 = vunpack.c.l.s4 1934713408
      %v567 = vunpack.c.0.s8 %v566
      %v568 = vlaneseq
      %v569 = vshrl.u32 %v568, 7
      %v570 = vsub.s32 %v567, %v569
      %v571 = vrot.slane %v557, %v570
      %v572 = vcombine.high %v564, 0.0
      %v573 = vcombine.high %v571, 0.0
      %v574 = vld [vmem:[%s432] sm:$0x3]
      %v575 = vld [vmem:[%s432 + $0x2] sm:$0x3]
      %v576 = vld [vmem:[%s432 + $0x4] sm:$0x3]
      %v577 = vld [vmem:[%s432 + $0x6] sm:$0x3]
      %v578 = vld [vmem:[%s432 + $0x8] sm:$0x3]
      %v579 = vld [vmem:[%s432 + $0xa] sm:$0x3]
      %v580 = vld [vmem:[%s432 + $0xc] sm:$0x3]
      %v581 = vld [vmem:[%s432 + $0xe] sm:$0x3]
      %v582 = vunpack.c.l.bf16 %v574
      %v583 = vunpack.c.l.bf16 %v575
      %v584 = vunpack.c.l.bf16 %v576
      %v585 = vunpack.c.l.bf16 %v577
      %v586 = vunpack.c.l.bf16 %v578
      %v587 = vunpack.c.l.bf16 %v579
      %v588 = vunpack.c.l.bf16 %v580
      %v589 = vunpack.c.l.bf16 %v581
      %v590 = vcombine.low %v582, %v584
      %v592 = vunpack.c.l.s4 1983009808
      %v593 = vunpack.c.0.s8 %v592
      %v594 = vlaneseq
      %v595 = vshrl.u32 %v594, 7
      %v596 = vsub.s32 %v593, %v595
      %v597 = vrot.slane %v590, %v596
      %v598 = vcombine.low %v583, %v585
      %v600 = vunpack.c.l.s4 1983009808
      %v601 = vunpack.c.0.s8 %v600
      %v602 = vlaneseq
      %v603 = vshrl.u32 %v602, 7
      %v604 = vsub.s32 %v601, %v603
      %v605 = vrot.slane %v598, %v604
      %v606 = vcombine.low %v597, %v605
      %v607 = vcombine.high %v597, %v605
      %v609 = vunpack.c.l.s4 1934713408
      %v610 = vunpack.c.0.s8 %v609
      %v611 = vlaneseq
      %v612 = vshrl.u32 %v611, 7
      %v613 = vsub.s32 %v610, %v612
      %v614 = vrot.slane %v606, %v613
      %v616 = vunpack.c.l.s4 1934713408
      %v617 = vunpack.c.0.s8 %v616
      %v618 = vlaneseq
      %v619 = vshrl.u32 %v618, 7
      %v620 = vsub.s32 %v617, %v619
      %v621 = vrot.slane %v607, %v620
      %v622 = vcombine.high %v614, 0.0
      %v623 = vcombine.high %v621, 0.0
      %v624 = vcombine.low %v586, %v588
      %v626 = vunpack.c.l.s4 1983009808
      %v627 = vunpack.c.0.s8 %v626
      %v628 = vlaneseq
      %v629 = vshrl.u32 %v628, 7
      %v630 = vsub.s32 %v627, %v629
      %v631 = vrot.slane %v624, %v630
      %v632 = vcombine.low %v587, %v589
      %v634 = vunpack.c.l.s4 1983009808
      %v635 = vunpack.c.0.s8 %v634
      %v636 = vlaneseq
      %v637 = vshrl.u32 %v636, 7
      %v638 = vsub.s32 %v635, %v637
      %v639 = vrot.slane %v632, %v638
      %v640 = vcombine.low %v631, %v639
      %v641 = vcombine.high %v631, %v639
      %v643 = vunpack.c.l.s4 1934713408
      %v644 = vunpack.c.0.s8 %v643
      %v645 = vlaneseq
      %v646 = vshrl.u32 %v645, 7
      %v647 = vsub.s32 %v644, %v646
      %v648 = vrot.slane %v640, %v647
      %v650 = vunpack.c.l.s4 1934713408
      %v651 = vunpack.c.0.s8 %v650
      %v652 = vlaneseq
      %v653 = vshrl.u32 %v652, 7
      %v654 = vsub.s32 %v651, %v653
      %v655 = vrot.slane %v641, %v654
      %v656 = vcombine.high %v648, 0.0
      %v657 = vcombine.high %v655, 0.0
      %v658 = vld [vmem:[%s443] sm:$0x3]
      %v659 = vld [vmem:[%s443 + $0x2] sm:$0x3]
      %v660 = vld [vmem:[%s443 + $0x4] sm:$0x3]
      %v661 = vld [vmem:[%s443 + $0x6] sm:$0x3]
      %v662 = vld [vmem:[%s443 + $0x8] sm:$0x3]
      %v663 = vld [vmem:[%s443 + $0xa] sm:$0x3]
      %v664 = vld [vmem:[%s443 + $0xc] sm:$0x3]
      %v665 = vld [vmem:[%s443 + $0xe] sm:$0x3]
      %v666 = vcombine.low %v658, %v660
      %v668 = vunpack.c.l.s4 1934713408
      %v669 = vunpack.c.0.s8 %v668
      %v670 = vlaneseq
      %v671 = vshrl.u32 %v670, 7
      %v672 = vsub.s32 %v669, %v671
      %v673 = vrot.slane %v666, %v672
      %v674 = vcombine.high %v673, 0
      %v675 = vcombine.low %v659, %v661
      %v677 = vunpack.c.l.s4 1934713408
      %v678 = vunpack.c.0.s8 %v677
      %v679 = vlaneseq
      %v680 = vshrl.u32 %v679, 7
      %v681 = vsub.s32 %v678, %v680
      %v682 = vrot.slane %v675, %v681
      %v683 = vcombine.high %v682, 0
      %v684 = vcombine.low %v662, %v664
      %v686 = vunpack.c.l.s4 1934713408
      %v687 = vunpack.c.0.s8 %v686
      %v688 = vlaneseq
      %v689 = vshrl.u32 %v688, 7
      %v690 = vsub.s32 %v687, %v689
      %v691 = vrot.slane %v684, %v690
      %v692 = vcombine.high %v691, 0
      %v693 = vcombine.low %v663, %v665
      %v695 = vunpack.c.l.s4 1934713408
      %v696 = vunpack.c.0.s8 %v695
      %v697 = vlaneseq
      %v698 = vshrl.u32 %v697, 7
      %v699 = vsub.s32 %v696, %v698
      %v700 = vrot.slane %v693, %v699
      %v701 = vcombine.high %v700, 0
      %v704 = vpack.i.b16 %v682, %v673
      %v705 = vshrl.u32 %v673, 16
      %v706 = vshrl.u32 %v682, 16
      %v707 = vpack.i.b16 %v706, %v705
      %v710 = vpack.i.b16 %v683, %v674
      %v711 = vshrl.u32 %v674, 16
      %v712 = vshrl.u32 %v683, 16
      %v713 = vpack.i.b16 %v712, %v711
      %v716 = vpack.i.b16 %v700, %v691
      %v717 = vshrl.u32 %v691, 16
      %v718 = vshrl.u32 %v700, 16
      %v719 = vpack.i.b16 %v718, %v717
      %v722 = vpack.i.b16 %v701, %v692
      %v723 = vshrl.u32 %v692, 16
      %v724 = vshrl.u32 %v701, 16
      %v725 = vpack.i.b16 %v724, %v723
      %v726 = vld [vmem:[%s448] sm:$0xff]
      %v727 = vld [vmem:[%s456] sm:$0xff]
      %v728 = vsub.f32 0.0, %v530
      %v729 = vsub.f32 0.0, %v564
      %v730 = vsub.f32 0.0, %v538
      %v731 = vsub.f32 0.0, %v572
      %v732 = vsub.f32 0.0, %v537
      %v733 = vsub.f32 0.0, %v571
      %v734 = vsub.f32 0.0, %v539
      %v735 = vsub.f32 0.0, %v573
      %v744 = vcombine.low %v728, %v729
      %v745 = vcombine.low %v730, %v731
      %v746 = vcombine.low %v732, %v733
      %v747 = vcombine.low %v734, %v735
      %748 = vrot.lane.b32.xlu0 %v744, 126
      %v749 = vpop.permute.xlu0 %748
      %750 = vrot.lane.b32.xlu0 %v745, 126
      %v751 = vpop.permute.xlu0 %750
      %752 = vrot.lane.b32.xlu0 %v746, 126
      %v753 = vpop.permute.xlu0 %752
      %754 = vrot.lane.b32.xlu0 %v747, 126
      %v755 = vpop.permute.xlu0 %754
      %v768 = vcombine.low %v530, %v564
      %v769 = vcombine.low %v538, %v572
      %v770 = vcombine.low %v537, %v571
      %v771 = vcombine.low %v539, %v573
      %772 = vrot.lane.b32.xlu0 %v768, 2
      %v773 = vpop.permute.xlu0 %772
      %774 = vrot.lane.b32.xlu0 %v769, 2
      %v775 = vpop.permute.xlu0 %774
      %776 = vrot.lane.b32.xlu0 %v770, 2
      %v777 = vpop.permute.xlu0 %776
      %778 = vrot.lane.b32.xlu0 %v771, 2
      %v779 = vpop.permute.xlu0 %778
      %vm784 = vcmask 15360
      %v785 = vsel %vm784, %v749, %v773
      %v786 = vsel %vm784, %v751, %v775
      %v787 = vsel %vm784, %v753, %v777
      %v788 = vsel %vm784, %v755, %v779
      %v790 = vcombine.high %v726, %v726
      %v792 = vmul.f32 %v530, %v726
      %v793 = vmul.f32 %v564, %v790
      %v794 = vmul.f32 %v538, %v726
      %v795 = vmul.f32 %v572, %v790
      %v796 = vmul.f32 %v537, %v726
      %v797 = vmul.f32 %v571, %v790
      %v798 = vmul.f32 %v539, %v726
      %v799 = vmul.f32 %v573, %v790
      %v800 = vmul.f32 %v785, %v727
      %v801 = vmul.f32 %v786, %v727
      %v802 = vmul.f32 %v787, %v727
      %v803 = vmul.f32 %v788, %v727
      %v808 = vcombine.high %v800, %v800
      %v809 = vcombine.high %v801, %v801
      %v810 = vcombine.high %v802, %v802
      %v811 = vcombine.high %v803, %v803
      %v816 = vadd.f32 %v792, %v800
      %v817 = vadd.f32 %v793, %v808
      %v818 = vadd.f32 %v794, %v801
      %v819 = vadd.f32 %v795, %v809
      %v820 = vadd.f32 %v796, %v802
      %v821 = vadd.f32 %v797, %v810
      %v822 = vadd.f32 %v798, %v803
      %v823 = vadd.f32 %v799, %v811
      %v832 = vcombine.low %v816, %v817
      %v833 = vcombine.low %v818, %v819
      %v834 = vcombine.low %v820, %v821
      %v835 = vcombine.low %v822, %v823
      %vm844 = vcmask 31744
      %v845 = vsel %vm844, %v832, %v768
      %v846 = vsel %vm844, %v833, %v769
      %v847 = vsel %vm844, %v834, %v770
      %v848 = vsel %vm844, %v835, %v771
      %v849 = vmul.f32 %v845, 0.35355338
      %v850 = vmul.f32 %v846, 0.35355338
      %v851 = vmul.f32 %v847, 0.35355338
      %v852 = vmul.f32 %v848, 0.35355338
      %v853 = vld [vmem:[%s452] sm:$0xff]
      %v854 = vld [vmem:[%s460] sm:$0xff]
      %v855 = vsub.f32 0.0, %v614
      %v856 = vsub.f32 0.0, %v648
      %v857 = vsub.f32 0.0, %v622
      %v858 = vsub.f32 0.0, %v656
      %v859 = vsub.f32 0.0, %v621
      %v860 = vsub.f32 0.0, %v655
      %v861 = vsub.f32 0.0, %v623
      %v862 = vsub.f32 0.0, %v657
      %v871 = vcombine.low %v855, %v856
      %v872 = vcombine.low %v857, %v858
      %v873 = vcombine.low %v859, %v860
      %v874 = vcombine.low %v861, %v862
      %875 = vrot.lane.b32.xlu0 %v871, 126
      %v876 = vpop.permute.xlu0 %875
      %877 = vrot.lane.b32.xlu0 %v872, 126
      %v878 = vpop.permute.xlu0 %877
      %879 = vrot.lane.b32.xlu0 %v873, 126
      %v880 = vpop.permute.xlu0 %879
      %881 = vrot.lane.b32.xlu0 %v874, 126
      %v882 = vpop.permute.xlu0 %881
      %v895 = vcombine.low %v614, %v648
      %v896 = vcombine.low %v622, %v656
      %v897 = vcombine.low %v621, %v655
      %v898 = vcombine.low %v623, %v657
      %899 = vrot.lane.b32.xlu0 %v895, 2
      %v900 = vpop.permute.xlu0 %899
      %901 = vrot.lane.b32.xlu0 %v896, 2
      %v902 = vpop.permute.xlu0 %901
      %903 = vrot.lane.b32.xlu0 %v897, 2
      %v904 = vpop.permute.xlu0 %903
      %905 = vrot.lane.b32.xlu0 %v898, 2
      %v906 = vpop.permute.xlu0 %905
      %v911 = vsel %vm784, %v876, %v900
      %v912 = vsel %vm784, %v878, %v902
      %v913 = vsel %vm784, %v880, %v904
      %v914 = vsel %vm784, %v882, %v906
      %v916 = vcombine.high %v853, %v853
      %v918 = vmul.f32 %v614, %v853
      %v919 = vmul.f32 %v648, %v916
      %v920 = vmul.f32 %v622, %v853
      %v921 = vmul.f32 %v656, %v916
      %v922 = vmul.f32 %v621, %v853
      %v923 = vmul.f32 %v655, %v916
      %v924 = vmul.f32 %v623, %v853
      %v925 = vmul.f32 %v657, %v916
      %v926 = vmul.f32 %v911, %v854
      %v927 = vmul.f32 %v912, %v854
      %v928 = vmul.f32 %v913, %v854
      %v929 = vmul.f32 %v914, %v854
      %v934 = vcombine.high %v926, %v926
      %v935 = vcombine.high %v927, %v927
      %v936 = vcombine.high %v928, %v928
      %v937 = vcombine.high %v929, %v929
      %v942 = vadd.f32 %v918, %v926
      %v943 = vadd.f32 %v919, %v934
      %v944 = vadd.f32 %v920, %v927
      %v945 = vadd.f32 %v921, %v935
      %v946 = vadd.f32 %v922, %v928
      %v947 = vadd.f32 %v923, %v936
      %v948 = vadd.f32 %v924, %v929
      %v949 = vadd.f32 %v925, %v937
      %v958 = vcombine.low %v942, %v943
      %v959 = vcombine.low %v944, %v945
      %v960 = vcombine.low %v946, %v947
      %v961 = vcombine.low %v948, %v949
      %v970 = vsel %vm844, %v958, %v895
      %v971 = vsel %vm844, %v959, %v896
      %v972 = vsel %vm844, %v960, %v897
      %v973 = vsel %vm844, %v961, %v898
      %v974 = vpack.c.bf16 %v849, %v849
      %v975 = vpack.c.bf16 %v850, %v850
      %v976 = vpack.c.bf16 %v851, %v851
      %v977 = vpack.c.bf16 %v852, %v852
      %v978 = vpack.c.bf16 %v970, %v970
      %v979 = vpack.c.bf16 %v971, %v971
      %v980 = vpack.c.bf16 %v972, %v972
      %v981 = vpack.c.bf16 %v973, %v973
      %vm982 = vcmask 64512
      %v984 = vsel %vm982, %v974, 0
      %v987 = vsel %vm982, %v978, 0
      %989 = vmatprep.subr.bf16.mxu0 0
      %990 = vmatpush1.bf16.xpose.msra.mxu0 0
      %991 = vmatprep.subr.bf16.mxu0 0
      %992 = vmatpush1.bf16.xpose.msra.mxu0 0
      %993 = vmatprep.subr.bf16.mxu0 0
      %994 = vmatpush1.bf16.xpose.msra.mxu0 0
      %995 = vmatprep.subr.bf16.mxu0 0
      %996 = vmatpush1.bf16.xpose.msra.mxu0 0
      %997 = vmatprep.subr.bf16.mxu0 0
      %998 = vmatpush1.bf16.xpose.msra.mxu0 0
      %999 = vmatprep.subr.bf16.mxu0 0
      %1000 = vmatpush1.bf16.xpose.msra.mxu0 0
      %1001 = vmatprep.subr.bf16.mxu0 0
      %1002 = vmatpush1.bf16.xpose.msra.mxu0 0
      %1003 = vmatprep.subr.bf16.mxu0 0
      %1004 = vmatpush1.bf16.xpose.msra.mxu0 %v987
      %1005 = vmatprep.subr.bf16.mxu0 0
      %1006 = vmatpush2.bf16.xpose.msra.mxu0 0
      %1007 = vmatprep.subr.bf16.mxu0 0
      %1008 = vmatpush2.bf16.xpose.msra.mxu0 0
      %1009 = vmatprep.subr.bf16.mxu0 0
      %1010 = vmatpush2.bf16.xpose.msra.mxu0 0
      %1011 = vmatprep.subr.bf16.mxu0 0
      %1012 = vmatpush2.bf16.xpose.msra.mxu0 0
      %1013 = vmatprep.subr.bf16.mxu0 0
      %1014 = vmatpush2.bf16.xpose.msra.mxu0 0
      %1015 = vmatprep.subr.bf16.mxu0 0
      %1016 = vmatpush2.bf16.xpose.msra.mxu0 0
      %1017 = vmatprep.subr.bf16.mxu0 0
      %1018 = vmatpush2.bf16.xpose.msra.mxu0 0
      %1019 = vmatprep.subr.bf16.mxu0 0
      %1020 = vmatpush2.bf16.xpose.msra.mxu0 0
      %1021 = vmatprep.mubr.bf16.mxu0 0
      %1022 = vmatmul.mubr.bf16.gmra.mxu0 %v984
      %v1023 = vpop.f32.mrf.mxu0
      %v1024 = vadd.f32 0.0, %v1023
      %v1025 = vpop.f32.mrf.mxu0
      %v1026 = vpop.f32.mrf.mxu0
      %v1027 = vpop.f32.mrf.mxu0
      %1028 = vdwg.mxu0
      %v1030 = vsel %vm982, %v975, 0
      %v1033 = vsel %vm982, %v979, 0
      %1035 = vmatprep.subr.bf16.mxu0 0
      %1036 = vmatpush1.bf16.xpose.msra.mxu0 0
      %1037 = vmatprep.subr.bf16.mxu0 0
      %1038 = vmatpush1.bf16.xpose.msra.mxu0 0
      %1039 = vmatprep.subr.bf16.mxu0 0
      %1040 = vmatpush1.bf16.xpose.msra.mxu0 0
      %1041 = vmatprep.subr.bf16.mxu0 0
      %1042 = vmatpush1.bf16.xpose.msra.mxu0 0
      %1043 = vmatprep.subr.bf16.mxu0 0
      %1044 = vmatpush1.bf16.xpose.msra.mxu0 0
      %1045 = vmatprep.subr.bf16.mxu0 0
      %1046 = vmatpush1.bf16.xpose.msra.mxu0 0
      %1047 = vmatprep.subr.bf16.mxu0 0
      %1048 = vmatpush1.bf16.xpose.msra.mxu0 0
      %1049 = vmatprep.subr.bf16.mxu0 0
      %1050 = vmatpush1.bf16.xpose.msra.mxu0 %v1033
      %1051 = vmatprep.subr.bf16.mxu0 0
      %1052 = vmatpush2.bf16.xpose.msra.mxu0 0
      %1053 = vmatprep.subr.bf16.mxu0 0
      %1054 = vmatpush2.bf16.xpose.msra.mxu0 0
      %1055 = vmatprep.subr.bf16.mxu0 0
      %1056 = vmatpush2.bf16.xpose.msra.mxu0 0
      %1057 = vmatprep.subr.bf16.mxu0 0
      %1058 = vmatpush2.bf16.xpose.msra.mxu0 0
      %1059 = vmatprep.subr.bf16.mxu0 0
      %1060 = vmatpush2.bf16.xpose.msra.mxu0 0
      %1061 = vmatprep.subr.bf16.mxu0 0
      %1062 = vmatpush2.bf16.xpose.msra.mxu0 0
      %1063 = vmatprep.subr.bf16.mxu0 0
      %1064 = vmatpush2.bf16.xpose.msra.mxu0 0
      %1065 = vmatprep.subr.bf16.mxu0 0
      %1066 = vmatpush2.bf16.xpose.msra.mxu0 0
      %1067 = vmatprep.mubr.bf16.mxu0 0
      %1068 = vmatmul.mubr.bf16.gmra.mxu0 %v1030
      %v1069 = vpop.f32.mrf.mxu0
      %v1070 = vadd.f32 0.0, %v1069
      %v1071 = vpop.f32.mrf.mxu0
      %v1072 = vpop.f32.mrf.mxu0
      %v1073 = vpop.f32.mrf.mxu0
      %1074 = vdwg.mxu0
      %v1076 = vsel %vm982, %v976, 0
      %v1079 = vsel %vm982, %v980, 0
      %1081 = vmatprep.subr.bf16.mxu0 0
      %1082 = vmatpush1.bf16.xpose.msra.mxu0 0
      %1083 = vmatprep.subr.bf16.mxu0 0
      %1084 = vmatpush1.bf16.xpose.msra.mxu0 0
      %1085 = vmatprep.subr.bf16.mxu0 0
      %1086 = vmatpush1.bf16.xpose.msra.mxu0 0
      %1087 = vmatprep.subr.bf16.mxu0 0
      %1088 = vmatpush1.bf16.xpose.msra.mxu0 0
      %1089 = vmatprep.subr.bf16.mxu0 0
      %1090 = vmatpush1.bf16.xpose.msra.mxu0 0
      %1091 = vmatprep.subr.bf16.mxu0 0
      %1092 = vmatpush1.bf16.xpose.msra.mxu0 0
      %1093 = vmatprep.subr.bf16.mxu0 0
      %1094 = vmatpush1.bf16.xpose.msra.mxu0 0
      %1095 = vmatprep.subr.bf16.mxu0 0
      %1096 = vmatpush1.bf16.xpose.msra.mxu0 %v1079
      %1097 = vmatprep.subr.bf16.mxu0 0
      %1098 = vmatpush2.bf16.xpose.msra.mxu0 0
      %1099 = vmatprep.subr.bf16.mxu0 0
      %1100 = vmatpush2.bf16.xpose.msra.mxu0 0
      %1101 = vmatprep.subr.bf16.mxu0 0
      %1102 = vmatpush2.bf16.xpose.msra.mxu0 0
      %1103 = vmatprep.subr.bf16.mxu0 0
      %1104 = vmatpush2.bf16.xpose.msra.mxu0 0
      %1105 = vmatprep.subr.bf16.mxu0 0
      %1106 = vmatpush2.bf16.xpose.msra.mxu0 0
      %1107 = vmatprep.subr.bf16.mxu0 0
      %1108 = vmatpush2.bf16.xpose.msra.mxu0 0
      %1109 = vmatprep.subr.bf16.mxu0 0
      %1110 = vmatpush2.bf16.xpose.msra.mxu0 0
      %1111 = vmatprep.subr.bf16.mxu0 0
      %1112 = vmatpush2.bf16.xpose.msra.mxu0 0
      %1113 = vmatprep.mubr.bf16.mxu0 0
      %1114 = vmatmul.mubr.bf16.gmra.mxu0 %v1076
      %v1115 = vpop.f32.mrf.mxu0
      %v1116 = vadd.f32 0.0, %v1115
      %v1117 = vpop.f32.mrf.mxu0
      %v1118 = vpop.f32.mrf.mxu0
      %v1119 = vpop.f32.mrf.mxu0
      %1120 = vdwg.mxu0
      %v1122 = vsel %vm982, %v977, 0
      %v1125 = vsel %vm982, %v981, 0
      %1127 = vmatprep.subr.bf16.mxu0 0
      %1128 = vmatpush1.bf16.xpose.msra.mxu0 0
      %1129 = vmatprep.subr.bf16.mxu0 0
      %1130 = vmatpush1.bf16.xpose.msra.mxu0 0
      %1131 = vmatprep.subr.bf16.mxu0 0
      %1132 = vmatpush1.bf16.xpose.msra.mxu0 0
      %1133 = vmatprep.subr.bf16.mxu0 0
      %1134 = vmatpush1.bf16.xpose.msra.mxu0 0
      %1135 = vmatprep.subr.bf16.mxu0 0
      %1136 = vmatpush1.bf16.xpose.msra.mxu0 0
      %1137 = vmatprep.subr.bf16.mxu0 0
      %1138 = vmatpush1.bf16.xpose.msra.mxu0 0
      %1139 = vmatprep.subr.bf16.mxu0 0
      %1140 = vmatpush1.bf16.xpose.msra.mxu0 0
      %1141 = vmatprep.subr.bf16.mxu0 0
      %1142 = vmatpush1.bf16.xpose.msra.mxu0 %v1125
      %1143 = vmatprep.subr.bf16.mxu0 0
      %1144 = vmatpush2.bf16.xpose.msra.mxu0 0
      %1145 = vmatprep.subr.bf16.mxu0 0
      %1146 = vmatpush2.bf16.xpose.msra.mxu0 0
      %1147 = vmatprep.subr.bf16.mxu0 0
      %1148 = vmatpush2.bf16.xpose.msra.mxu0 0
      %1149 = vmatprep.subr.bf16.mxu0 0
      %1150 = vmatpush2.bf16.xpose.msra.mxu0 0
      %1151 = vmatprep.subr.bf16.mxu0 0
      %1152 = vmatpush2.bf16.xpose.msra.mxu0 0
      %1153 = vmatprep.subr.bf16.mxu0 0
      %1154 = vmatpush2.bf16.xpose.msra.mxu0 0
      %1155 = vmatprep.subr.bf16.mxu0 0
      %1156 = vmatpush2.bf16.xpose.msra.mxu0 0
      %1157 = vmatprep.subr.bf16.mxu0 0
      %1158 = vmatpush2.bf16.xpose.msra.mxu0 0
      %1159 = vmatprep.mubr.bf16.mxu0 0
      %1160 = vmatmul.mubr.bf16.gmra.mxu0 %v1122
      %v1161 = vpop.f32.mrf.mxu0
      %v1162 = vadd.f32 0.0, %v1161
      %v1163 = vpop.f32.mrf.mxu0
      %v1164 = vpop.f32.mrf.mxu0
      %v1165 = vpop.f32.mrf.mxu0
      %1166 = vdwg.mxu0
      %v1167 = vld [vmem:[#allocation2] sm:$0xff]
      %v1168 = vld [vmem:[#allocation2 + $0x8] sm:$0xff]
      %v1169 = vld [vmem:[#allocation2 + $0x10] sm:$0xff]
      %v1170 = vld [vmem:[#allocation2 + $0x18] sm:$0xff]
      %v1171 = vsel %vm982, %v1024, -inf
      %1172 = vmax.xlane.f32.xlu0 %v1171
      %v1173 = vpop.xlane.xlu0 %1172
      %v1174 = vsel %vm982, %v1070, -inf
      %1175 = vmax.xlane.f32.xlu0 %v1174
      %v1176 = vpop.xlane.xlu0 %1175
      %v1177 = vsel %vm982, %v1116, -inf
      %1178 = vmax.xlane.f32.xlu0 %v1177
      %v1179 = vpop.xlane.xlu0 %1178
      %v1180 = vsel %vm982, %v1162, -inf
      %1181 = vmax.xlane.f32.xlu0 %v1180
      %v1182 = vpop.xlane.xlu0 %1181
      %v1183 = vmax.f32 %v1167, %v1173
      %v1184 = vmax.f32 %v1168, %v1176
      %v1185 = vmax.f32 %v1169, %v1179
      %v1186 = vmax.f32 %v1170, %v1182
      %v1187 = vsub.f32 %v1167, %v1183
      %v1188 = vsub.f32 %v1168, %v1184
      %v1189 = vsub.f32 %v1169, %v1185
      %v1190 = vsub.f32 %v1170, %v1186
      %v1191 = vmul.f32 %v1187, 1.442695
      %v1192 = vpow.pop %v1191
      %v1193 = vmul.f32 %v1188, 1.442695
      %v1194 = vpow.pop %v1193
      %v1195 = vmul.f32 %v1189, 1.442695
      %v1196 = vpow.pop %v1195
      %v1197 = vmul.f32 %v1190, 1.442695
      %v1198 = vpow.pop %v1197
      %1200 = vset.pattern.permute.xlu0 0
      %1201 = vperm.xlu0 %1200, %v1183
      %v1202 = vpop.permute.xlu0 %1201
      %1205 = vset.pattern.permute.xlu0 0
      %1206 = vperm.xlu0 %1205, %v1184
      %v1207 = vpop.permute.xlu0 %1206
      %1210 = vset.pattern.permute.xlu0 0
      %1211 = vperm.xlu0 %1210, %v1185
      %v1212 = vpop.permute.xlu0 %1211
      %1215 = vset.pattern.permute.xlu0 0
      %1216 = vperm.xlu0 %1215, %v1186
      %v1217 = vpop.permute.xlu0 %1216
      %v1219 = vsub.f32 %v1024, %v1202
      %v1220 = vsub.f32 %v1070, %v1207
      %v1221 = vsub.f32 %v1116, %v1212
      %v1222 = vsub.f32 %v1162, %v1217
      %v1223 = vmul.f32 %v1219, 1.442695
      %v1224 = vpow.pop %v1223
      %v1225 = vmul.f32 %v1220, 1.442695
      %v1226 = vpow.pop %v1225
      %v1227 = vmul.f32 %v1221, 1.442695
      %v1228 = vpow.pop %v1227
      %v1229 = vmul.f32 %v1222, 1.442695
      %v1230 = vpow.pop %v1229
      %v1231 = vld [vmem:[#allocation3] sm:$0xff]
      %v1232 = vld [vmem:[#allocation3 + $0x8] sm:$0xff]
      %v1233 = vld [vmem:[#allocation3 + $0x10] sm:$0xff]
      %v1234 = vld [vmem:[#allocation3 + $0x18] sm:$0xff]
      %v1235 = vmul.f32 %v1192, %v1231
      %v1236 = vmul.f32 %v1194, %v1232
      %v1237 = vmul.f32 %v1196, %v1233
      %v1238 = vmul.f32 %v1198, %v1234
      %v1239 = vsel %vm982, %v1224, 0.0
      %1240 = vadd.xlane.f32.xlu0 %v1239
      %v1241 = vpop.xlane.xlu0 %1240
      %v1242 = vsel %vm982, %v1226, 0.0
      %1243 = vadd.xlane.f32.xlu0 %v1242
      %v1244 = vpop.xlane.xlu0 %1243
      %v1245 = vsel %vm982, %v1228, 0.0
      %1246 = vadd.xlane.f32.xlu0 %v1245
      %v1247 = vpop.xlane.xlu0 %1246
      %v1248 = vsel %vm982, %v1230, 0.0
      %1249 = vadd.xlane.f32.xlu0 %v1248
      %v1250 = vpop.xlane.xlu0 %1249
      %v1251 = vadd.f32 %v1235, %v1241
      %v1252 = vadd.f32 %v1236, %v1244
      %v1253 = vadd.f32 %v1237, %v1247
      %v1254 = vadd.f32 %v1238, %v1250
      %vm1255 = vcmask 7168
      %1256 = vst.msk [vmem:[#allocation3] sm:$0xff] %vm1255, %v1251
      %1257 = vst.msk [vmem:[#allocation3 + $0x8] sm:$0xff] %vm1255, %v1252
      %1258 = vst.msk [vmem:[#allocation3 + $0x10] sm:$0xff] %vm1255, %v1253
      %1259 = vst.msk [vmem:[#allocation3 + $0x18] sm:$0xff] %vm1255, %v1254
      %v1260 = vld [vmem:[#allocation4] sm:$0xff]
      %v1261 = vld [vmem:[#allocation4 + $0x8] sm:$0xff]
      %v1262 = vld [vmem:[#allocation4 + $0x10] sm:$0xff]
      %v1263 = vld [vmem:[#allocation4 + $0x18] sm:$0xff]
      %1265 = vset.pattern.permute.xlu0 0
      %1266 = vperm.xlu0 %1265, %v1192
      %v1267 = vpop.permute.xlu0 %1266
      %1270 = vset.pattern.permute.xlu0 0
      %1271 = vperm.xlu0 %1270, %v1194
      %v1272 = vpop.permute.xlu0 %1271
      %1275 = vset.pattern.permute.xlu0 0
      %1276 = vperm.xlu0 %1275, %v1196
      %v1277 = vpop.permute.xlu0 %1276
      %1280 = vset.pattern.permute.xlu0 0
      %1281 = vperm.xlu0 %1280, %v1198
      %v1282 = vpop.permute.xlu0 %1281
      %v1284 = vmul.f32 %v1267, %v1260
      %v1285 = vmul.f32 %v1272, %v1261
      %v1286 = vmul.f32 %v1277, %v1262
      %v1287 = vmul.f32 %v1282, %v1263
      %v1288 = vpack.c.bf16 %v1224, %v1224
      %v1289 = vpack.c.bf16 %v1226, %v1226
      %v1290 = vpack.c.bf16 %v1228, %v1228
      %v1291 = vpack.c.bf16 %v1230, %v1230
      %v1292 = vcombine.low %v704, %v716
      %v1294 = vunpack.c.l.s4 1983009808
      %v1295 = vunpack.c.0.s8 %v1294
      %v1296 = vlaneseq
      %v1297 = vshrl.u32 %v1296, 7
      %v1298 = vsub.s32 %v1295, %v1297
      %v1299 = vrot.slane %v1292, %v1298
      %v1301 = vsel %vm982, %v1288, 0
      %vm1303 = vcmask 1043456
      %v1305 = vsel %vm1303, %v1299, 0
      %1307 = vmatprep.subr.bf16.mxu0 0
      %1308 = vmatpush1.bf16.msra.mxu0 0
      %1309 = vmatprep.subr.bf16.mxu0 0
      %1310 = vmatpush1.bf16.msra.mxu0 0
      %1311 = vmatprep.subr.bf16.mxu0 0
      %1312 = vmatpush1.bf16.msra.mxu0 0
      %1313 = vmatprep.subr.bf16.mxu0 0
      %1314 = vmatpush1.bf16.msra.mxu0 0
      %1315 = vmatprep.subr.bf16.mxu0 0
      %1316 = vmatpush1.bf16.msra.mxu0 0
      %1317 = vmatprep.subr.bf16.mxu0 0
      %1318 = vmatpush1.bf16.msra.mxu0 0
      %1319 = vmatprep.subr.bf16.mxu0 0
      %1320 = vmatpush1.bf16.msra.mxu0 0
      %1321 = vmatprep.subr.bf16.mxu0 0
      %1322 = vmatpush1.bf16.msra.mxu0 %v1305
      %1323 = vmatprep.subr.bf16.mxu0 0
      %1324 = vmatpush2.bf16.msra.mxu0 0
      %1325 = vmatprep.subr.bf16.mxu0 0
      %1326 = vmatpush2.bf16.msra.mxu0 0
      %1327 = vmatprep.subr.bf16.mxu0 0
      %1328 = vmatpush2.bf16.msra.mxu0 0
      %1329 = vmatprep.subr.bf16.mxu0 0
      %1330 = vmatpush2.bf16.msra.mxu0 0
      %1331 = vmatprep.subr.bf16.mxu0 0
      %1332 = vmatpush2.bf16.msra.mxu0 0
      %1333 = vmatprep.subr.bf16.mxu0 0
      %1334 = vmatpush2.bf16.msra.mxu0 0
      %1335 = vmatprep.subr.bf16.mxu0 0
      %1336 = vmatpush2.bf16.msra.mxu0 0
      %1337 = vmatprep.subr.bf16.mxu0 0
      %1338 = vmatpush2.bf16.msra.mxu0 0
      %1339 = vmatprep.mubr.bf16.mxu0 0
      %1340 = vmatmul.mubr.bf16.gmra.mxu0 %v1301
      %v1341 = vpop.f32.mrf.mxu0
      %v1342 = vadd.f32 0.0, %v1341
      %v1343 = vpop.f32.mrf.mxu0
      %v1344 = vpop.f32.mrf.mxu0
      %v1345 = vpop.f32.mrf.mxu0
      %1346 = vdwg.mxu0
      %v1347 = vcombine.low %v707, %v719
      %v1349 = vunpack.c.l.s4 1983009808
      %v1350 = vunpack.c.0.s8 %v1349
      %v1351 = vlaneseq
      %v1352 = vshrl.u32 %v1351, 7
      %v1353 = vsub.s32 %v1350, %v1352
      %v1354 = vrot.slane %v1347, %v1353
      %v1356 = vsel %vm982, %v1289, 0
      %v1359 = vsel %vm1303, %v1354, 0
      %1361 = vmatprep.subr.bf16.mxu0 0
      %1362 = vmatpush1.bf16.msra.mxu0 0
      %1363 = vmatprep.subr.bf16.mxu0 0
      %1364 = vmatpush1.bf16.msra.mxu0 0
      %1365 = vmatprep.subr.bf16.mxu0 0
      %1366 = vmatpush1.bf16.msra.mxu0 0
      %1367 = vmatprep.subr.bf16.mxu0 0
      %1368 = vmatpush1.bf16.msra.mxu0 0
      %1369 = vmatprep.subr.bf16.mxu0 0
      %1370 = vmatpush1.bf16.msra.mxu0 0
      %1371 = vmatprep.subr.bf16.mxu0 0
      %1372 = vmatpush1.bf16.msra.mxu0 0
      %1373 = vmatprep.subr.bf16.mxu0 0
      %1374 = vmatpush1.bf16.msra.mxu0 0
      %1375 = vmatprep.subr.bf16.mxu0 0
      %1376 = vmatpush1.bf16.msra.mxu0 %v1359
      %1377 = vmatprep.subr.bf16.mxu0 0
      %1378 = vmatpush2.bf16.msra.mxu0 0
      %1379 = vmatprep.subr.bf16.mxu0 0
      %1380 = vmatpush2.bf16.msra.mxu0 0
      %1381 = vmatprep.subr.bf16.mxu0 0
      %1382 = vmatpush2.bf16.msra.mxu0 0
      %1383 = vmatprep.subr.bf16.mxu0 0
      %1384 = vmatpush2.bf16.msra.mxu0 0
      %1385 = vmatprep.subr.bf16.mxu0 0
      %1386 = vmatpush2.bf16.msra.mxu0 0
      %1387 = vmatprep.subr.bf16.mxu0 0
      %1388 = vmatpush2.bf16.msra.mxu0 0
      %1389 = vmatprep.subr.bf16.mxu0 0
      %1390 = vmatpush2.bf16.msra.mxu0 0
      %1391 = vmatprep.subr.bf16.mxu0 0
      %1392 = vmatpush2.bf16.msra.mxu0 0
      %1393 = vmatprep.mubr.bf16.mxu0 0
      %1394 = vmatmul.mubr.bf16.gmra.mxu0 %v1356
      %v1395 = vpop.f32.mrf.mxu0
      %v1396 = vadd.f32 0.0, %v1395
      %v1397 = vpop.f32.mrf.mxu0
      %v1398 = vpop.f32.mrf.mxu0
      %v1399 = vpop.f32.mrf.mxu0
      %1400 = vdwg.mxu0
      %v1401 = vcombine.low %v710, %v722
      %v1403 = vunpack.c.l.s4 1983009808
      %v1404 = vunpack.c.0.s8 %v1403
      %v1405 = vlaneseq
      %v1406 = vshrl.u32 %v1405, 7
      %v1407 = vsub.s32 %v1404, %v1406
      %v1408 = vrot.slane %v1401, %v1407
      %v1410 = vsel %vm982, %v1290, 0
      %v1413 = vsel %vm1303, %v1408, 0
      %1415 = vmatprep.subr.bf16.mxu0 0
      %1416 = vmatpush1.bf16.msra.mxu0 0
      %1417 = vmatprep.subr.bf16.mxu0 0
      %1418 = vmatpush1.bf16.msra.mxu0 0
      %1419 = vmatprep.subr.bf16.mxu0 0
      %1420 = vmatpush1.bf16.msra.mxu0 0
      %1421 = vmatprep.subr.bf16.mxu0 0
      %1422 = vmatpush1.bf16.msra.mxu0 0
      %1423 = vmatprep.subr.bf16.mxu0 0
      %1424 = vmatpush1.bf16.msra.mxu0 0
      %1425 = vmatprep.subr.bf16.mxu0 0
      %1426 = vmatpush1.bf16.msra.mxu0 0
      %1427 = vmatprep.subr.bf16.mxu0 0
      %1428 = vmatpush1.bf16.msra.mxu0 0
      %1429 = vmatprep.subr.bf16.mxu0 0
      %1430 = vmatpush1.bf16.msra.mxu0 %v1413
      %1431 = vmatprep.subr.bf16.mxu0 0
      %1432 = vmatpush2.bf16.msra.mxu0 0
      %1433 = vmatprep.subr.bf16.mxu0 0
      %1434 = vmatpush2.bf16.msra.mxu0 0
      %1435 = vmatprep.subr.bf16.mxu0 0
      %1436 = vmatpush2.bf16.msra.mxu0 0
      %1437 = vmatprep.subr.bf16.mxu0 0
      %1438 = vmatpush2.bf16.msra.mxu0 0
      %1439 = vmatprep.subr.bf16.mxu0 0
      %1440 = vmatpush2.bf16.msra.mxu0 0
      %1441 = vmatprep.subr.bf16.mxu0 0
      %1442 = vmatpush2.bf16.msra.mxu0 0
      %1443 = vmatprep.subr.bf16.mxu0 0
      %1444 = vmatpush2.bf16.msra.mxu0 0
      %1445 = vmatprep.subr.bf16.mxu0 0
      %1446 = vmatpush2.bf16.msra.mxu0 0
      %1447 = vmatprep.mubr.bf16.mxu0 0
      %1448 = vmatmul.mubr.bf16.gmra.mxu0 %v1410
      %v1449 = vpop.f32.mrf.mxu0
      %v1450 = vadd.f32 0.0, %v1449
      %v1451 = vpop.f32.mrf.mxu0
      %v1452 = vpop.f32.mrf.mxu0
      %v1453 = vpop.f32.mrf.mxu0
      %1454 = vdwg.mxu0
      %v1455 = vcombine.low %v713, %v725
      %v1457 = vunpack.c.l.s4 1983009808
      %v1458 = vunpack.c.0.s8 %v1457
      %v1459 = vlaneseq
      %v1460 = vshrl.u32 %v1459, 7
      %v1461 = vsub.s32 %v1458, %v1460
      %v1462 = vrot.slane %v1455, %v1461
      %v1464 = vsel %vm982, %v1291, 0
      %v1467 = vsel %vm1303, %v1462, 0
      %1469 = vmatprep.subr.bf16.mxu0 0
      %1470 = vmatpush1.bf16.msra.mxu0 0
      %1471 = vmatprep.subr.bf16.mxu0 0
      %1472 = vmatpush1.bf16.msra.mxu0 0
      %1473 = vmatprep.subr.bf16.mxu0 0
      %1474 = vmatpush1.bf16.msra.mxu0 0
      %1475 = vmatprep.subr.bf16.mxu0 0
      %1476 = vmatpush1.bf16.msra.mxu0 0
      %1477 = vmatprep.subr.bf16.mxu0 0
      %1478 = vmatpush1.bf16.msra.mxu0 0
      %1479 = vmatprep.subr.bf16.mxu0 0
      %1480 = vmatpush1.bf16.msra.mxu0 0
      %1481 = vmatprep.subr.bf16.mxu0 0
      %1482 = vmatpush1.bf16.msra.mxu0 0
      %1483 = vmatprep.subr.bf16.mxu0 0
      %1484 = vmatpush1.bf16.msra.mxu0 %v1467
      %1485 = vmatprep.subr.bf16.mxu0 0
      %1486 = vmatpush2.bf16.msra.mxu0 0
      %1487 = vmatprep.subr.bf16.mxu0 0
      %1488 = vmatpush2.bf16.msra.mxu0 0
      %1489 = vmatprep.subr.bf16.mxu0 0
      %1490 = vmatpush2.bf16.msra.mxu0 0
      %1491 = vmatprep.subr.bf16.mxu0 0
      %1492 = vmatpush2.bf16.msra.mxu0 0
      %1493 = vmatprep.subr.bf16.mxu0 0
      %1494 = vmatpush2.bf16.msra.mxu0 0
      %1495 = vmatprep.subr.bf16.mxu0 0
      %1496 = vmatpush2.bf16.msra.mxu0 0
      %1497 = vmatprep.subr.bf16.mxu0 0
      %1498 = vmatpush2.bf16.msra.mxu0 0
      %1499 = vmatprep.subr.bf16.mxu0 0
      %1500 = vmatpush2.bf16.msra.mxu0 0
      %1501 = vmatprep.mubr.bf16.mxu0 0
      %1502 = vmatmul.mubr.bf16.gmra.mxu0 %v1464
      %v1503 = vpop.f32.mrf.mxu0
      %v1504 = vadd.f32 0.0, %v1503
      %v1505 = vpop.f32.mrf.mxu0
      %v1506 = vpop.f32.mrf.mxu0
      %v1507 = vpop.f32.mrf.mxu0
      %1508 = vdwg.mxu0
      %v1509 = vadd.f32 %v1284, %v1342
      %v1510 = vadd.f32 %v1285, %v1396
      %v1511 = vadd.f32 %v1286, %v1450
      %v1512 = vadd.f32 %v1287, %v1504
      %1513 = vst.msk [vmem:[#allocation4] sm:$0xff] %vm982, %v1509
      %1514 = vst.msk [vmem:[#allocation4 + $0x8] sm:$0xff] %vm982, %v1510
      %1515 = vst.msk [vmem:[#allocation4 + $0x10] sm:$0xff] %vm982, %v1511
      %1516 = vst.msk [vmem:[#allocation4 + $0x18] sm:$0xff] %vm982, %v1512
      %1517 = vst.msk [vmem:[#allocation2] sm:$0xff] %vm1255, %v1183
      %1518 = vst.msk [vmem:[#allocation2 + $0x8] sm:$0xff] %vm1255, %v1184
      %1519 = vst.msk [vmem:[#allocation2 + $0x10] sm:$0xff] %vm1255, %v1185
      %1520 = vst.msk [vmem:[#allocation2 + $0x18] sm:$0xff] %vm1255, %v1186
      // Predicated region
      $region53: #{_lambda_.6} parent=47 // pred_check
        %p1521 = pneg %p472
      $region54: #{_lambda_.6} parent=47 // pred_check_branch
        %1523 = sbr.rel (%p1521) target = $region56
      $region55: #{_lambda_.6} parent=47 // pred_region
        %v1524 = vld [vmem:[#allocation3] sm:$0xff]
        %v1525 = vld [vmem:[#allocation3 + $0x8] sm:$0xff]
        %v1526 = vld [vmem:[#allocation3 + $0x10] sm:$0xff]
        %v1527 = vld [vmem:[#allocation3 + $0x18] sm:$0xff]
        %v1528 = vrcp.pop %v1524
        %v1529 = vrcp.pop %v1525
        %v1530 = vrcp.pop %v1526
        %v1531 = vrcp.pop %v1527
        %v1532 = vld [vmem:[#allocation4] sm:$0xff]
        %v1533 = vld [vmem:[#allocation4 + $0x8] sm:$0xff]
        %v1534 = vld [vmem:[#allocation4 + $0x10] sm:$0xff]
        %v1535 = vld [vmem:[#allocation4 + $0x18] sm:$0xff]
        %1537 = vset.pattern.permute.xlu0 0
        %1538 = vperm.xlu0 %1537, %v1528
        %v1539 = vpop.permute.xlu0 %1538
        %1542 = vset.pattern.permute.xlu0 0
        %1543 = vperm.xlu0 %1542, %v1529
        %v1544 = vpop.permute.xlu0 %1543
        %1547 = vset.pattern.permute.xlu0 0
        %1548 = vperm.xlu0 %1547, %v1530
        %v1549 = vpop.permute.xlu0 %1548
        %1552 = vset.pattern.permute.xlu0 0
        %1553 = vperm.xlu0 %1552, %v1531
        %v1554 = vpop.permute.xlu0 %1553
        %v1556 = vmul.f32 %v1532, %v1539
        %v1557 = vmul.f32 %v1533, %v1544
        %v1558 = vmul.f32 %v1534, %v1549
        %v1559 = vmul.f32 %v1535, %v1554
        %v1560 = vcombine.low %v1556, %v1558
        %v1561 = vcombine.high %v1556, %v1558
        %v1563 = vunpack.c.l.s4 1983009808
        %v1564 = vunpack.c.0.s8 %v1563
        %v1565 = vlaneseq
        %v1566 = vshrl.u32 %v1565, 7
        %v1567 = vsub.s32 %v1564, %v1566
        %v1568 = vrot.slane %v1560, %v1567
        %v1570 = vunpack.c.l.s4 1983009808
        %v1571 = vunpack.c.0.s8 %v1570
        %v1572 = vlaneseq
        %v1573 = vshrl.u32 %v1572, 7
        %v1574 = vsub.s32 %v1571, %v1573
        %v1575 = vrot.slane %v1561, %v1574
        %v1576 = vcombine.low %v1557, %v1559
        %v1577 = vcombine.high %v1557, %v1559
        %v1579 = vunpack.c.l.s4 1983009808
        %v1580 = vunpack.c.0.s8 %v1579
        %v1581 = vlaneseq
        %v1582 = vshrl.u32 %v1581, 7
        %v1583 = vsub.s32 %v1580, %v1582
        %v1584 = vrot.slane %v1576, %v1583
        %v1586 = vunpack.c.l.s4 1983009808
        %v1587 = vunpack.c.0.s8 %v1586
        %v1588 = vlaneseq
        %v1589 = vshrl.u32 %v1588, 7
        %v1590 = vsub.s32 %v1587, %v1589
        %v1591 = vrot.slane %v1577, %v1590
        %v1592 = vcombine.low %v1568, %v1584
        %v1593 = vcombine.high %v1568, %v1584
        %v1595 = vunpack.c.l.s4 1934713408
        %v1596 = vunpack.c.0.s8 %v1595
        %v1597 = vlaneseq
        %v1598 = vshrl.u32 %v1597, 7
        %v1599 = vsub.s32 %v1596, %v1598
        %v1600 = vrot.slane %v1592, %v1599
        %v1602 = vunpack.c.l.s4 1934713408
        %v1603 = vunpack.c.0.s8 %v1602
        %v1604 = vlaneseq
        %v1605 = vshrl.u32 %v1604, 7
        %v1606 = vsub.s32 %v1603, %v1605
        %v1607 = vrot.slane %v1593, %v1606
        %v1608 = vcombine.low %v1575, %v1591
        %v1609 = vcombine.high %v1575, %v1591
        %v1611 = vunpack.c.l.s4 1934713408
        %v1612 = vunpack.c.0.s8 %v1611
        %v1613 = vlaneseq
        %v1614 = vshrl.u32 %v1613, 7
        %v1615 = vsub.s32 %v1612, %v1614
        %v1616 = vrot.slane %v1608, %v1615
        %v1618 = vunpack.c.l.s4 1934713408
        %v1619 = vunpack.c.0.s8 %v1618
        %v1620 = vlaneseq
        %v1621 = vshrl.u32 %v1620, 7
        %v1622 = vsub.s32 %v1619, %v1621
        %v1623 = vrot.slane %v1609, %v1622
        %v1624 = vcombine.high %v1600, 0.0
        %v1625 = vcombine.high %v1607, 0.0
        %v1626 = vcombine.high %v1616, 0.0
        %v1627 = vcombine.high %v1623, 0.0
        %v1628 = vpack.c.bf16 %v1600, %v1600
        %v1629 = vpack.c.bf16 %v1624, %v1624
        %v1630 = vpack.c.bf16 %v1607, %v1607
        %v1631 = vpack.c.bf16 %v1625, %v1625
        %v1632 = vpack.c.bf16 %v1616, %v1616
        %v1633 = vpack.c.bf16 %v1626, %v1626
        %v1634 = vpack.c.bf16 %v1623, %v1623
        %v1635 = vpack.c.bf16 %v1627, %v1627
        %vm1636 = vcmask 58368
        %1637 = vst.msk [vmem:[%s469] sm:$0x3] %vm1636, %v1628
        %1638 = vst.msk [vmem:[%s469 + $0x2] sm:$0x3] %vm1636, %v1629
        %1639 = vst.msk [vmem:[%s469 + $0x4] sm:$0x3] %vm1636, %v1630
        %1640 = vst.msk [vmem:[%s469 + $0x6] sm:$0x3] %vm1636, %v1631
        %1641 = vst.msk [vmem:[%s469 + $0x8] sm:$0x3] %vm1636, %v1632
        %1642 = vst.msk [vmem:[%s469 + $0xa] sm:$0x3] %vm1636, %v1633
        %1643 = vst.msk [vmem:[%s469 + $0xc] sm:$0x3] %vm1636, %v1634
        %1644 = vst.msk [vmem:[%s469 + $0xe] sm:$0x3] %vm1636, %v1635
      $region56: #{_lambda_.6} parent=47 // pred_fallthru
        _
      %s1645 = smul.u32 8, %s24
      %p1646 = scmp.lt.s32.totalorder %s23, 1
      %s1647 = scalar_select %p1646, %s23, 1
      %p1648 = scmp.lt.s32.totalorder %s1645, 7
      %s1649 = scalar_select %p1648, %s1645, 7
      %s1650 = smul.addr %s1647, 8
      %s1651 = sadd.s32 %s1649, %s1650
      %s1652 = smul.addr %s1651, 2
      %s1653 = scalar_lea.vmem %s7, %s1652
      // Predicated region
      $region57: #{_lambda_.6} parent=47 // pred_check
        %p1654 = pneg %p245
      $region58: #{_lambda_.6} parent=47 // pred_check_branch
        %1656 = sbr.rel (%p1654) target = $region60
      $region59: #{_lambda_.6} parent=47 // pred_region
        %s1657 = smul.u32 8, %s24
      $region60: #{_lambda_.6} parent=47 // pred_fallthru
        _
    $region48: #{_lambda_.6} parent=5 // pred_fallthru
      _
    %p1658 = scmp.le.s32.totalorder 2, %s13
    // Predicated region
    $region61: #{_lambda_.6} parent=5 // pred_check
      %p1659 = pneg %p1658
    $region62: #{_lambda_.6} parent=5 // pred_check_branch
      %1661 = sbr.rel (%p1659) target = $region64
    $region63: #{_lambda_.6} parent=5 // pred_region
      %s1662 = ssub.s32 %s13, 2
      // Predicated region
      $region65: #{_lambda_.6} parent=63 // pred_check
        %p1663 = pneg %p251
      $region66: #{_lambda_.6} parent=63 // pred_check_branch
        %1665 = sbr.rel (%p1663) target = $region68
      $region67: #{_lambda_.6} parent=63 // pred_region
        %s1666 = smul.u32 8, %s27
        %p1667 = scmp.lt.s32.totalorder %s26, 1
        %s1668 = scalar_select %p1667, %s26, 1
        %p1669 = scmp.lt.s32.totalorder %s1666, 7
        %s1670 = scalar_select %p1669, %s1666, 7
        %s1671 = smul.addr %s1668, 8
        %s1672 = sadd.s32 %s1670, %s1671
        %s1673 = smul.addr %s1672, 2
        %s1674 = scalar_lea.vmem %s7, %s1673
      $region68: #{_lambda_.6} parent=63 // pred_fallthru
        _
    $region64: #{_lambda_.6} parent=5 // pred_fallthru
      _
  $region6: #{_lambda_.6} parent=0 // loop_footer
    %s17 = sadd.s32 1, %s13
  $region7: #{_lambda_.6} parent=0 // loop_footer_branch
    %12 = sbr.rel target = $region3
  $region8: #{_lambda_.6} parent=0 // loop_exit
    _

// kernel: _lambda_.8
$region0: #{_lambda_.8}
  #allocation0 [shape = 'u32[]', space=smem, size = 0x4, offset = 0x4, fixed_abs, tag = 'smem constant byte address 0x4 - core index']
  #allocation1 [shape = 'u32[144,128]{1,0:T(1,128)}', space=vmem, size = 0x12000, scoped, tag = 'internal scratch']
  %s0 = inlined_call_operand.vmem [shape: f32[16,32], index: 0, kind: input, shape index: {}]
  %s1 = inlined_call_operand.vmem [shape: f32[1,32], index: 1, kind: input, shape index: {}]
  %s2 = inlined_call_operand.vmem [shape: f32[1,32], index: 2, kind: input, shape index: {}]
  %s3 = inlined_call_operand.vmem [shape: bf16[32,4], index: 3, kind: input, shape index: {}]
  %s4 = inlined_call_operand.vmem [shape: f32[16,4], index: 4, kind: output, shape index: {}]
  %s5 = sld [smem:[#allocation0]]
  $region26: #{_lambda_.8} parent=0
    _
  %s7 = ssub.s32 1, %s5
  %s8 = scalar_select 0, %s7, %s5
  // Predicated region
  $region2: #{_lambda_.8} parent=0 // pred_check
    _
  $region3: #{_lambda_.8} parent=0 // pred_check_branch
    %10 = sbr.rel (0) target = $region5
  $region4: #{_lambda_.8} parent=0 // pred_region
    _
  $region5: #{_lambda_.8} parent=0 // pred_fallthru
    _
  // Predicated region
  $region6: #{_lambda_.8} parent=0 // pred_check
    _
  $region7: #{_lambda_.8} parent=0 // pred_check_branch
    %12 = sbr.rel (0) target = $region9
  $region8: #{_lambda_.8} parent=0 // pred_region
    _
  $region9: #{_lambda_.8} parent=0 // pred_fallthru
    _
  // Predicated region
  $region10: #{_lambda_.8} parent=0 // pred_check
    _
  $region11: #{_lambda_.8} parent=0 // pred_check_branch
    %14 = sbr.rel (0) target = $region13
  $region12: #{_lambda_.8} parent=0 // pred_region
    _
  $region13: #{_lambda_.8} parent=0 // pred_fallthru
    _
  // Predicated region
  $region14: #{_lambda_.8} parent=0 // pred_check
    _
  $region15: #{_lambda_.8} parent=0 // pred_check_branch
    %16 = sbr.rel (0) target = $region17
  $region16: #{_lambda_.8} parent=0 // pred_region
    _
  $region17: #{_lambda_.8} parent=0 // pred_fallthru
    _
  %v18 = vld [vmem:[%s0] sm:$0xff]
  %v19 = vld [vmem:[%s0 + $0x8] sm:$0xff]
  %v20 = vld [vmem:[%s1] sm:$0x1]
  %v21 = vld [vmem:[%s2] sm:$0x1]
  %vm22 = vcmask 261120
  %v23 = vsel %vm22, %v18, 0.0
  %24 = vadd.xlane.f32.xlu0 %v23
  %v25 = vpop.xlane.xlu0 %24
  %v26 = vsel %vm22, %v19, 0.0
  %27 = vadd.xlane.f32.xlu0 %v26
  %v28 = vpop.xlane.xlu0 %27
  %v29 = vrcp.pop 32.0
  %v30 = vmul.f32 %v25, %v29
  %v31 = vmul.f32 %v28, %v29
  %v32 = vsub.f32 %v18, %v30
  %v33 = vsub.f32 %v19, %v31
  %v34 = vmul.f32 %v32, %v32
  %v35 = vmul.f32 %v33, %v33
  %v36 = vsel %vm22, %v34, 0.0
  %37 = vadd.xlane.f32.xlu0 %v36
  %v38 = vpop.xlane.xlu0 %37
  %v39 = vsel %vm22, %v35, 0.0
  %40 = vadd.xlane.f32.xlu0 %v39
  %v41 = vpop.xlane.xlu0 %40
  %v42 = vmul.f32 %v38, %v29
  %v43 = vmul.f32 %v41, %v29
  %v44 = vadd.f32 %v42, 1e-05
  %v45 = vadd.f32 %v43, 1e-05
  %v46 = vrsqrt.pop %v44
  %v47 = vrsqrt.pop %v45
  %v48 = vmul.f32 %v32, %v46
  %v49 = vmul.f32 %v33, %v47
  %v51 = vlaneseq
  %v52 = vshrl.u32 %v51, 7
  %v53 = vsub.s32 0, %v52
  %v54 = vrot.slane %v20, %v53
  %v56 = vmul.f32 %v48, %v54
  %v57 = vmul.f32 %v49, %v54
  %v59 = vlaneseq
  %v60 = vshrl.u32 %v59, 7
  %v61 = vsub.s32 0, %v60
  %v62 = vrot.slane %v21, %v61
  %v64 = vadd.f32 %v56, %v62
  %v65 = vadd.f32 %v57, %v62
  %v66 = vpack.c.bf16 %v65, %v64
  %v67 = vld [vmem:[%s3] sm:$0xf]
  %v68 = vld [vmem:[%s3 + $0x4] sm:$0xf]
  %v69 = vld [vmem:[%s3 + $0x8] sm:$0xf]
  %v70 = vld [vmem:[%s3 + $0xc] sm:$0xf]
  %v75 = vunpack.c.l.b16 %v67
  %v76 = vunpack.c.l.b16 %v68
  %v77 = vunpack.c.l.b16 %v69
  %v78 = vunpack.c.l.b16 %v70
  %v79 = vpack.c.b16 %v76, %v75
  %v80 = vpack.c.b16 %v78, %v77
  %v84 = vsel %vm22, %v66, 0
  %86 = vmatprep.subr.bf16.mxu0 0
  %87 = vmatpush1.bf16.msra.mxu0 0
  %88 = vmatprep.subr.bf16.mxu0 0
  %89 = vmatpush1.bf16.msra.mxu0 0
  %90 = vmatprep.subr.bf16.mxu0 0
  %91 = vmatpush1.bf16.msra.mxu0 0
  %92 = vmatprep.subr.bf16.mxu0 0
  %93 = vmatpush1.bf16.msra.mxu0 0
  %94 = vmatprep.subr.bf16.mxu0 0
  %95 = vmatpush1.bf16.msra.mxu0 0
  %96 = vmatprep.subr.bf16.mxu0 0
  %97 = vmatpush1.bf16.msra.mxu0 0
  %98 = vmatprep.subr.bf16.mxu0 0
  %99 = vmatpush1.bf16.msra.mxu0 %v80
  %100 = vmatprep.subr.bf16.mxu0 0
  %101 = vmatpush1.bf16.msra.mxu0 %v79
  %102 = vmatprep.subr.bf16.mxu0 0
  %103 = vmatpush2.bf16.msra.mxu0 0
  %104 = vmatprep.subr.bf16.mxu0 0
  %105 = vmatpush2.bf16.msra.mxu0 0
  %106 = vmatprep.subr.bf16.mxu0 0
  %107 = vmatpush2.bf16.msra.mxu0 0
  %108 = vmatprep.subr.bf16.mxu0 0
  %109 = vmatpush2.bf16.msra.mxu0 0
  %110 = vmatprep.subr.bf16.mxu0 0
  %111 = vmatpush2.bf16.msra.mxu0 0
  %112 = vmatprep.subr.bf16.mxu0 0
  %113 = vmatpush2.bf16.msra.mxu0 0
  %114 = vmatprep.subr.bf16.mxu0 0
  %115 = vmatpush2.bf16.msra.mxu0 0
  %116 = vmatprep.subr.bf16.mxu0 0
  %117 = vmatpush2.bf16.msra.mxu0 0
  %118 = vmatprep.mubr.bf16.mxu0 0
  %119 = vmatmul.mubr.bf16.gmra.mxu0 %v84
  %v120 = vpop.f32.mrf.mxu0
  %v121 = vadd.f32 0.0, %v120
  %v122 = vpop.f32.mrf.mxu0
  %v123 = vpop.f32.mrf.mxu0
  %v124 = vadd.f32 0.0, %v123
  %v125 = vpop.f32.mrf.mxu0
  %126 = vdwg.mxu0
  %vm127 = vcmask 31744
  %128 = vst.msk [vmem:[%s4] sm:$0xff] %vm127, %v121
  %129 = vst.msk [vmem:[%s4 + $0x8] sm:$0xff] %vm127, %v124
  // Predicated region
  $region18: #{_lambda_.8} parent=0 // pred_check
    _
  $region19: #{_lambda_.8} parent=0 // pred_check_branch
    %131 = sbr.rel (0) target = $region21
  $region20: #{_lambda_.8} parent=0 // pred_region
    _
  $region21: #{_lambda_.8} parent=0 // pred_fallthru
    _
  // Predicated region
  $region22: #{_lambda_.8} parent=0 // pred_check
    _
  $region23: #{_lambda_.8} parent=0 // pred_check_branch
    %133 = sbr.rel (0) target = $region25
  $region24: #{_lambda_.8} parent=0 // pred_region
    _
  $region25: #{_lambda_.8} parent=0 // pred_fallthru
    _

// kernel: _lambda_.9
$region0: #{_lambda_.9}
  #allocation0 [shape = 'u32[]', space=smem, size = 0x4, offset = 0x4, fixed_abs, tag = 'smem constant byte address 0x4 - core index']
  #allocation1 [shape = 'u32[144,128]{1,0:T(1,128)}', space=vmem, size = 0x12000, scoped, tag = 'internal scratch']
  #allocation2 [shape = 'f32[16,32]{1,0:T(8,128)}', space=vmem, size = 0x2000, scoped, tag = 'scratch operand']
  #allocation3 [shape = 'f32[16,32]{1,0:T(8,128)}', space=vmem, size = 0x2000, scoped, tag = 'scratch operand']
  #allocation4 [shape = 's32[1]{0}', space=sflag, size = 0x4, scoped, tag = 'scoped memory for _lambda_.9']
  #allocation5 [shape = 'u8[512]{0}', space=smem, size = 0x200, scoped, tag = 'prefetched SMEM operand 0']
  %s0 = inlined_call_operand.vmem [shape: s32[1,4], index: 0, kind: input, shape index: {}]
  %s1 = inlined_call_operand.vmem [shape: f32[16,32], index: 1, kind: input, shape index: {}]
  %s2 = inlined_call_operand.vmem [shape: f32[1,32], index: 2, kind: input, shape index: {}]
  %s3 = inlined_call_operand.vmem [shape: f32[1,32], index: 3, kind: input, shape index: {}]
  %s4 = inlined_call_operand.vmem [shape: bf16[4,32,16], index: 4, kind: input, shape index: {}]
  %s5 = inlined_call_operand.vmem [shape: bf16[4,16,32], index: 5, kind: input, shape index: {}]
  %s6 = inlined_call_operand.vmem [shape: f32[16,4], index: 6, kind: input, shape index: {}]
  %s7 = inlined_call_operand.hbm [shape: f32[16,32], index: 7, kind: output, shape index: {}]
  %s8 = sld [smem:[#allocation0]]
  $region69: #{_lambda_.9} parent=0
    _
  %s10 = ssub.s32 1, %s8
  %s11 = scalar_select 0, %s10, %s8
  %s12 = sshll.u32 %s0, 4
  %s13 = int_to_ptr.vmem [resolvable:$true] %s12
  %15 = dma.vmem_to_smem %s13, 16, [#allocation5], [#allocation4]
  %16 = dma.done [#allocation4], 16
  %17 = sfence
  $region1: #{_lambda_.9} parent=0
    #allocation6 [shape = 'u8[8192]{0}', space=vmem, size = 0x2000, scoped, tag = 'output window, operand 0, single buffered']
    #allocation7 [shape = 's32[2]{0}', space=sflag, size = 0x8, scoped, tag = 'scoped memory for _lambda_.9']
    %18 = vsyncpa [#allocation7], 0
    loop: start=0, step=1, limit=6
    $region2: #{_lambda_.9} parent=1 // loop_pre_header
      _
    $region3: #{_lambda_.9} parent=1 // loop_header
      %s20 = sphi 0, %s24
      %p21 = scmp.ge.s32.totalorder %s20, 6
      %s27 = sphi 0, %s39
      %s28 = sphi 0, %s35
      %s29 = sphi 0, %s27
      %s30 = sphi 0, %s28
      %s31 = sphi 0, %s29
      %s32 = sphi 0, %s30
      %s42 = sphi 0, %s44
      %s45 = sphi 0, %s42
      %s46 = sphi 0, %s45
      %s62 = sphi 0, %s46
      %s66 = sphi 0, %s66
      %s68 = sphi 0, %s66
      %s69 = sphi 0, %s68
      %s83 = sphi 0, %s69
      %s87 = sphi 0, %s87
      %s89 = sphi 0, %s87
      %s90 = sphi 0, %s89
      %s104 = sphi 0, %s90
      %s110 = sphi 0, %s112
      %s113 = sphi 0, %s110
      %s114 = sphi 0, %s113
      %s130 = sphi 0, %s114
      %s136 = sphi 0, %s138
      %s139 = sphi 0, %s136
      %s140 = sphi 0, %s139
      %s156 = sphi 0, %s140
      %s162 = sphi 0, %s164
      %s165 = sphi 0, %s162
      %s166 = sphi 0, %s165
      %s182 = sphi 0, %s166
      %s188 = sphi 0, %s190
      %s191 = sphi 0, %s188
      %s192 = sphi 0, %s191
      %s208 = sphi 0, %s192
    $region4: #{_lambda_.9} parent=1 // loop_header_branch
      %23 = sbr.rel (%p21) target = $region8
    $region5: #{_lambda_.9} parent=1 // loop_body
      %s25 = ssub.s32 %s20, 1
      %s26 = ssub.s32 %s20, 2
      %s33 = sadd.s32 1, %s28
      %p34 = scmp.ge.s32.totalorder %s33, 4
      %s35 = scalar_select %p34, 0, %s33
      %s36 = sadd.s32 1, %s27
      %s37 = scalar_select %p34, %s36, %s27
      %p38 = scmp.ge.s32.totalorder %s37, 1
      %s39 = scalar_select %p38, 0, %s37
      %s40 = ssub.s32 %s27, %s39
      %p41 = scmp.eq.s32.totalorder %s40, 0
      %s43 = sadd.s32 %s42, 1
      %s44 = scalar_select %p41, %s42, %s43
      %p47 = pneg %p41
      %p48 = scmp.eq.s32.totalorder %s20, 3
      %p49 = por %p47, %p48
      %p50 = scmp.ne.s32.totalorder %s42, %s45
      %p51 = scmp.eq.s32.totalorder %s20, 0
      %p52 = por %p50, %p51
      %p53 = scmp.ne.s32.totalorder %s42, %s45
      %p54 = scmp.eq.s32.totalorder %s25, 3
      %p55 = por %p53, %p54
      %p56 = scmp.ne.s32.totalorder %s45, %s46
      %p57 = scmp.eq.s32.totalorder %s25, 0
      %p58 = por %p56, %p57
      %p59 = scmp.ne.s32.totalorder %s45, %s46
      %p60 = scmp.eq.s32.totalorder %s26, 3
      %p61 = por %p59, %p60
      %p63 = scmp.ne.s32.totalorder %s46, %s62
      %p64 = scmp.eq.s32.totalorder %s26, 0
      %p65 = por %p63, %p64
      %s67 = sadd.s32 %s66, 1
      %p70 = scmp.eq.s32.totalorder %s20, 3
      %p71 = scmp.ne.s32.totalorder %s66, %s68
      %p72 = scmp.eq.s32.totalorder %s20, 0
      %p73 = por %p71, %p72
      %p74 = scmp.ne.s32.totalorder %s66, %s68
      %p75 = scmp.eq.s32.totalorder %s25, 3
      %p76 = por %p74, %p75
      %p77 = scmp.ne.s32.totalorder %s68, %s69
      %p78 = scmp.eq.s32.totalorder %s25, 0
      %p79 = por %p77, %p78
      %p80 = scmp.ne.s32.totalorder %s68, %s69
      %p81 = scmp.eq.s32.totalorder %s26, 3
      %p82 = por %p80, %p81
      %p84 = scmp.ne.s32.totalorder %s69, %s83
      %p85 = scmp.eq.s32.totalorder %s26, 0
      %p86 = por %p84, %p85
      %s88 = sadd.s32 %s87, 1
      %p91 = scmp.eq.s32.totalorder %s20, 3
      %p92 = scmp.ne.s32.totalorder %s87, %s89
      %p93 = scmp.eq.s32.totalorder %s20, 0
      %p94 = por %p92, %p93
      %p95 = scmp.ne.s32.totalorder %s87, %s89
      %p96 = scmp.eq.s32.totalorder %s25, 3
      %p97 = por %p95, %p96
      %p98 = scmp.ne.s32.totalorder %s89, %s90
      %p99 = scmp.eq.s32.totalorder %s25, 0
      %p100 = por %p98, %p99
      %p101 = scmp.ne.s32.totalorder %s89, %s90
      %p102 = scmp.eq.s32.totalorder %s26, 3
      %p103 = por %p101, %p102
      %p105 = scmp.ne.s32.totalorder %s90, %s104
      %p106 = scmp.eq.s32.totalorder %s26, 0
      %p107 = por %p105, %p106
      %s108 = ssub.s32 %s28, %s35
      %p109 = scmp.eq.s32.totalorder %s108, 0
      %s111 = sadd.s32 %s110, 1
      %s112 = scalar_select %p109, %s110, %s111
      %p115 = pneg %p109
      %p116 = scmp.eq.s32.totalorder %s20, 3
      %p117 = por %p115, %p116
      %p118 = scmp.ne.s32.totalorder %s110, %s113
      %p119 = scmp.eq.s32.totalorder %s20, 0
      %p120 = por %p118, %p119
      %p121 = scmp.ne.s32.totalorder %s110, %s113
      %p122 = scmp.eq.s32.totalorder %s25, 3
      %p123 = por %p121, %p122
      %p124 = scmp.ne.s32.totalorder %s113, %s114
      %p125 = scmp.eq.s32.totalorder %s25, 0
      %p126 = por %p124, %p125
      %p127 = scmp.ne.s32.totalorder %s113, %s114
      %p128 = scmp.eq.s32.totalorder %s26, 3
      %p129 = por %p127, %p128
      %p131 = scmp.ne.s32.totalorder %s114, %s130
      %p132 = scmp.eq.s32.totalorder %s26, 0
      %p133 = por %p131, %p132
      %s134 = ssub.s32 %s28, %s35
      %p135 = scmp.eq.s32.totalorder %s134, 0
      %s137 = sadd.s32 %s136, 1
      %s138 = scalar_select %p135, %s136, %s137
      %p141 = pneg %p135
      %p142 = scmp.eq.s32.totalorder %s20, 3
      %p143 = por %p141, %p142
      %p144 = scmp.ne.s32.totalorder %s136, %s139
      %p145 = scmp.eq.s32.totalorder %s20, 0
      %p146 = por %p144, %p145
      %p147 = scmp.ne.s32.totalorder %s136, %s139
      %p148 = scmp.eq.s32.totalorder %s25, 3
      %p149 = por %p147, %p148
      %p150 = scmp.ne.s32.totalorder %s139, %s140
      %p151 = scmp.eq.s32.totalorder %s25, 0
      %p152 = por %p150, %p151
      %p153 = scmp.ne.s32.totalorder %s139, %s140
      %p154 = scmp.eq.s32.totalorder %s26, 3
      %p155 = por %p153, %p154
      %p157 = scmp.ne.s32.totalorder %s140, %s156
      %p158 = scmp.eq.s32.totalorder %s26, 0
      %p159 = por %p157, %p158
      %s160 = ssub.s32 %s27, %s39
      %p161 = scmp.eq.s32.totalorder %s160, 0
      %s163 = sadd.s32 %s162, 1
      %s164 = scalar_select %p161, %s162, %s163
      %p167 = pneg %p161
      %p168 = scmp.eq.s32.totalorder %s20, 3
      %p169 = por %p167, %p168
      %p170 = scmp.ne.s32.totalorder %s162, %s165
      %p171 = scmp.eq.s32.totalorder %s20, 0
      %p172 = por %p170, %p171
      %p173 = scmp.ne.s32.totalorder %s162, %s165
      %p174 = scmp.eq.s32.totalorder %s25, 3
      %p175 = por %p173, %p174
      %p176 = scmp.ne.s32.totalorder %s165, %s166
      %p177 = scmp.eq.s32.totalorder %s25, 0
      %p178 = por %p176, %p177
      %p179 = scmp.ne.s32.totalorder %s165, %s166
      %p180 = scmp.eq.s32.totalorder %s26, 3
      %p181 = por %p179, %p180
      %p183 = scmp.ne.s32.totalorder %s166, %s182
      %p184 = scmp.eq.s32.totalorder %s26, 0
      %p185 = por %p183, %p184
      %s186 = ssub.s32 %s27, %s39
      %p187 = scmp.eq.s32.totalorder %s186, 0
      %s189 = sadd.s32 %s188, 1
      %s190 = scalar_select %p187, %s188, %s189
      %p193 = pneg %p187
      %p194 = scmp.eq.s32.totalorder %s20, 3
      %p195 = por %p193, %p194
      %p196 = scmp.ne.s32.totalorder %s188, %s191
      %p197 = scmp.eq.s32.totalorder %s20, 0
      %p198 = por %p196, %p197
      %p199 = scmp.ne.s32.totalorder %s188, %s191
      %p200 = scmp.eq.s32.totalorder %s25, 3
      %p201 = por %p199, %p200
      %p202 = scmp.ne.s32.totalorder %s191, %s192
      %p203 = scmp.eq.s32.totalorder %s25, 0
      %p204 = por %p202, %p203
      %p205 = scmp.ne.s32.totalorder %s191, %s192
      %p206 = scmp.eq.s32.totalorder %s26, 3
      %p207 = por %p205, %p206
      %p209 = scmp.ne.s32.totalorder %s192, %s208
      %p210 = scmp.eq.s32.totalorder %s26, 0
      %p211 = por %p209, %p210
      %p212 = scmp.le.s32.totalorder 1, %s20
      %p213 = scmp.lt.s32.totalorder %s20, 5
      %p214 = pnand %p212, %p213
      %p215 = pneg %p214
      // Predicated region
      $region9: #{_lambda_.9} parent=5 // pred_check
        _
      $region10: #{_lambda_.9} parent=5 // pred_check_branch
        %217 = sbr.rel (%p214) target = $region12
      $region11: #{_lambda_.9} parent=5 // pred_region
        %s218 = ssub.s32 %s20, 1
        // Predicated region
        $region13: #{_lambda_.9} parent=11 // pred_check
          %p219 = pneg %p58
        $region14: #{_lambda_.9} parent=11 // pred_check_branch
          %221 = sbr.rel (%p219) target = $region16
        $region15: #{_lambda_.9} parent=11 // pred_region
          %s222 = smul.u32 2, %s29
          %p223 = scmp.lt.s32.totalorder %s222, 1
          %s224 = scalar_select %p223, %s222, 1
          %s225 = smul.addr %s224, 8
          %s226 = scalar_lea.vmem %s1, %s225
          %s227 = smul.u32 2, %s29
        $region16: #{_lambda_.9} parent=11 // pred_fallthru
          _
        // Predicated region
        $region17: #{_lambda_.9} parent=11 // pred_check
          %p228 = pneg %p79
        $region18: #{_lambda_.9} parent=11 // pred_check_branch
          %230 = sbr.rel (%p228) target = $region20
        $region19: #{_lambda_.9} parent=11 // pred_region
          _
        $region20: #{_lambda_.9} parent=11 // pred_fallthru
          _
        // Predicated region
        $region21: #{_lambda_.9} parent=11 // pred_check
          %p231 = pneg %p100
        $region22: #{_lambda_.9} parent=11 // pred_check_branch
          %233 = sbr.rel (%p231) target = $region24
        $region23: #{_lambda_.9} parent=11 // pred_region
          _
        $region24: #{_lambda_.9} parent=11 // pred_fallthru
          _
        // Predicated region
        $region25: #{_lambda_.9} parent=11 // pred_check
          %p234 = pneg %p178
        $region26: #{_lambda_.9} parent=11 // pred_check_branch
          %236 = sbr.rel (%p234) target = $region28
        $region27: #{_lambda_.9} parent=11 // pred_region
          %s237 = smul.u32 2, %s29
          %p238 = scmp.lt.s32.totalorder %s237, 1
          %s239 = scalar_select %p238, %s237, 1
          %s240 = smul.addr %s239, 8
          %s241 = scalar_lea.vmem %s6, %s240
          %s242 = smul.u32 2, %s29
        $region28: #{_lambda_.9} parent=11 // pred_fallthru
          _
      $region12: #{_lambda_.9} parent=5 // pred_fallthru
        _
      %p243 = scmp.lt.s32.totalorder %s20, 4
      // Predicated region
      $region29: #{_lambda_.9} parent=5 // pred_check
        %p244 = pneg %p243
      $region30: #{_lambda_.9} parent=5 // pred_check_branch
        %246 = sbr.rel (%p244) target = $region32
      $region31: #{_lambda_.9} parent=5 // pred_region
        // Predicated region
        $region33: #{_lambda_.9} parent=31 // pred_check
          %p247 = pneg %p120
        $region34: #{_lambda_.9} parent=31 // pred_check_branch
          %249 = sbr.rel (%p247) target = $region36
        $region35: #{_lambda_.9} parent=31 // pred_region
          %p250 = scmp.lt.s32.totalorder %s28, 3
          %s251 = scalar_select %p250, %s28, 3
          %s252 = smul.addr %s251, 4
          %s253 = smul.addr %s252, 4
          %s254 = scalar_lea.vmem %s4, %s253
        $region36: #{_lambda_.9} parent=31 // pred_fallthru
          _
        // Predicated region
        $region37: #{_lambda_.9} parent=31 // pred_check
          %p255 = pneg %p146
        $region38: #{_lambda_.9} parent=31 // pred_check_branch
          %257 = sbr.rel (%p255) target = $region40
        $region39: #{_lambda_.9} parent=31 // pred_region
          %p258 = scmp.lt.s32.totalorder %s28, 3
          %s259 = scalar_select %p258, %s28, 3
          %s260 = smul.addr %s259, 2
          %s261 = smul.addr %s260, 4
          %s262 = scalar_lea.vmem %s5, %s261
        $region40: #{_lambda_.9} parent=31 // pred_fallthru
          _
      $region32: #{_lambda_.9} parent=5 // pred_fallthru
        _
      %p263 = scmp.le.s32.totalorder 1, %s20
      %p264 = scmp.lt.s32.totalorder %s20, 5
      %p265 = pnand %p263, %p264
      %p266 = pneg %p265
      // Predicated region
      $region41: #{_lambda_.9} parent=5 // pred_check
        _
      $region42: #{_lambda_.9} parent=5 // pred_check_branch
        %268 = sbr.rel (%p265) target = $region44
      $region43: #{_lambda_.9} parent=5 // pred_region
        %s269 = ssub.s32 %s20, 1
        %s270 = smul.u32 2, %s29
        %p271 = scmp.lt.s32.totalorder %s270, 1
        %s272 = scalar_select %p271, %s270, 1
        %s273 = smul.addr %s272, 8
        %s274 = scalar_lea.vmem %s1, %s273
        %p275 = pneg %p58
        %p276 = pneg %p55
        %p277 = pneg %p79
        %p278 = pneg %p76
        %p279 = pneg %p100
        %p280 = pneg %p97
        %p281 = scmp.lt.s32.totalorder %s30, 3
        %s282 = scalar_select %p281, %s30, 3
        %s283 = smul.addr %s282, 4
        %s284 = smul.addr %s283, 4
        %s285 = scalar_lea.vmem %s4, %s284
        %p286 = pneg %p126
        %p287 = pneg %p123
        %p288 = scmp.lt.s32.totalorder %s30, 3
        %s289 = scalar_select %p288, %s30, 3
        %s290 = smul.addr %s289, 2
        %s291 = smul.addr %s290, 4
        %s292 = scalar_lea.vmem %s5, %s291
        %p293 = pneg %p152
        %p294 = pneg %p149
        %s295 = smul.u32 2, %s29
        %p296 = scmp.lt.s32.totalorder %s295, 1
        %s297 = scalar_select %p296, %s295, 1
        %s298 = smul.addr %s297, 8
        %s299 = scalar_lea.vmem %s6, %s298
        %p300 = pneg %p178
        %p301 = pneg %p175
        %p302 = pneg %p204
        %p303 = pneg %p201
        %s304 = smul.u32 2, %s29
        %p305 = scmp.lt.s32.totalorder %s304, 1
        %s306 = scalar_select %p305, %s304, 1
        %s307 = smul.addr %s306, 8
        %s308 = scalar_lea.vmem %s1, %s307
        %s309 = smul.u32 2, %s29
        %p310 = scmp.lt.s32.totalorder %s30, 3
        %s311 = scalar_select %p310, %s30, 3
        %s312 = smul.addr %s311, 4
        %s313 = smul.addr %s312, 4
        %s314 = scalar_lea.vmem %s4, %s313
        %p315 = scmp.lt.s32.totalorder %s30, 3
        %s316 = scalar_select %p315, %s30, 3
        %s317 = smul.addr %s316, 2
        %s318 = smul.addr %s317, 4
        %s319 = scalar_lea.vmem %s5, %s318
        %s320 = smul.u32 2, %s29
        %p321 = scmp.lt.s32.totalorder %s320, 1
        %s322 = scalar_select %p321, %s320, 1
        %s323 = smul.addr %s322, 8
        %s324 = scalar_lea.vmem %s6, %s323
        %s325 = smul.u32 2, %s29
        %s326 = smul.u32 2, %s29
        %p328 = scmp.eq.s32.totalorder %s30, 0
        // Predicated region
        $region45: #{_lambda_.9} parent=43 // pred_check
          %p329 = pneg %p328
        $region46: #{_lambda_.9} parent=43 // pred_check_branch
          %331 = sbr.rel (%p329) target = $region48
        $region47: #{_lambda_.9} parent=43 // pred_region
          %v332 = vld [vmem:[%s308] sm:$0xff]
          %v333 = vld [vmem:[%s308 + $0x8] sm:$0xff]
          %v334 = vld [vmem:[%s2] sm:$0x1]
          %v335 = vld [vmem:[%s3] sm:$0x1]
          %vm336 = vcmask 261120
          %v337 = vsel %vm336, %v332, 0.0
          %338 = vadd.xlane.f32.xlu0 %v337
          %v339 = vpop.xlane.xlu0 %338
          %v340 = vsel %vm336, %v333, 0.0
          %341 = vadd.xlane.f32.xlu0 %v340
          %v342 = vpop.xlane.xlu0 %341
          %v343 = vrcp.pop 32.0
          %v344 = vmul.f32 %v339, %v343
          %v345 = vmul.f32 %v342, %v343
          %v346 = vsub.f32 %v332, %v344
          %v347 = vsub.f32 %v333, %v345
          %v348 = vmul.f32 %v346, %v346
          %v349 = vmul.f32 %v347, %v347
          %v350 = vsel %vm336, %v348, 0.0
          %351 = vadd.xlane.f32.xlu0 %v350
          %v352 = vpop.xlane.xlu0 %351
          %v353 = vsel %vm336, %v349, 0.0
          %354 = vadd.xlane.f32.xlu0 %v353
          %v355 = vpop.xlane.xlu0 %354
          %v356 = vmul.f32 %v352, %v343
          %v357 = vmul.f32 %v355, %v343
          %v358 = vadd.f32 %v356, 1e-05
          %v359 = vadd.f32 %v357, 1e-05
          %v360 = vrsqrt.pop %v358
          %v361 = vrsqrt.pop %v359
          %v362 = vmul.f32 %v346, %v360
          %v363 = vmul.f32 %v347, %v361
          %v365 = vlaneseq
          %v366 = vshrl.u32 %v365, 7
          %v367 = vsub.s32 0, %v366
          %v368 = vrot.slane %v334, %v367
          %v370 = vmul.f32 %v362, %v368
          %v371 = vmul.f32 %v363, %v368
          %v373 = vlaneseq
          %v374 = vshrl.u32 %v373, 7
          %v375 = vsub.s32 0, %v374
          %v376 = vrot.slane %v335, %v375
          %v378 = vadd.f32 %v370, %v376
          %v379 = vadd.f32 %v371, %v376
          %380 = vst.msk [vmem:[#allocation2] sm:$0xff] %vm336, %v378
          %381 = vst.msk [vmem:[#allocation2 + $0x8] sm:$0xff] %vm336, %v379
          %382 = vst.msk [vmem:[#allocation3] sm:$0xff] %vm336, %v332
          %383 = vst.msk [vmem:[#allocation3 + $0x8] sm:$0xff] %vm336, %v333
        $region48: #{_lambda_.9} parent=43 // pred_fallthru
          _
        %s384 = sshra.s32 %s30, 7
        %s385 = sand.u32 %s30, 127
        %s386 = sadd.s32 %s384, %s29
        %s387 = smul.u32 %s386, 128
        %s388 = sshra.s32 %s30, 7
        %s389 = sand.u32 %s30, 127
        %s390 = sadd.s32 %s387, %s389
        %s391 = sld [smem:[#allocation5 + %s390]]
        %p392 = scmp.gt.s32.totalorder %s391, 0
        // Predicated region
        $region49: #{_lambda_.9} parent=43 // pred_check
          %p393 = pneg %p392
        $region50: #{_lambda_.9} parent=43 // pred_check_branch
          %395 = sbr.rel (%p393) target = $region52
        $region51: #{_lambda_.9} parent=43 // pred_region
          %v396 = vld [vmem:[#allocation2] sm:$0xff]
          %v397 = vld [vmem:[#allocation2 + $0x8] sm:$0xff]
          %v398 = vpack.c.bf16 %v397, %v396
          %v399 = vld [vmem:[%s314] sm:$0xf]
          %v400 = vld [vmem:[%s314 + $0x4] sm:$0xf]
          %v401 = vld [vmem:[%s314 + $0x8] sm:$0xf]
          %v402 = vld [vmem:[%s314 + $0xc] sm:$0xf]
          %v407 = vunpack.c.l.b16 %v399
          %v408 = vunpack.c.l.b16 %v400
          %v409 = vunpack.c.l.b16 %v401
          %v410 = vunpack.c.l.b16 %v402
          %v411 = vpack.c.b16 %v408, %v407
          %v412 = vpack.c.b16 %v410, %v409
          %vm415 = vcmask 261120
          %v417 = vsel %vm415, %v398, 0
          %419 = vmatprep.subr.bf16.mxu0 0
          %420 = vmatpush1.bf16.msra.mxu0 0
          %421 = vmatprep.subr.bf16.mxu0 0
          %422 = vmatpush1.bf16.msra.mxu0 0
          %423 = vmatprep.subr.bf16.mxu0 0
          %424 = vmatpush1.bf16.msra.mxu0 0
          %425 = vmatprep.subr.bf16.mxu0 0
          %426 = vmatpush1.bf16.msra.mxu0 0
          %427 = vmatprep.subr.bf16.mxu0 0
          %428 = vmatpush1.bf16.msra.mxu0 0
          %429 = vmatprep.subr.bf16.mxu0 0
          %430 = vmatpush1.bf16.msra.mxu0 0
          %431 = vmatprep.subr.bf16.mxu0 0
          %432 = vmatpush1.bf16.msra.mxu0 %v412
          %433 = vmatprep.subr.bf16.mxu0 0
          %434 = vmatpush1.bf16.msra.mxu0 %v411
          %435 = vmatprep.subr.bf16.mxu0 0
          %436 = vmatpush2.bf16.msra.mxu0 0
          %437 = vmatprep.subr.bf16.mxu0 0
          %438 = vmatpush2.bf16.msra.mxu0 0
          %439 = vmatprep.subr.bf16.mxu0 0
          %440 = vmatpush2.bf16.msra.mxu0 0
          %441 = vmatprep.subr.bf16.mxu0 0
          %442 = vmatpush2.bf16.msra.mxu0 0
          %443 = vmatprep.subr.bf16.mxu0 0
          %444 = vmatpush2.bf16.msra.mxu0 0
          %445 = vmatprep.subr.bf16.mxu0 0
          %446 = vmatpush2.bf16.msra.mxu0 0
          %447 = vmatprep.subr.bf16.mxu0 0
          %448 = vmatpush2.bf16.msra.mxu0 0
          %449 = vmatprep.subr.bf16.mxu0 0
          %450 = vmatpush2.bf16.msra.mxu0 0
          %451 = vmatprep.mubr.bf16.mxu0 0
          %452 = vmatmul.mubr.bf16.gmra.mxu0 %v417
          %v453 = vpop.f32.mrf.mxu0
          %v454 = vadd.f32 0.0, %v453
          %v455 = vpop.f32.mrf.mxu0
          %v456 = vpop.f32.mrf.mxu0
          %v457 = vadd.f32 0.0, %v456
          %v458 = vpop.f32.mrf.mxu0
          %459 = vdwg.mxu0
          %v460 = vmax.f32 %v454, 0.0
          %v461 = vmax.f32 %v457, 0.0
          %v462 = vpack.c.bf16 %v461, %v460
          %v463 = vld [vmem:[%s319] sm:$0xf]
          %v464 = vld [vmem:[%s319 + $0x4] sm:$0xf]
          %v467 = vunpack.c.l.b16 %v463
          %v468 = vunpack.c.l.b16 %v464
          %v469 = vpack.c.b16 %v468, %v467
          %vm471 = vcmask 130048
          %v473 = vsel %vm471, %v462, 0
          %475 = vmatprep.subr.bf16.mxu0 0
          %476 = vmatpush1.bf16.msra.mxu0 0
          %477 = vmatprep.subr.bf16.mxu0 0
          %478 = vmatpush1.bf16.msra.mxu0 0
          %479 = vmatprep.subr.bf16.mxu0 0
          %480 = vmatpush1.bf16.msra.mxu0 0
          %481 = vmatprep.subr.bf16.mxu0 0
          %482 = vmatpush1.bf16.msra.mxu0 0
          %483 = vmatprep.subr.bf16.mxu0 0
          %484 = vmatpush1.bf16.msra.mxu0 0
          %485 = vmatprep.subr.bf16.mxu0 0
          %486 = vmatpush1.bf16.msra.mxu0 0
          %487 = vmatprep.subr.bf16.mxu0 0
          %488 = vmatpush1.bf16.msra.mxu0 0
          %489 = vmatprep.subr.bf16.mxu0 0
          %490 = vmatpush1.bf16.msra.mxu0 %v469
          %491 = vmatprep.subr.bf16.mxu0 0
          %492 = vmatpush2.bf16.msra.mxu0 0
          %493 = vmatprep.subr.bf16.mxu0 0
          %494 = vmatpush2.bf16.msra.mxu0 0
          %495 = vmatprep.subr.bf16.mxu0 0
          %496 = vmatpush2.bf16.msra.mxu0 0
          %497 = vmatprep.subr.bf16.mxu0 0
          %498 = vmatpush2.bf16.msra.mxu0 0
          %499 = vmatprep.subr.bf16.mxu0 0
          %500 = vmatpush2.bf16.msra.mxu0 0
          %501 = vmatprep.subr.bf16.mxu0 0
          %502 = vmatpush2.bf16.msra.mxu0 0
          %503 = vmatprep.subr.bf16.mxu0 0
          %504 = vmatpush2.bf16.msra.mxu0 0
          %505 = vmatprep.subr.bf16.mxu0 0
          %506 = vmatpush2.bf16.msra.mxu0 0
          %507 = vmatprep.mubr.bf16.mxu0 0
          %508 = vmatmul.mubr.bf16.gmra.mxu0 %v473
          %v509 = vpop.f32.mrf.mxu0
          %v510 = vadd.f32 0.0, %v509
          %v511 = vpop.f32.mrf.mxu0
          %v512 = vpop.f32.mrf.mxu0
          %v513 = vadd.f32 0.0, %v512
          %v514 = vpop.f32.mrf.mxu0
          %515 = vdwg.mxu0
          %v516 = vlaneseq
          %v517 = vand.u32 %v516, 127
          %v518 = vld [vmem:[%s324] sm:$0xff]
          %v519 = vld [vmem:[%s324 + $0x8] sm:$0xff]
          %v520 = vstv %s30
          %vm521 = vcmp.eq.s32.totalorder %v517, %v520
          %v522 = vsel %vm521, 1, 0
          %v523 = vcvt.s32.f32 %v522
          %v524 = vmul.f32 %v518, %v523
          %v525 = vmul.f32 %v519, %v523
          %vm526 = vcmask 31744
          %v527 = vsel %vm526, %v524, 0.0
          %528 = vadd.xlane.f32.xlu0 %v527
          %v529 = vpop.xlane.xlu0 %528
          %v530 = vsel %vm526, %v525, 0.0
          %531 = vadd.xlane.f32.xlu0 %v530
          %v532 = vpop.xlane.xlu0 %531
          %v533 = vld [vmem:[#allocation3] sm:$0xff]
          %v534 = vld [vmem:[#allocation3 + $0x8] sm:$0xff]
          %v535 = vmul.f32 %v510, %v529
          %v536 = vmul.f32 %v513, %v532
          %v537 = vadd.f32 %v533, %v535
          %v538 = vadd.f32 %v534, %v536
          %539 = vst.msk [vmem:[#allocation3] sm:$0xff] %vm415, %v537
          %540 = vst.msk [vmem:[#allocation3 + $0x8] sm:$0xff] %vm415, %v538
        $region52: #{_lambda_.9} parent=43 // pred_fallthru
          _
        %p541 = scmp.eq.s32.totalorder %s30, 3
        // Predicated region
        $region53: #{_lambda_.9} parent=43 // pred_check
          %p542 = pneg %p541
        $region54: #{_lambda_.9} parent=43 // pred_check_branch
          %544 = sbr.rel (%p542) target = $region56
        $region55: #{_lambda_.9} parent=43 // pred_region
          %v545 = vld [vmem:[#allocation3] sm:$0xff]
          %v546 = vld [vmem:[#allocation3 + $0x8] sm:$0xff]
          %vm547 = vcmask 261120
          %548 = vst.msk [vmem:[#allocation6] sm:$0xff] %vm547, %v545
          %549 = vst.msk [vmem:[#allocation6 + $0x8] sm:$0xff] %vm547, %v546
        $region56: #{_lambda_.9} parent=43 // pred_fallthru
          _
        // Predicated region
        $region57: #{_lambda_.9} parent=43 // pred_check
          %p550 = pneg %p201
        $region58: #{_lambda_.9} parent=43 // pred_check_branch
          %552 = sbr.rel (%p550) target = $region60
        $region59: #{_lambda_.9} parent=43 // pred_region
          %s553 = smul.u32 2, %s29
          %s555 = ssub.s32 256, 256
          %556 = vsyncadd [#allocation7], %s555
          %s557 = smul.addr %s553, 128
          %s558 = scalar_lea.hbm %s7, %s557
          %s559 = sshll.u32 [#allocation6], 4
          %s560 = int_to_ptr.vmem [resolvable:$true] %s559
          %565 = dma.vmem_to_hbm [thread:$0]  %s560, 256, %s558, [#allocation7], 128, 128, 8
        $region60: #{_lambda_.9} parent=43 // pred_fallthru
          _
        // Predicated region
        $region61: #{_lambda_.9} parent=43 // pred_check
          %p566 = pneg %p201
        $region62: #{_lambda_.9} parent=43 // pred_check_branch
          %568 = sbr.rel (%p566) target = $region64
        $region63: #{_lambda_.9} parent=43 // pred_region
          %569 = dma.done [#allocation7], 256
        $region64: #{_lambda_.9} parent=43 // pred_fallthru
          _
      $region44: #{_lambda_.9} parent=5 // pred_fallthru
        _
      %p570 = scmp.le.s32.totalorder 2, %s20
      // Predicated region
      $region65: #{_lambda_.9} parent=5 // pred_check
        %p571 = pneg %p570
      $region66: #{_lambda_.9} parent=5 // pred_check_branch
        %573 = sbr.rel (%p571) target = $region68
      $region67: #{_lambda_.9} parent=5 // pred_region
        %s574 = ssub.s32 %s20, 2
      $region68: #{_lambda_.9} parent=5 // pred_fallthru
        _
    $region6: #{_lambda_.9} parent=1 // loop_footer
      %s24 = sadd.s32 1, %s20
    $region7: #{_lambda_.9} parent=1 // loop_footer_branch
      %19 = sbr.rel target = $region3
    $region8: #{_lambda_.9} parent=1 // loop_exit
      _
    %575 = vsyncpa [#allocation7], 1
    %s576 = scalar_lea.sflag [#allocation7], 1
    %577 = vsyncpa %s576, 1

</llo_original>
